<compile_context>
chip_gen: v6e
topology: v6e:2x2x1
jax: 0.10.0
libtpu: 0.0.40
codegen_flags: <defaults>
</compile_context>

<pallas_src>
import jax
import jax.numpy as jnp
import numpy as np
from jax.experimental import pallas as pl
from jax.experimental.pallas import tpu as pltpu

# ---- model hyperparameters -------------------------------------------------
P = 16          # args.window
M = 8           # data.m
HID_C = 16      # args.hidCNN
HID_R = 16      # args.hidRNN
HID_S = 4       # args.hidSkip
CK = 4          # args.CNN_kernel
SKIP = 4        # args.skip
HW = 4          # args.highway_window
PT = (P - CK) // SKIP          # 3
T = P - CK + 1                 # conv output length = 13
G1 = 3 * HID_R                 # fused GRU1 gate width (r|z|n) = 48
GS = 3 * HID_S                 # fused skip-GRU gate width      = 12
KM = CK * M                    # unfolded conv window width     = 32

# ---- packed-parameter layout (all row offsets sublane-tile aligned) ---------
R_CONVW = 0            # (CK*M, HID_C) = (32, 16)
R_WIH = 32             # (HID_C, G1+GS) = (16, 60)   [GRU1 wih | skip wih]
R_WHH1 = 48            # (HID_R, G1)    = (16, 48)
R_WHHS = 64            # (HID_S, GS)    = (4, 12)
R_LIN = 72             # (HID_R+SKIP*HID_S, M) = (32, 8)
R_CONVB = 104          # (1, HID_C)
R_BIH = 112            # (1, G1+GS)
R_BHH1 = 120           # (1, G1)
R_BHHS = 128           # (1, GS)
R_LINB = 136           # (1, M)
P_ROWS, P_COLS = 144, 64


def _vmem():
    return pl.BlockSpec(memory_space=pltpu.MemorySpace.VMEM)


def _smem():
    return pl.BlockSpec(memory_space=pltpu.MemorySpace.SMEM)


# --------------------------- fused Pallas kernel ----------------------------

def lstnet_kernel(xw_ref, xhw_ref, wp_ref, hw_ref, o_ref):
    bsz = xhw_ref.shape[0]

    def sig(v):                               # logistic via a single EUP tanh
        return 0.5 * (jnp.tanh(0.5 * v) + 1.0)

    def mm(a, b):                             # plain 2D MXU matmul, f32 acc
        return jnp.dot(a, b, preferred_element_type=jnp.float32)

    # ---- packed parameter views (static slices of ONE VMEM buffer) ---------
    conv_w = wp_ref[R_CONVW:R_CONVW + KM, 0:HID_C]          # (32, 16)
    wih = wp_ref[R_WIH:R_WIH + HID_C, 0:G1 + GS]            # (16, 60)
    whh1 = wp_ref[R_WHH1:R_WHH1 + HID_R, 0:G1]              # (16, 48)
    whhs = wp_ref[R_WHHS:R_WHHS + HID_S, 0:GS]              # (4, 12)
    l1w = wp_ref[R_LIN:R_LIN + HID_R + SKIP * HID_S, 0:M]   # (32, 8)
    conv_b = wp_ref[R_CONVB:R_CONVB + 1, 0:HID_C]           # (1, 16)
    bih = wp_ref[R_BIH:R_BIH + 1, 0:G1 + GS]                # (1, 60)
    bhh1 = wp_ref[R_BHH1:R_BHH1 + 1, 0:G1]                  # (1, 48)
    bhhs = wp_ref[R_BHHS:R_BHHS + 1, 0:GS]                  # (1, 12)
    lin_b = wp_ref[R_LINB:R_LINB + 1, 0:M]                  # (1, 8)

    # ---- conv1 (unfolded windows -> ONE matmul) + ReLU; dropout == identity
    # xw rows are (t, b)-ordered: row t*bsz + b, cols k*M + j.
    c = jnp.maximum(mm(xw_ref[...], conv_w) + conv_b, 0.0)  # (T*B, HID_C)

    # ---- joint GRU input-side projections for ALL timesteps: ONE matmul ----
    gx = mm(c, wih) + bih                                    # (T*B, G1+GS)

    # ---- GRU1 recurrence, batch folded into rows: 1 matmul per step --------
    h1 = jnp.zeros((bsz, HID_R), jnp.float32)
    for t in range(T):                        # statically unrolled (T = 13)
        gh = mm(h1, whh1) + bhh1                             # (B, 48)
        gi = gx[t * bsz:(t + 1) * bsz, 0:G1]                 # (B, 48)
        r = sig(gi[:, :HID_R] + gh[:, :HID_R])
        z = sig(gi[:, HID_R:2 * HID_R] + gh[:, HID_R:2 * HID_R])
        n = jnp.tanh(gi[:, 2 * HID_R:] + r * gh[:, 2 * HID_R:])
        h1 = (1.0 - z) * n + z * h1                          # (B, HID_R)

    # ---- skip GRU: pseudo-batch rows ordered (q, b) -> contiguous gx slices
    hs = jnp.zeros((SKIP * bsz, HID_S), jnp.float32)
    t0 = T - PT * SKIP
    for pstep in range(PT):                   # statically unrolled (PT = 3)
        gh = mm(hs, whhs) + bhhs                             # (SKIP*B, 12)
        lo = (t0 + pstep * SKIP) * bsz
        gi = gx[lo:lo + SKIP * bsz, G1:G1 + GS]              # (SKIP*B, 12)
        r = sig(gi[:, :HID_S] + gh[:, :HID_S])
        z = sig(gi[:, HID_S:2 * HID_S] + gh[:, HID_S:2 * HID_S])
        n = jnp.tanh(gi[:, 2 * HID_S:] + r * gh[:, 2 * HID_S:])
        hs = (1.0 - z) * n + z * hs                          # (SKIP*B, HID_S)

    # ---- head: linear1 (GRU1 part + 4 small skip matmuls) + highway + sigmoid
    res = mm(h1, l1w[:HID_R, :]) + lin_b                     # (B, M)
    for q in range(SKIP):
        wq = l1w[HID_R + q * HID_S:HID_R + (q + 1) * HID_S, :]   # (HID_S, M)
        res = res + mm(hs[q * bsz:(q + 1) * bsz, :], wq)
    xhw = xhw_ref[...]                                       # (B, HW*M)
    res = res + hw_ref[HW]                                   # highway bias (SMEM)
    for t in range(HW):                                      # 4 scalar FMAs
        res = res + xhw[:, t * M:(t + 1) * M] * hw_ref[t]
    o_ref[...] = sig(res)                                    # output_fun == sigmoid


# --------------------------- parameter packing -------------------------------

def pack_params(p):
    """Pack the 13 tensor parameters into one VMEM buffer + one SMEM vector."""
    wp = jnp.zeros((P_ROWS, P_COLS), jnp.float32)
    wp = wp.at[R_CONVW:R_CONVW + KM, :HID_C].set(
        p['conv_w'].reshape(KM, HID_C))
    wp = wp.at[R_WIH:R_WIH + HID_C, :G1].set(p['gru1_wih'])
    wp = wp.at[R_WIH:R_WIH + HID_C, G1:G1 + GS].set(p['grus_wih'])
    wp = wp.at[R_WHH1:R_WHH1 + HID_R, :G1].set(p['gru1_whh'])
    wp = wp.at[R_WHHS:R_WHHS + HID_S, :GS].set(p['grus_whh'])
    wp = wp.at[R_LIN:R_LIN + HID_R + SKIP * HID_S, :M].set(p['lin1_w'])
    wp = wp.at[R_CONVB, :HID_C].set(p['conv_b'][0])
    wp = wp.at[R_BIH, :G1].set(p['gru1_bih'][0])
    wp = wp.at[R_BIH, G1:G1 + GS].set(p['grus_bih'][0])
    wp = wp.at[R_BHH1, :G1].set(p['gru1_bhh'][0])
    wp = wp.at[R_BHHS, :GS].set(p['grus_bhh'][0])
    wp = wp.at[R_LINB, :M].set(p['lin1_b'][0])
    hw = jnp.concatenate([p['hw_w'], p['hw_b']]).astype(jnp.float32)  # (HW+1,)
    return {'wp': wp, 'hw': hw}


# --------------------------- wrapper ----------------------------------------

def forward(x, packed):
    """Pallas implementation of Learner_TimeSeries.forward. x: (B, P, M) f32."""
    bsz = x.shape[0]
    # Wrapper-side layout plumbing (pure data movement, fused by XLA):
    #   xw  : (T*B, CK*M) unfolded conv windows, rows (t, b)-ordered.
    #   xhw : (B, HW*M)   last HW timesteps flattened for the highway.
    win = jnp.concatenate([x[:, k:k + T, :] for k in range(CK)], axis=-1)
    xw = jnp.transpose(win, (1, 0, 2)).reshape(T * bsz, KM)
    xhw = x[:, P - HW:, :].reshape(bsz, HW * M)
    out = pl.pallas_call(
        lstnet_kernel,
        out_shape=jax.ShapeDtypeStruct((bsz, M), jnp.float32),
        in_specs=[_vmem(), _vmem(), _vmem(), _smem()],
        out_specs=_vmem(),
    )(xw, xhw, packed['wp'], packed['hw'])
    return out


# --------------------------- pure-JAX reference ------------------------------

def ref_forward(x, p):
    bsz = x.shape[0]
    c = jnp.zeros((bsz, T, HID_C), jnp.float32)
    for k in range(CK):
        c = c + jnp.einsum('btm,mh->bth', x[:, k:k + T, :], p['conv_w'][k])
    c = jax.nn.relu(c + p['conv_b'])

    def gru(seq, wih, whh, bih, bhh, hid):
        h = jnp.zeros((seq.shape[1], hid), jnp.float32)
        for t in range(seq.shape[0]):
            gi = seq[t] @ wih + bih
            gh = h @ whh + bhh
            r = jax.nn.sigmoid(gi[:, :hid] + gh[:, :hid])
            z = jax.nn.sigmoid(gi[:, hid:2 * hid] + gh[:, hid:2 * hid])
            n = jnp.tanh(gi[:, 2 * hid:] + r * gh[:, 2 * hid:])
            h = (1.0 - z) * n + z * h
        return h

    r = gru(jnp.transpose(c, (1, 0, 2)), p['gru1_wih'], p['gru1_whh'],
            p['gru1_bih'], p['gru1_bhh'], HID_R)
    s = c[:, T - PT * SKIP:, :].reshape(bsz, PT, SKIP, HID_C)
    s = s.transpose(1, 0, 2, 3).reshape(PT, bsz * SKIP, HID_C)
    sh = gru(s, p['grus_wih'], p['grus_whh'], p['grus_bih'], p['grus_bhh'],
             HID_S).reshape(bsz, SKIP * HID_S)
    rc = jnp.concatenate([r, sh], axis=1)
    res = rc @ p['lin1_w'] + p['lin1_b']
    z = x[:, P - HW:, :]
    hwy = jnp.einsum('bhm,h->bm', z, p['hw_w']) + p['hw_b'][0]
    return jax.nn.sigmoid(res + hwy)


# --------------------------- deterministic params ----------------------------

def init_params(key):
    ks = jax.random.split(key, 14)

    def rnd(k, shape, scale=0.1):
        return scale * jax.random.normal(k, shape, dtype=jnp.float32)

    return dict(
        conv_w=rnd(ks[0], (CK, M, HID_C)),
        conv_b=rnd(ks[1], (1, HID_C)),
        gru1_wih=rnd(ks[2], (HID_C, G1)),
        gru1_whh=rnd(ks[3], (HID_R, G1)),
        gru1_bih=rnd(ks[4], (1, G1)),
        gru1_bhh=rnd(ks[5], (1, G1)),
        grus_wih=rnd(ks[6], (HID_C, GS)),
        grus_whh=rnd(ks[7], (HID_S, GS)),
        grus_bih=rnd(ks[8], (1, GS)),
        grus_bhh=rnd(ks[9], (1, GS)),
        lin1_w=rnd(ks[10], (HID_R + SKIP * HID_S, M)),
        lin1_b=rnd(ks[11], (1, M)),
        hw_w=rnd(ks[12], (HW,)),
        hw_b=rnd(ks[13], (1,)),
    )


if __name__ == "__main__":
    key = jax.random.PRNGKey(0)
    kx, kp = jax.random.split(key)
    B = 2
    x = jax.random.normal(kx, (B, P, M), dtype=jnp.float32)
    params = init_params(kp)
    packed = pack_params(params)           # one-time parameter packing

    fwd = jax.jit(forward)
    out = jax.block_until_ready(fwd(x, packed))
    assert out.shape == (B, M)

    ref = ref_forward(x, params)
    np.testing.assert_allclose(np.asarray(out), np.asarray(ref),
                               rtol=1e-4, atol=1e-4)
    print("KERNEL_OK")
</pallas_src>

<mosaic_0001>
module attributes {stable_mosaic.version = 11 : i64} {
  func.func @lstnet_kernel(%arg0: memref<26x32xf32, #tpu.memory_space<vmem>>, %arg1: memref<2x32xf32, #tpu.memory_space<vmem>>, %arg2: memref<144x64xf32, #tpu.memory_space<vmem>>, %arg3: memref<5xf32, #tpu.memory_space<smem>>, %arg4: memref<2x8xf32, #tpu.memory_space<vmem>>) attributes {dimension_semantics = [], scalar_prefetch = 0 : i64, scratch_operands = 0 : i64, tpu.core_type = #tpu.core_type<tc>} {
    %c0 = arith.constant 0 : index
    %c0_0 = arith.constant 0 : index
    %0 = vector.load %arg2[%c0, %c0_0] : memref<144x64xf32, #tpu.memory_space<vmem>>, vector<32x16xf32>
    %c32 = arith.constant 32 : index
    %c0_1 = arith.constant 0 : index
    %1 = vector.load %arg2[%c32, %c0_1] : memref<144x64xf32, #tpu.memory_space<vmem>>, vector<16x60xf32>
    %c48 = arith.constant 48 : index
    %c0_2 = arith.constant 0 : index
    %2 = vector.load %arg2[%c48, %c0_2] : memref<144x64xf32, #tpu.memory_space<vmem>>, vector<16x48xf32>
    %c64 = arith.constant 64 : index
    %c0_3 = arith.constant 0 : index
    %3 = vector.load %arg2[%c64, %c0_3] : memref<144x64xf32, #tpu.memory_space<vmem>>, vector<4x12xf32>
    %c72 = arith.constant 72 : index
    %c0_4 = arith.constant 0 : index
    %4 = vector.load %arg2[%c72, %c0_4] : memref<144x64xf32, #tpu.memory_space<vmem>>, vector<32x8xf32>
    %c104 = arith.constant 104 : index
    %c0_5 = arith.constant 0 : index
    %5 = vector.load %arg2[%c104, %c0_5] : memref<144x64xf32, #tpu.memory_space<vmem>>, vector<1x16xf32>
    %c112 = arith.constant 112 : index
    %c0_6 = arith.constant 0 : index
    %6 = vector.load %arg2[%c112, %c0_6] : memref<144x64xf32, #tpu.memory_space<vmem>>, vector<1x60xf32>
    %c120 = arith.constant 120 : index
    %c0_7 = arith.constant 0 : index
    %7 = vector.load %arg2[%c120, %c0_7] : memref<144x64xf32, #tpu.memory_space<vmem>>, vector<1x48xf32>
    %c128 = arith.constant 128 : index
    %c0_8 = arith.constant 0 : index
    %8 = vector.load %arg2[%c128, %c0_8] : memref<144x64xf32, #tpu.memory_space<vmem>>, vector<1x12xf32>
    %c136 = arith.constant 136 : index
    %c0_9 = arith.constant 0 : index
    %9 = vector.load %arg2[%c136, %c0_9] : memref<144x64xf32, #tpu.memory_space<vmem>>, vector<1x8xf32>
    %c0_10 = arith.constant 0 : index
    %c0_11 = arith.constant 0 : index
    %10 = vector.load %arg0[%c0_10, %c0_11] : memref<26x32xf32, #tpu.memory_space<vmem>>, vector<26x32xf32>
    %cst = arith.constant dense<0.000000e+00> : vector<26x16xf32>
    %11 = tpu.matmul %10, %0, %cst {dimension_numbers = #tpu.dot_dimension_numbers<[1], [0], [0], [1], [0, 0, 1, 1], [], []>} : vector<26x32xf32>, vector<32x16xf32>, vector<26x16xf32> -> vector<26x16xf32>
    %12 = vector.broadcast %5 : vector<1x16xf32> to vector<26x16xf32>
    %13 = arith.addf %11, %12 : vector<26x16xf32>
    %cst_12 = arith.constant 0.000000e+00 : f32
    %14 = vector.broadcast %cst_12 : f32 to vector<26x16xf32>
    %15 = arith.maximumf %13, %14 : vector<26x16xf32>
    %cst_13 = arith.constant dense<0.000000e+00> : vector<26x60xf32>
    %16 = tpu.matmul %15, %1, %cst_13 {dimension_numbers = #tpu.dot_dimension_numbers<[1], [0], [0], [1], [0, 0, 1, 1], [], []>} : vector<26x16xf32>, vector<16x60xf32>, vector<26x60xf32> -> vector<26x60xf32>
    %17 = vector.broadcast %6 : vector<1x60xf32> to vector<26x60xf32>
    %18 = arith.addf %16, %17 : vector<26x60xf32>
    %cst_14 = arith.constant 0.000000e+00 : f32
    %19 = vector.broadcast %cst_14 : f32 to vector<2x16xf32>
    %cst_15 = arith.constant dense<0.000000e+00> : vector<2x48xf32>
    %20 = tpu.matmul %19, %2, %cst_15 {dimension_numbers = #tpu.dot_dimension_numbers<[1], [0], [0], [1], [0, 0, 1, 1], [], []>} : vector<2x16xf32>, vector<16x48xf32>, vector<2x48xf32> -> vector<2x48xf32>
    %21 = vector.broadcast %7 : vector<1x48xf32> to vector<2x48xf32>
    %22 = arith.addf %20, %21 : vector<2x48xf32>
    %23 = vector.extract_strided_slice %18 {offsets = [0, 0], sizes = [2, 48], strides = [1, 1]} : vector<26x60xf32> to vector<2x48xf32>
    %24 = vector.extract_strided_slice %23 {offsets = [0, 0], sizes = [2, 16], strides = [1, 1]} : vector<2x48xf32> to vector<2x16xf32>
    %25 = vector.extract_strided_slice %22 {offsets = [0, 0], sizes = [2, 16], strides = [1, 1]} : vector<2x48xf32> to vector<2x16xf32>
    %26 = arith.addf %24, %25 : vector<2x16xf32>
    %cst_16 = arith.constant 5.000000e-01 : f32
    %27 = vector.broadcast %cst_16 : f32 to vector<2x16xf32>
    %28 = arith.mulf %27, %26 : vector<2x16xf32>
    %29 = math.tanh %28 : vector<2x16xf32>
    %cst_17 = arith.constant 1.000000e+00 : f32
    %30 = vector.broadcast %cst_17 : f32 to vector<2x16xf32>
    %31 = arith.addf %29, %30 : vector<2x16xf32>
    %cst_18 = arith.constant 5.000000e-01 : f32
    %32 = vector.broadcast %cst_18 : f32 to vector<2x16xf32>
    %33 = arith.mulf %32, %31 : vector<2x16xf32>
    %34 = vector.extract_strided_slice %23 {offsets = [0, 16], sizes = [2, 16], strides = [1, 1]} : vector<2x48xf32> to vector<2x16xf32>
    %35 = vector.extract_strided_slice %22 {offsets = [0, 16], sizes = [2, 16], strides = [1, 1]} : vector<2x48xf32> to vector<2x16xf32>
    %36 = arith.addf %34, %35 : vector<2x16xf32>
    %cst_19 = arith.constant 5.000000e-01 : f32
    %37 = vector.broadcast %cst_19 : f32 to vector<2x16xf32>
    %38 = arith.mulf %37, %36 : vector<2x16xf32>
    %39 = math.tanh %38 : vector<2x16xf32>
    %cst_20 = arith.constant 1.000000e+00 : f32
    %40 = vector.broadcast %cst_20 : f32 to vector<2x16xf32>
    %41 = arith.addf %39, %40 : vector<2x16xf32>
    %cst_21 = arith.constant 5.000000e-01 : f32
    %42 = vector.broadcast %cst_21 : f32 to vector<2x16xf32>
    %43 = arith.mulf %42, %41 : vector<2x16xf32>
    %44 = vector.extract_strided_slice %23 {offsets = [0, 32], sizes = [2, 16], strides = [1, 1]} : vector<2x48xf32> to vector<2x16xf32>
    %45 = vector.extract_strided_slice %22 {offsets = [0, 32], sizes = [2, 16], strides = [1, 1]} : vector<2x48xf32> to vector<2x16xf32>
    %46 = arith.mulf %33, %45 : vector<2x16xf32>
    %47 = arith.addf %44, %46 : vector<2x16xf32>
    %48 = math.tanh %47 : vector<2x16xf32>
    %cst_22 = arith.constant 1.000000e+00 : f32
    %49 = vector.broadcast %cst_22 : f32 to vector<2x16xf32>
    %50 = arith.subf %49, %43 : vector<2x16xf32>
    %51 = arith.mulf %50, %48 : vector<2x16xf32>
    %52 = arith.mulf %43, %19 : vector<2x16xf32>
    %53 = arith.addf %51, %52 : vector<2x16xf32>
    %cst_23 = arith.constant dense<0.000000e+00> : vector<2x48xf32>
    %54 = tpu.matmul %53, %2, %cst_23 {dimension_numbers = #tpu.dot_dimension_numbers<[1], [0], [0], [1], [0, 0, 1, 1], [], []>} : vector<2x16xf32>, vector<16x48xf32>, vector<2x48xf32> -> vector<2x48xf32>
    %55 = vector.broadcast %7 : vector<1x48xf32> to vector<2x48xf32>
    %56 = arith.addf %54, %55 : vector<2x48xf32>
    %57 = vector.extract_strided_slice %18 {offsets = [2, 0], sizes = [2, 48], strides = [1, 1]} : vector<26x60xf32> to vector<2x48xf32>
    %58 = vector.extract_strided_slice %57 {offsets = [0, 0], sizes = [2, 16], strides = [1, 1]} : vector<2x48xf32> to vector<2x16xf32>
    %59 = vector.extract_strided_slice %56 {offsets = [0, 0], sizes = [2, 16], strides = [1, 1]} : vector<2x48xf32> to vector<2x16xf32>
    %60 = arith.addf %58, %59 : vector<2x16xf32>
    %cst_24 = arith.constant 5.000000e-01 : f32
    %61 = vector.broadcast %cst_24 : f32 to vector<2x16xf32>
    %62 = arith.mulf %61, %60 : vector<2x16xf32>
    %63 = math.tanh %62 : vector<2x16xf32>
    %cst_25 = arith.constant 1.000000e+00 : f32
    %64 = vector.broadcast %cst_25 : f32 to vector<2x16xf32>
    %65 = arith.addf %63, %64 : vector<2x16xf32>
    %cst_26 = arith.constant 5.000000e-01 : f32
    %66 = vector.broadcast %cst_26 : f32 to vector<2x16xf32>
    %67 = arith.mulf %66, %65 : vector<2x16xf32>
    %68 = vector.extract_strided_slice %57 {offsets = [0, 16], sizes = [2, 16], strides = [1, 1]} : vector<2x48xf32> to vector<2x16xf32>
    %69 = vector.extract_strided_slice %56 {offsets = [0, 16], sizes = [2, 16], strides = [1, 1]} : vector<2x48xf32> to vector<2x16xf32>
    %70 = arith.addf %68, %69 : vector<2x16xf32>
    %cst_27 = arith.constant 5.000000e-01 : f32
    %71 = vector.broadcast %cst_27 : f32 to vector<2x16xf32>
    %72 = arith.mulf %71, %70 : vector<2x16xf32>
    %73 = math.tanh %72 : vector<2x16xf32>
    %cst_28 = arith.constant 1.000000e+00 : f32
    %74 = vector.broadcast %cst_28 : f32 to vector<2x16xf32>
    %75 = arith.addf %73, %74 : vector<2x16xf32>
    %cst_29 = arith.constant 5.000000e-01 : f32
    %76 = vector.broadcast %cst_29 : f32 to vector<2x16xf32>
    %77 = arith.mulf %76, %75 : vector<2x16xf32>
    %78 = vector.extract_strided_slice %57 {offsets = [0, 32], sizes = [2, 16], strides = [1, 1]} : vector<2x48xf32> to vector<2x16xf32>
    %79 = vector.extract_strided_slice %56 {offsets = [0, 32], sizes = [2, 16], strides = [1, 1]} : vector<2x48xf32> to vector<2x16xf32>
    %80 = arith.mulf %67, %79 : vector<2x16xf32>
    %81 = arith.addf %78, %80 : vector<2x16xf32>
    %82 = math.tanh %81 : vector<2x16xf32>
    %cst_30 = arith.constant 1.000000e+00 : f32
    %83 = vector.broadcast %cst_30 : f32 to vector<2x16xf32>
    %84 = arith.subf %83, %77 : vector<2x16xf32>
    %85 = arith.mulf %84, %82 : vector<2x16xf32>
    %86 = arith.mulf %77, %53 : vector<2x16xf32>
    %87 = arith.addf %85, %86 : vector<2x16xf32>
    %cst_31 = arith.constant dense<0.000000e+00> : vector<2x48xf32>
    %88 = tpu.matmul %87, %2, %cst_31 {dimension_numbers = #tpu.dot_dimension_numbers<[1], [0], [0], [1], [0, 0, 1, 1], [], []>} : vector<2x16xf32>, vector<16x48xf32>, vector<2x48xf32> -> vector<2x48xf32>
    %89 = vector.broadcast %7 : vector<1x48xf32> to vector<2x48xf32>
    %90 = arith.addf %88, %89 : vector<2x48xf32>
    %91 = vector.extract_strided_slice %18 {offsets = [4, 0], sizes = [2, 48], strides = [1, 1]} : vector<26x60xf32> to vector<2x48xf32>
    %92 = vector.extract_strided_slice %91 {offsets = [0, 0], sizes = [2, 16], strides = [1, 1]} : vector<2x48xf32> to vector<2x16xf32>
    %93 = vector.extract_strided_slice %90 {offsets = [0, 0], sizes = [2, 16], strides = [1, 1]} : vector<2x48xf32> to vector<2x16xf32>
    %94 = arith.addf %92, %93 : vector<2x16xf32>
    %cst_32 = arith.constant 5.000000e-01 : f32
    %95 = vector.broadcast %cst_32 : f32 to vector<2x16xf32>
    %96 = arith.mulf %95, %94 : vector<2x16xf32>
    %97 = math.tanh %96 : vector<2x16xf32>
    %cst_33 = arith.constant 1.000000e+00 : f32
    %98 = vector.broadcast %cst_33 : f32 to vector<2x16xf32>
    %99 = arith.addf %97, %98 : vector<2x16xf32>
    %cst_34 = arith.constant 5.000000e-01 : f32
    %100 = vector.broadcast %cst_34 : f32 to vector<2x16xf32>
    %101 = arith.mulf %100, %99 : vector<2x16xf32>
    %102 = vector.extract_strided_slice %91 {offsets = [0, 16], sizes = [2, 16], strides = [1, 1]} : vector<2x48xf32> to vector<2x16xf32>
    %103 = vector.extract_strided_slice %90 {offsets = [0, 16], sizes = [2, 16], strides = [1, 1]} : vector<2x48xf32> to vector<2x16xf32>
    %104 = arith.addf %102, %103 : vector<2x16xf32>
    %cst_35 = arith.constant 5.000000e-01 : f32
    %105 = vector.broadcast %cst_35 : f32 to vector<2x16xf32>
    %106 = arith.mulf %105, %104 : vector<2x16xf32>
    %107 = math.tanh %106 : vector<2x16xf32>
    %cst_36 = arith.constant 1.000000e+00 : f32
    %108 = vector.broadcast %cst_36 : f32 to vector<2x16xf32>
    %109 = arith.addf %107, %108 : vector<2x16xf32>
    %cst_37 = arith.constant 5.000000e-01 : f32
    %110 = vector.broadcast %cst_37 : f32 to vector<2x16xf32>
    %111 = arith.mulf %110, %109 : vector<2x16xf32>
    %112 = vector.extract_strided_slice %91 {offsets = [0, 32], sizes = [2, 16], strides = [1, 1]} : vector<2x48xf32> to vector<2x16xf32>
    %113 = vector.extract_strided_slice %90 {offsets = [0, 32], sizes = [2, 16], strides = [1, 1]} : vector<2x48xf32> to vector<2x16xf32>
    %114 = arith.mulf %101, %113 : vector<2x16xf32>
    %115 = arith.addf %112, %114 : vector<2x16xf32>
    %116 = math.tanh %115 : vector<2x16xf32>
    %cst_38 = arith.constant 1.000000e+00 : f32
    %117 = vector.broadcast %cst_38 : f32 to vector<2x16xf32>
    %118 = arith.subf %117, %111 : vector<2x16xf32>
    %119 = arith.mulf %118, %116 : vector<2x16xf32>
    %120 = arith.mulf %111, %87 : vector<2x16xf32>
    %121 = arith.addf %119, %120 : vector<2x16xf32>
    %cst_39 = arith.constant dense<0.000000e+00> : vector<2x48xf32>
    %122 = tpu.matmul %121, %2, %cst_39 {dimension_numbers = #tpu.dot_dimension_numbers<[1], [0], [0], [1], [0, 0, 1, 1], [], []>} : vector<2x16xf32>, vector<16x48xf32>, vector<2x48xf32> -> vector<2x48xf32>
    %123 = vector.broadcast %7 : vector<1x48xf32> to vector<2x48xf32>
    %124 = arith.addf %122, %123 : vector<2x48xf32>
    %125 = vector.extract_strided_slice %18 {offsets = [6, 0], sizes = [2, 48], strides = [1, 1]} : vector<26x60xf32> to vector<2x48xf32>
    %126 = vector.extract_strided_slice %125 {offsets = [0, 0], sizes = [2, 16], strides = [1, 1]} : vector<2x48xf32> to vector<2x16xf32>
    %127 = vector.extract_strided_slice %124 {offsets = [0, 0], sizes = [2, 16], strides = [1, 1]} : vector<2x48xf32> to vector<2x16xf32>
    %128 = arith.addf %126, %127 : vector<2x16xf32>
    %cst_40 = arith.constant 5.000000e-01 : f32
    %129 = vector.broadcast %cst_40 : f32 to vector<2x16xf32>
    %130 = arith.mulf %129, %128 : vector<2x16xf32>
    %131 = math.tanh %130 : vector<2x16xf32>
    %cst_41 = arith.constant 1.000000e+00 : f32
    %132 = vector.broadcast %cst_41 : f32 to vector<2x16xf32>
    %133 = arith.addf %131, %132 : vector<2x16xf32>
    %cst_42 = arith.constant 5.000000e-01 : f32
    %134 = vector.broadcast %cst_42 : f32 to vector<2x16xf32>
    %135 = arith.mulf %134, %133 : vector<2x16xf32>
    %136 = vector.extract_strided_slice %125 {offsets = [0, 16], sizes = [2, 16], strides = [1, 1]} : vector<2x48xf32> to vector<2x16xf32>
    %137 = vector.extract_strided_slice %124 {offsets = [0, 16], sizes = [2, 16], strides = [1, 1]} : vector<2x48xf32> to vector<2x16xf32>
    %138 = arith.addf %136, %137 : vector<2x16xf32>
    %cst_43 = arith.constant 5.000000e-01 : f32
    %139 = vector.broadcast %cst_43 : f32 to vector<2x16xf32>
    %140 = arith.mulf %139, %138 : vector<2x16xf32>
    %141 = math.tanh %140 : vector<2x16xf32>
    %cst_44 = arith.constant 1.000000e+00 : f32
    %142 = vector.broadcast %cst_44 : f32 to vector<2x16xf32>
    %143 = arith.addf %141, %142 : vector<2x16xf32>
    %cst_45 = arith.constant 5.000000e-01 : f32
    %144 = vector.broadcast %cst_45 : f32 to vector<2x16xf32>
    %145 = arith.mulf %144, %143 : vector<2x16xf32>
    %146 = vector.extract_strided_slice %125 {offsets = [0, 32], sizes = [2, 16], strides = [1, 1]} : vector<2x48xf32> to vector<2x16xf32>
    %147 = vector.extract_strided_slice %124 {offsets = [0, 32], sizes = [2, 16], strides = [1, 1]} : vector<2x48xf32> to vector<2x16xf32>
    %148 = arith.mulf %135, %147 : vector<2x16xf32>
    %149 = arith.addf %146, %148 : vector<2x16xf32>
    %150 = math.tanh %149 : vector<2x16xf32>
    %cst_46 = arith.constant 1.000000e+00 : f32
    %151 = vector.broadcast %cst_46 : f32 to vector<2x16xf32>
    %152 = arith.subf %151, %145 : vector<2x16xf32>
    %153 = arith.mulf %152, %150 : vector<2x16xf32>
    %154 = arith.mulf %145, %121 : vector<2x16xf32>
    %155 = arith.addf %153, %154 : vector<2x16xf32>
    %cst_47 = arith.constant dense<0.000000e+00> : vector<2x48xf32>
    %156 = tpu.matmul %155, %2, %cst_47 {dimension_numbers = #tpu.dot_dimension_numbers<[1], [0], [0], [1], [0, 0, 1, 1], [], []>} : vector<2x16xf32>, vector<16x48xf32>, vector<2x48xf32> -> vector<2x48xf32>
    %157 = vector.broadcast %7 : vector<1x48xf32> to vector<2x48xf32>
    %158 = arith.addf %156, %157 : vector<2x48xf32>
    %159 = vector.extract_strided_slice %18 {offsets = [8, 0], sizes = [2, 48], strides = [1, 1]} : vector<26x60xf32> to vector<2x48xf32>
    %160 = vector.extract_strided_slice %159 {offsets = [0, 0], sizes = [2, 16], strides = [1, 1]} : vector<2x48xf32> to vector<2x16xf32>
    %161 = vector.extract_strided_slice %158 {offsets = [0, 0], sizes = [2, 16], strides = [1, 1]} : vector<2x48xf32> to vector<2x16xf32>
    %162 = arith.addf %160, %161 : vector<2x16xf32>
    %cst_48 = arith.constant 5.000000e-01 : f32
    %163 = vector.broadcast %cst_48 : f32 to vector<2x16xf32>
    %164 = arith.mulf %163, %162 : vector<2x16xf32>
    %165 = math.tanh %164 : vector<2x16xf32>
    %cst_49 = arith.constant 1.000000e+00 : f32
    %166 = vector.broadcast %cst_49 : f32 to vector<2x16xf32>
    %167 = arith.addf %165, %166 : vector<2x16xf32>
    %cst_50 = arith.constant 5.000000e-01 : f32
    %168 = vector.broadcast %cst_50 : f32 to vector<2x16xf32>
    %169 = arith.mulf %168, %167 : vector<2x16xf32>
    %170 = vector.extract_strided_slice %159 {offsets = [0, 16], sizes = [2, 16], strides = [1, 1]} : vector<2x48xf32> to vector<2x16xf32>
    %171 = vector.extract_strided_slice %158 {offsets = [0, 16], sizes = [2, 16], strides = [1, 1]} : vector<2x48xf32> to vector<2x16xf32>
    %172 = arith.addf %170, %171 : vector<2x16xf32>
    %cst_51 = arith.constant 5.000000e-01 : f32
    %173 = vector.broadcast %cst_51 : f32 to vector<2x16xf32>
    %174 = arith.mulf %173, %172 : vector<2x16xf32>
    %175 = math.tanh %174 : vector<2x16xf32>
    %cst_52 = arith.constant 1.000000e+00 : f32
    %176 = vector.broadcast %cst_52 : f32 to vector<2x16xf32>
    %177 = arith.addf %175, %176 : vector<2x16xf32>
    %cst_53 = arith.constant 5.000000e-01 : f32
    %178 = vector.broadcast %cst_53 : f32 to vector<2x16xf32>
    %179 = arith.mulf %178, %177 : vector<2x16xf32>
    %180 = vector.extract_strided_slice %159 {offsets = [0, 32], sizes = [2, 16], strides = [1, 1]} : vector<2x48xf32> to vector<2x16xf32>
    %181 = vector.extract_strided_slice %158 {offsets = [0, 32], sizes = [2, 16], strides = [1, 1]} : vector<2x48xf32> to vector<2x16xf32>
    %182 = arith.mulf %169, %181 : vector<2x16xf32>
    %183 = arith.addf %180, %182 : vector<2x16xf32>
    %184 = math.tanh %183 : vector<2x16xf32>
    %cst_54 = arith.constant 1.000000e+00 : f32
    %185 = vector.broadcast %cst_54 : f32 to vector<2x16xf32>
    %186 = arith.subf %185, %179 : vector<2x16xf32>
    %187 = arith.mulf %186, %184 : vector<2x16xf32>
    %188 = arith.mulf %179, %155 : vector<2x16xf32>
    %189 = arith.addf %187, %188 : vector<2x16xf32>
    %cst_55 = arith.constant dense<0.000000e+00> : vector<2x48xf32>
    %190 = tpu.matmul %189, %2, %cst_55 {dimension_numbers = #tpu.dot_dimension_numbers<[1], [0], [0], [1], [0, 0, 1, 1], [], []>} : vector<2x16xf32>, vector<16x48xf32>, vector<2x48xf32> -> vector<2x48xf32>
    %191 = vector.broadcast %7 : vector<1x48xf32> to vector<2x48xf32>
    %192 = arith.addf %190, %191 : vector<2x48xf32>
    %193 = vector.extract_strided_slice %18 {offsets = [10, 0], sizes = [2, 48], strides = [1, 1]} : vector<26x60xf32> to vector<2x48xf32>
    %194 = vector.extract_strided_slice %193 {offsets = [0, 0], sizes = [2, 16], strides = [1, 1]} : vector<2x48xf32> to vector<2x16xf32>
    %195 = vector.extract_strided_slice %192 {offsets = [0, 0], sizes = [2, 16], strides = [1, 1]} : vector<2x48xf32> to vector<2x16xf32>
    %196 = arith.addf %194, %195 : vector<2x16xf32>
    %cst_56 = arith.constant 5.000000e-01 : f32
    %197 = vector.broadcast %cst_56 : f32 to vector<2x16xf32>
    %198 = arith.mulf %197, %196 : vector<2x16xf32>
    %199 = math.tanh %198 : vector<2x16xf32>
    %cst_57 = arith.constant 1.000000e+00 : f32
    %200 = vector.broadcast %cst_57 : f32 to vector<2x16xf32>
    %201 = arith.addf %199, %200 : vector<2x16xf32>
    %cst_58 = arith.constant 5.000000e-01 : f32
    %202 = vector.broadcast %cst_58 : f32 to vector<2x16xf32>
    %203 = arith.mulf %202, %201 : vector<2x16xf32>
    %204 = vector.extract_strided_slice %193 {offsets = [0, 16], sizes = [2, 16], strides = [1, 1]} : vector<2x48xf32> to vector<2x16xf32>
    %205 = vector.extract_strided_slice %192 {offsets = [0, 16], sizes = [2, 16], strides = [1, 1]} : vector<2x48xf32> to vector<2x16xf32>
    %206 = arith.addf %204, %205 : vector<2x16xf32>
    %cst_59 = arith.constant 5.000000e-01 : f32
    %207 = vector.broadcast %cst_59 : f32 to vector<2x16xf32>
    %208 = arith.mulf %207, %206 : vector<2x16xf32>
    %209 = math.tanh %208 : vector<2x16xf32>
    %cst_60 = arith.constant 1.000000e+00 : f32
    %210 = vector.broadcast %cst_60 : f32 to vector<2x16xf32>
    %211 = arith.addf %209, %210 : vector<2x16xf32>
    %cst_61 = arith.constant 5.000000e-01 : f32
    %212 = vector.broadcast %cst_61 : f32 to vector<2x16xf32>
    %213 = arith.mulf %212, %211 : vector<2x16xf32>
    %214 = vector.extract_strided_slice %193 {offsets = [0, 32], sizes = [2, 16], strides = [1, 1]} : vector<2x48xf32> to vector<2x16xf32>
    %215 = vector.extract_strided_slice %192 {offsets = [0, 32], sizes = [2, 16], strides = [1, 1]} : vector<2x48xf32> to vector<2x16xf32>
    %216 = arith.mulf %203, %215 : vector<2x16xf32>
    %217 = arith.addf %214, %216 : vector<2x16xf32>
    %218 = math.tanh %217 : vector<2x16xf32>
    %cst_62 = arith.constant 1.000000e+00 : f32
    %219 = vector.broadcast %cst_62 : f32 to vector<2x16xf32>
    %220 = arith.subf %219, %213 : vector<2x16xf32>
    %221 = arith.mulf %220, %218 : vector<2x16xf32>
    %222 = arith.mulf %213, %189 : vector<2x16xf32>
    %223 = arith.addf %221, %222 : vector<2x16xf32>
    %cst_63 = arith.constant dense<0.000000e+00> : vector<2x48xf32>
    %224 = tpu.matmul %223, %2, %cst_63 {dimension_numbers = #tpu.dot_dimension_numbers<[1], [0], [0], [1], [0, 0, 1, 1], [], []>} : vector<2x16xf32>, vector<16x48xf32>, vector<2x48xf32> -> vector<2x48xf32>
    %225 = vector.broadcast %7 : vector<1x48xf32> to vector<2x48xf32>
    %226 = arith.addf %224, %225 : vector<2x48xf32>
    %227 = vector.extract_strided_slice %18 {offsets = [12, 0], sizes = [2, 48], strides = [1, 1]} : vector<26x60xf32> to vector<2x48xf32>
    %228 = vector.extract_strided_slice %227 {offsets = [0, 0], sizes = [2, 16], strides = [1, 1]} : vector<2x48xf32> to vector<2x16xf32>
    %229 = vector.extract_strided_slice %226 {offsets = [0, 0], sizes = [2, 16], strides = [1, 1]} : vector<2x48xf32> to vector<2x16xf32>
    %230 = arith.addf %228, %229 : vector<2x16xf32>
    %cst_64 = arith.constant 5.000000e-01 : f32
    %231 = vector.broadcast %cst_64 : f32 to vector<2x16xf32>
    %232 = arith.mulf %231, %230 : vector<2x16xf32>
    %233 = math.tanh %232 : vector<2x16xf32>
    %cst_65 = arith.constant 1.000000e+00 : f32
    %234 = vector.broadcast %cst_65 : f32 to vector<2x16xf32>
    %235 = arith.addf %233, %234 : vector<2x16xf32>
    %cst_66 = arith.constant 5.000000e-01 : f32
    %236 = vector.broadcast %cst_66 : f32 to vector<2x16xf32>
    %237 = arith.mulf %236, %235 : vector<2x16xf32>
    %238 = vector.extract_strided_slice %227 {offsets = [0, 16], sizes = [2, 16], strides = [1, 1]} : vector<2x48xf32> to vector<2x16xf32>
    %239 = vector.extract_strided_slice %226 {offsets = [0, 16], sizes = [2, 16], strides = [1, 1]} : vector<2x48xf32> to vector<2x16xf32>
    %240 = arith.addf %238, %239 : vector<2x16xf32>
    %cst_67 = arith.constant 5.000000e-01 : f32
    %241 = vector.broadcast %cst_67 : f32 to vector<2x16xf32>
    %242 = arith.mulf %241, %240 : vector<2x16xf32>
    %243 = math.tanh %242 : vector<2x16xf32>
    %cst_68 = arith.constant 1.000000e+00 : f32
    %244 = vector.broadcast %cst_68 : f32 to vector<2x16xf32>
    %245 = arith.addf %243, %244 : vector<2x16xf32>
    %cst_69 = arith.constant 5.000000e-01 : f32
    %246 = vector.broadcast %cst_69 : f32 to vector<2x16xf32>
    %247 = arith.mulf %246, %245 : vector<2x16xf32>
    %248 = vector.extract_strided_slice %227 {offsets = [0, 32], sizes = [2, 16], strides = [1, 1]} : vector<2x48xf32> to vector<2x16xf32>
    %249 = vector.extract_strided_slice %226 {offsets = [0, 32], sizes = [2, 16], strides = [1, 1]} : vector<2x48xf32> to vector<2x16xf32>
    %250 = arith.mulf %237, %249 : vector<2x16xf32>
    %251 = arith.addf %248, %250 : vector<2x16xf32>
    %252 = math.tanh %251 : vector<2x16xf32>
    %cst_70 = arith.constant 1.000000e+00 : f32
    %253 = vector.broadcast %cst_70 : f32 to vector<2x16xf32>
    %254 = arith.subf %253, %247 : vector<2x16xf32>
    %255 = arith.mulf %254, %252 : vector<2x16xf32>
    %256 = arith.mulf %247, %223 : vector<2x16xf32>
    %257 = arith.addf %255, %256 : vector<2x16xf32>
    %cst_71 = arith.constant dense<0.000000e+00> : vector<2x48xf32>
    %258 = tpu.matmul %257, %2, %cst_71 {dimension_numbers = #tpu.dot_dimension_numbers<[1], [0], [0], [1], [0, 0, 1, 1], [], []>} : vector<2x16xf32>, vector<16x48xf32>, vector<2x48xf32> -> vector<2x48xf32>
    %259 = vector.broadcast %7 : vector<1x48xf32> to vector<2x48xf32>
    %260 = arith.addf %258, %259 : vector<2x48xf32>
    %261 = vector.extract_strided_slice %18 {offsets = [14, 0], sizes = [2, 48], strides = [1, 1]} : vector<26x60xf32> to vector<2x48xf32>
    %262 = vector.extract_strided_slice %261 {offsets = [0, 0], sizes = [2, 16], strides = [1, 1]} : vector<2x48xf32> to vector<2x16xf32>
    %263 = vector.extract_strided_slice %260 {offsets = [0, 0], sizes = [2, 16], strides = [1, 1]} : vector<2x48xf32> to vector<2x16xf32>
    %264 = arith.addf %262, %263 : vector<2x16xf32>
    %cst_72 = arith.constant 5.000000e-01 : f32
    %265 = vector.broadcast %cst_72 : f32 to vector<2x16xf32>
    %266 = arith.mulf %265, %264 : vector<2x16xf32>
    %267 = math.tanh %266 : vector<2x16xf32>
    %cst_73 = arith.constant 1.000000e+00 : f32
    %268 = vector.broadcast %cst_73 : f32 to vector<2x16xf32>
    %269 = arith.addf %267, %268 : vector<2x16xf32>
    %cst_74 = arith.constant 5.000000e-01 : f32
    %270 = vector.broadcast %cst_74 : f32 to vector<2x16xf32>
    %271 = arith.mulf %270, %269 : vector<2x16xf32>
    %272 = vector.extract_strided_slice %261 {offsets = [0, 16], sizes = [2, 16], strides = [1, 1]} : vector<2x48xf32> to vector<2x16xf32>
    %273 = vector.extract_strided_slice %260 {offsets = [0, 16], sizes = [2, 16], strides = [1, 1]} : vector<2x48xf32> to vector<2x16xf32>
    %274 = arith.addf %272, %273 : vector<2x16xf32>
    %cst_75 = arith.constant 5.000000e-01 : f32
    %275 = vector.broadcast %cst_75 : f32 to vector<2x16xf32>
    %276 = arith.mulf %275, %274 : vector<2x16xf32>
    %277 = math.tanh %276 : vector<2x16xf32>
    %cst_76 = arith.constant 1.000000e+00 : f32
    %278 = vector.broadcast %cst_76 : f32 to vector<2x16xf32>
    %279 = arith.addf %277, %278 : vector<2x16xf32>
    %cst_77 = arith.constant 5.000000e-01 : f32
    %280 = vector.broadcast %cst_77 : f32 to vector<2x16xf32>
    %281 = arith.mulf %280, %279 : vector<2x16xf32>
    %282 = vector.extract_strided_slice %261 {offsets = [0, 32], sizes = [2, 16], strides = [1, 1]} : vector<2x48xf32> to vector<2x16xf32>
    %283 = vector.extract_strided_slice %260 {offsets = [0, 32], sizes = [2, 16], strides = [1, 1]} : vector<2x48xf32> to vector<2x16xf32>
    %284 = arith.mulf %271, %283 : vector<2x16xf32>
    %285 = arith.addf %282, %284 : vector<2x16xf32>
    %286 = math.tanh %285 : vector<2x16xf32>
    %cst_78 = arith.constant 1.000000e+00 : f32
    %287 = vector.broadcast %cst_78 : f32 to vector<2x16xf32>
    %288 = arith.subf %287, %281 : vector<2x16xf32>
    %289 = arith.mulf %288, %286 : vector<2x16xf32>
    %290 = arith.mulf %281, %257 : vector<2x16xf32>
    %291 = arith.addf %289, %290 : vector<2x16xf32>
    %cst_79 = arith.constant dense<0.000000e+00> : vector<2x48xf32>
    %292 = tpu.matmul %291, %2, %cst_79 {dimension_numbers = #tpu.dot_dimension_numbers<[1], [0], [0], [1], [0, 0, 1, 1], [], []>} : vector<2x16xf32>, vector<16x48xf32>, vector<2x48xf32> -> vector<2x48xf32>
    %293 = vector.broadcast %7 : vector<1x48xf32> to vector<2x48xf32>
    %294 = arith.addf %292, %293 : vector<2x48xf32>
    %295 = vector.extract_strided_slice %18 {offsets = [16, 0], sizes = [2, 48], strides = [1, 1]} : vector<26x60xf32> to vector<2x48xf32>
    %296 = vector.extract_strided_slice %295 {offsets = [0, 0], sizes = [2, 16], strides = [1, 1]} : vector<2x48xf32> to vector<2x16xf32>
    %297 = vector.extract_strided_slice %294 {offsets = [0, 0], sizes = [2, 16], strides = [1, 1]} : vector<2x48xf32> to vector<2x16xf32>
    %298 = arith.addf %296, %297 : vector<2x16xf32>
    %cst_80 = arith.constant 5.000000e-01 : f32
    %299 = vector.broadcast %cst_80 : f32 to vector<2x16xf32>
    %300 = arith.mulf %299, %298 : vector<2x16xf32>
    %301 = math.tanh %300 : vector<2x16xf32>
    %cst_81 = arith.constant 1.000000e+00 : f32
    %302 = vector.broadcast %cst_81 : f32 to vector<2x16xf32>
    %303 = arith.addf %301, %302 : vector<2x16xf32>
    %cst_82 = arith.constant 5.000000e-01 : f32
    %304 = vector.broadcast %cst_82 : f32 to vector<2x16xf32>
    %305 = arith.mulf %304, %303 : vector<2x16xf32>
    %306 = vector.extract_strided_slice %295 {offsets = [0, 16], sizes = [2, 16], strides = [1, 1]} : vector<2x48xf32> to vector<2x16xf32>
    %307 = vector.extract_strided_slice %294 {offsets = [0, 16], sizes = [2, 16], strides = [1, 1]} : vector<2x48xf32> to vector<2x16xf32>
    %308 = arith.addf %306, %307 : vector<2x16xf32>
    %cst_83 = arith.constant 5.000000e-01 : f32
    %309 = vector.broadcast %cst_83 : f32 to vector<2x16xf32>
    %310 = arith.mulf %309, %308 : vector<2x16xf32>
    %311 = math.tanh %310 : vector<2x16xf32>
    %cst_84 = arith.constant 1.000000e+00 : f32
    %312 = vector.broadcast %cst_84 : f32 to vector<2x16xf32>
    %313 = arith.addf %311, %312 : vector<2x16xf32>
    %cst_85 = arith.constant 5.000000e-01 : f32
    %314 = vector.broadcast %cst_85 : f32 to vector<2x16xf32>
    %315 = arith.mulf %314, %313 : vector<2x16xf32>
    %316 = vector.extract_strided_slice %295 {offsets = [0, 32], sizes = [2, 16], strides = [1, 1]} : vector<2x48xf32> to vector<2x16xf32>
    %317 = vector.extract_strided_slice %294 {offsets = [0, 32], sizes = [2, 16], strides = [1, 1]} : vector<2x48xf32> to vector<2x16xf32>
    %318 = arith.mulf %305, %317 : vector<2x16xf32>
    %319 = arith.addf %316, %318 : vector<2x16xf32>
    %320 = math.tanh %319 : vector<2x16xf32>
    %cst_86 = arith.constant 1.000000e+00 : f32
    %321 = vector.broadcast %cst_86 : f32 to vector<2x16xf32>
    %322 = arith.subf %321, %315 : vector<2x16xf32>
    %323 = arith.mulf %322, %320 : vector<2x16xf32>
    %324 = arith.mulf %315, %291 : vector<2x16xf32>
    %325 = arith.addf %323, %324 : vector<2x16xf32>
    %cst_87 = arith.constant dense<0.000000e+00> : vector<2x48xf32>
    %326 = tpu.matmul %325, %2, %cst_87 {dimension_numbers = #tpu.dot_dimension_numbers<[1], [0], [0], [1], [0, 0, 1, 1], [], []>} : vector<2x16xf32>, vector<16x48xf32>, vector<2x48xf32> -> vector<2x48xf32>
    %327 = vector.broadcast %7 : vector<1x48xf32> to vector<2x48xf32>
    %328 = arith.addf %326, %327 : vector<2x48xf32>
    %329 = vector.extract_strided_slice %18 {offsets = [18, 0], sizes = [2, 48], strides = [1, 1]} : vector<26x60xf32> to vector<2x48xf32>
    %330 = vector.extract_strided_slice %329 {offsets = [0, 0], sizes = [2, 16], strides = [1, 1]} : vector<2x48xf32> to vector<2x16xf32>
    %331 = vector.extract_strided_slice %328 {offsets = [0, 0], sizes = [2, 16], strides = [1, 1]} : vector<2x48xf32> to vector<2x16xf32>
    %332 = arith.addf %330, %331 : vector<2x16xf32>
    %cst_88 = arith.constant 5.000000e-01 : f32
    %333 = vector.broadcast %cst_88 : f32 to vector<2x16xf32>
    %334 = arith.mulf %333, %332 : vector<2x16xf32>
    %335 = math.tanh %334 : vector<2x16xf32>
    %cst_89 = arith.constant 1.000000e+00 : f32
    %336 = vector.broadcast %cst_89 : f32 to vector<2x16xf32>
    %337 = arith.addf %335, %336 : vector<2x16xf32>
    %cst_90 = arith.constant 5.000000e-01 : f32
    %338 = vector.broadcast %cst_90 : f32 to vector<2x16xf32>
    %339 = arith.mulf %338, %337 : vector<2x16xf32>
    %340 = vector.extract_strided_slice %329 {offsets = [0, 16], sizes = [2, 16], strides = [1, 1]} : vector<2x48xf32> to vector<2x16xf32>
    %341 = vector.extract_strided_slice %328 {offsets = [0, 16], sizes = [2, 16], strides = [1, 1]} : vector<2x48xf32> to vector<2x16xf32>
    %342 = arith.addf %340, %341 : vector<2x16xf32>
    %cst_91 = arith.constant 5.000000e-01 : f32
    %343 = vector.broadcast %cst_91 : f32 to vector<2x16xf32>
    %344 = arith.mulf %343, %342 : vector<2x16xf32>
    %345 = math.tanh %344 : vector<2x16xf32>
    %cst_92 = arith.constant 1.000000e+00 : f32
    %346 = vector.broadcast %cst_92 : f32 to vector<2x16xf32>
    %347 = arith.addf %345, %346 : vector<2x16xf32>
    %cst_93 = arith.constant 5.000000e-01 : f32
    %348 = vector.broadcast %cst_93 : f32 to vector<2x16xf32>
    %349 = arith.mulf %348, %347 : vector<2x16xf32>
    %350 = vector.extract_strided_slice %329 {offsets = [0, 32], sizes = [2, 16], strides = [1, 1]} : vector<2x48xf32> to vector<2x16xf32>
    %351 = vector.extract_strided_slice %328 {offsets = [0, 32], sizes = [2, 16], strides = [1, 1]} : vector<2x48xf32> to vector<2x16xf32>
    %352 = arith.mulf %339, %351 : vector<2x16xf32>
    %353 = arith.addf %350, %352 : vector<2x16xf32>
    %354 = math.tanh %353 : vector<2x16xf32>
    %cst_94 = arith.constant 1.000000e+00 : f32
    %355 = vector.broadcast %cst_94 : f32 to vector<2x16xf32>
    %356 = arith.subf %355, %349 : vector<2x16xf32>
    %357 = arith.mulf %356, %354 : vector<2x16xf32>
    %358 = arith.mulf %349, %325 : vector<2x16xf32>
    %359 = arith.addf %357, %358 : vector<2x16xf32>
    %cst_95 = arith.constant dense<0.000000e+00> : vector<2x48xf32>
    %360 = tpu.matmul %359, %2, %cst_95 {dimension_numbers = #tpu.dot_dimension_numbers<[1], [0], [0], [1], [0, 0, 1, 1], [], []>} : vector<2x16xf32>, vector<16x48xf32>, vector<2x48xf32> -> vector<2x48xf32>
    %361 = vector.broadcast %7 : vector<1x48xf32> to vector<2x48xf32>
    %362 = arith.addf %360, %361 : vector<2x48xf32>
    %363 = vector.extract_strided_slice %18 {offsets = [20, 0], sizes = [2, 48], strides = [1, 1]} : vector<26x60xf32> to vector<2x48xf32>
    %364 = vector.extract_strided_slice %363 {offsets = [0, 0], sizes = [2, 16], strides = [1, 1]} : vector<2x48xf32> to vector<2x16xf32>
    %365 = vector.extract_strided_slice %362 {offsets = [0, 0], sizes = [2, 16], strides = [1, 1]} : vector<2x48xf32> to vector<2x16xf32>
    %366 = arith.addf %364, %365 : vector<2x16xf32>
    %cst_96 = arith.constant 5.000000e-01 : f32
    %367 = vector.broadcast %cst_96 : f32 to vector<2x16xf32>
    %368 = arith.mulf %367, %366 : vector<2x16xf32>
    %369 = math.tanh %368 : vector<2x16xf32>
    %cst_97 = arith.constant 1.000000e+00 : f32
    %370 = vector.broadcast %cst_97 : f32 to vector<2x16xf32>
    %371 = arith.addf %369, %370 : vector<2x16xf32>
    %cst_98 = arith.constant 5.000000e-01 : f32
    %372 = vector.broadcast %cst_98 : f32 to vector<2x16xf32>
    %373 = arith.mulf %372, %371 : vector<2x16xf32>
    %374 = vector.extract_strided_slice %363 {offsets = [0, 16], sizes = [2, 16], strides = [1, 1]} : vector<2x48xf32> to vector<2x16xf32>
    %375 = vector.extract_strided_slice %362 {offsets = [0, 16], sizes = [2, 16], strides = [1, 1]} : vector<2x48xf32> to vector<2x16xf32>
    %376 = arith.addf %374, %375 : vector<2x16xf32>
    %cst_99 = arith.constant 5.000000e-01 : f32
    %377 = vector.broadcast %cst_99 : f32 to vector<2x16xf32>
    %378 = arith.mulf %377, %376 : vector<2x16xf32>
    %379 = math.tanh %378 : vector<2x16xf32>
    %cst_100 = arith.constant 1.000000e+00 : f32
    %380 = vector.broadcast %cst_100 : f32 to vector<2x16xf32>
    %381 = arith.addf %379, %380 : vector<2x16xf32>
    %cst_101 = arith.constant 5.000000e-01 : f32
    %382 = vector.broadcast %cst_101 : f32 to vector<2x16xf32>
    %383 = arith.mulf %382, %381 : vector<2x16xf32>
    %384 = vector.extract_strided_slice %363 {offsets = [0, 32], sizes = [2, 16], strides = [1, 1]} : vector<2x48xf32> to vector<2x16xf32>
    %385 = vector.extract_strided_slice %362 {offsets = [0, 32], sizes = [2, 16], strides = [1, 1]} : vector<2x48xf32> to vector<2x16xf32>
    %386 = arith.mulf %373, %385 : vector<2x16xf32>
    %387 = arith.addf %384, %386 : vector<2x16xf32>
    %388 = math.tanh %387 : vector<2x16xf32>
    %cst_102 = arith.constant 1.000000e+00 : f32
    %389 = vector.broadcast %cst_102 : f32 to vector<2x16xf32>
    %390 = arith.subf %389, %383 : vector<2x16xf32>
    %391 = arith.mulf %390, %388 : vector<2x16xf32>
    %392 = arith.mulf %383, %359 : vector<2x16xf32>
    %393 = arith.addf %391, %392 : vector<2x16xf32>
    %cst_103 = arith.constant dense<0.000000e+00> : vector<2x48xf32>
    %394 = tpu.matmul %393, %2, %cst_103 {dimension_numbers = #tpu.dot_dimension_numbers<[1], [0], [0], [1], [0, 0, 1, 1], [], []>} : vector<2x16xf32>, vector<16x48xf32>, vector<2x48xf32> -> vector<2x48xf32>
    %395 = vector.broadcast %7 : vector<1x48xf32> to vector<2x48xf32>
    %396 = arith.addf %394, %395 : vector<2x48xf32>
    %397 = vector.extract_strided_slice %18 {offsets = [22, 0], sizes = [2, 48], strides = [1, 1]} : vector<26x60xf32> to vector<2x48xf32>
    %398 = vector.extract_strided_slice %397 {offsets = [0, 0], sizes = [2, 16], strides = [1, 1]} : vector<2x48xf32> to vector<2x16xf32>
    %399 = vector.extract_strided_slice %396 {offsets = [0, 0], sizes = [2, 16], strides = [1, 1]} : vector<2x48xf32> to vector<2x16xf32>
    %400 = arith.addf %398, %399 : vector<2x16xf32>
    %cst_104 = arith.constant 5.000000e-01 : f32
    %401 = vector.broadcast %cst_104 : f32 to vector<2x16xf32>
    %402 = arith.mulf %401, %400 : vector<2x16xf32>
    %403 = math.tanh %402 : vector<2x16xf32>
    %cst_105 = arith.constant 1.000000e+00 : f32
    %404 = vector.broadcast %cst_105 : f32 to vector<2x16xf32>
    %405 = arith.addf %403, %404 : vector<2x16xf32>
    %cst_106 = arith.constant 5.000000e-01 : f32
    %406 = vector.broadcast %cst_106 : f32 to vector<2x16xf32>
    %407 = arith.mulf %406, %405 : vector<2x16xf32>
    %408 = vector.extract_strided_slice %397 {offsets = [0, 16], sizes = [2, 16], strides = [1, 1]} : vector<2x48xf32> to vector<2x16xf32>
    %409 = vector.extract_strided_slice %396 {offsets = [0, 16], sizes = [2, 16], strides = [1, 1]} : vector<2x48xf32> to vector<2x16xf32>
    %410 = arith.addf %408, %409 : vector<2x16xf32>
    %cst_107 = arith.constant 5.000000e-01 : f32
    %411 = vector.broadcast %cst_107 : f32 to vector<2x16xf32>
    %412 = arith.mulf %411, %410 : vector<2x16xf32>
    %413 = math.tanh %412 : vector<2x16xf32>
    %cst_108 = arith.constant 1.000000e+00 : f32
    %414 = vector.broadcast %cst_108 : f32 to vector<2x16xf32>
    %415 = arith.addf %413, %414 : vector<2x16xf32>
    %cst_109 = arith.constant 5.000000e-01 : f32
    %416 = vector.broadcast %cst_109 : f32 to vector<2x16xf32>
    %417 = arith.mulf %416, %415 : vector<2x16xf32>
    %418 = vector.extract_strided_slice %397 {offsets = [0, 32], sizes = [2, 16], strides = [1, 1]} : vector<2x48xf32> to vector<2x16xf32>
    %419 = vector.extract_strided_slice %396 {offsets = [0, 32], sizes = [2, 16], strides = [1, 1]} : vector<2x48xf32> to vector<2x16xf32>
    %420 = arith.mulf %407, %419 : vector<2x16xf32>
    %421 = arith.addf %418, %420 : vector<2x16xf32>
    %422 = math.tanh %421 : vector<2x16xf32>
    %cst_110 = arith.constant 1.000000e+00 : f32
    %423 = vector.broadcast %cst_110 : f32 to vector<2x16xf32>
    %424 = arith.subf %423, %417 : vector<2x16xf32>
    %425 = arith.mulf %424, %422 : vector<2x16xf32>
    %426 = arith.mulf %417, %393 : vector<2x16xf32>
    %427 = arith.addf %425, %426 : vector<2x16xf32>
    %cst_111 = arith.constant dense<0.000000e+00> : vector<2x48xf32>
    %428 = tpu.matmul %427, %2, %cst_111 {dimension_numbers = #tpu.dot_dimension_numbers<[1], [0], [0], [1], [0, 0, 1, 1], [], []>} : vector<2x16xf32>, vector<16x48xf32>, vector<2x48xf32> -> vector<2x48xf32>
    %429 = vector.broadcast %7 : vector<1x48xf32> to vector<2x48xf32>
    %430 = arith.addf %428, %429 : vector<2x48xf32>
    %431 = vector.extract_strided_slice %18 {offsets = [24, 0], sizes = [2, 48], strides = [1, 1]} : vector<26x60xf32> to vector<2x48xf32>
    %432 = vector.extract_strided_slice %431 {offsets = [0, 0], sizes = [2, 16], strides = [1, 1]} : vector<2x48xf32> to vector<2x16xf32>
    %433 = vector.extract_strided_slice %430 {offsets = [0, 0], sizes = [2, 16], strides = [1, 1]} : vector<2x48xf32> to vector<2x16xf32>
    %434 = arith.addf %432, %433 : vector<2x16xf32>
    %cst_112 = arith.constant 5.000000e-01 : f32
    %435 = vector.broadcast %cst_112 : f32 to vector<2x16xf32>
    %436 = arith.mulf %435, %434 : vector<2x16xf32>
    %437 = math.tanh %436 : vector<2x16xf32>
    %cst_113 = arith.constant 1.000000e+00 : f32
    %438 = vector.broadcast %cst_113 : f32 to vector<2x16xf32>
    %439 = arith.addf %437, %438 : vector<2x16xf32>
    %cst_114 = arith.constant 5.000000e-01 : f32
    %440 = vector.broadcast %cst_114 : f32 to vector<2x16xf32>
    %441 = arith.mulf %440, %439 : vector<2x16xf32>
    %442 = vector.extract_strided_slice %431 {offsets = [0, 16], sizes = [2, 16], strides = [1, 1]} : vector<2x48xf32> to vector<2x16xf32>
    %443 = vector.extract_strided_slice %430 {offsets = [0, 16], sizes = [2, 16], strides = [1, 1]} : vector<2x48xf32> to vector<2x16xf32>
    %444 = arith.addf %442, %443 : vector<2x16xf32>
    %cst_115 = arith.constant 5.000000e-01 : f32
    %445 = vector.broadcast %cst_115 : f32 to vector<2x16xf32>
    %446 = arith.mulf %445, %444 : vector<2x16xf32>
    %447 = math.tanh %446 : vector<2x16xf32>
    %cst_116 = arith.constant 1.000000e+00 : f32
    %448 = vector.broadcast %cst_116 : f32 to vector<2x16xf32>
    %449 = arith.addf %447, %448 : vector<2x16xf32>
    %cst_117 = arith.constant 5.000000e-01 : f32
    %450 = vector.broadcast %cst_117 : f32 to vector<2x16xf32>
    %451 = arith.mulf %450, %449 : vector<2x16xf32>
    %452 = vector.extract_strided_slice %431 {offsets = [0, 32], sizes = [2, 16], strides = [1, 1]} : vector<2x48xf32> to vector<2x16xf32>
    %453 = vector.extract_strided_slice %430 {offsets = [0, 32], sizes = [2, 16], strides = [1, 1]} : vector<2x48xf32> to vector<2x16xf32>
    %454 = arith.mulf %441, %453 : vector<2x16xf32>
    %455 = arith.addf %452, %454 : vector<2x16xf32>
    %456 = math.tanh %455 : vector<2x16xf32>
    %cst_118 = arith.constant 1.000000e+00 : f32
    %457 = vector.broadcast %cst_118 : f32 to vector<2x16xf32>
    %458 = arith.subf %457, %451 : vector<2x16xf32>
    %459 = arith.mulf %458, %456 : vector<2x16xf32>
    %460 = arith.mulf %451, %427 : vector<2x16xf32>
    %461 = arith.addf %459, %460 : vector<2x16xf32>
    %cst_119 = arith.constant 0.000000e+00 : f32
    %462 = vector.broadcast %cst_119 : f32 to vector<8x4xf32>
    %cst_120 = arith.constant dense<0.000000e+00> : vector<8x12xf32>
    %463 = tpu.matmul %462, %3, %cst_120 {dimension_numbers = #tpu.dot_dimension_numbers<[1], [0], [0], [1], [0, 0, 1, 1], [], []>} : vector<8x4xf32>, vector<4x12xf32>, vector<8x12xf32> -> vector<8x12xf32>
    %464 = vector.broadcast %8 : vector<1x12xf32> to vector<8x12xf32>
    %465 = arith.addf %463, %464 : vector<8x12xf32>
    %466 = vector.extract_strided_slice %18 {offsets = [2, 48], sizes = [8, 12], strides = [1, 1]} : vector<26x60xf32> to vector<8x12xf32>
    %467 = vector.extract_strided_slice %466 {offsets = [0, 0], sizes = [8, 4], strides = [1, 1]} : vector<8x12xf32> to vector<8x4xf32>
    %468 = vector.extract_strided_slice %465 {offsets = [0, 0], sizes = [8, 4], strides = [1, 1]} : vector<8x12xf32> to vector<8x4xf32>
    %469 = arith.addf %467, %468 : vector<8x4xf32>
    %cst_121 = arith.constant 5.000000e-01 : f32
    %470 = vector.broadcast %cst_121 : f32 to vector<8x4xf32>
    %471 = arith.mulf %470, %469 : vector<8x4xf32>
    %472 = math.tanh %471 : vector<8x4xf32>
    %cst_122 = arith.constant 1.000000e+00 : f32
    %473 = vector.broadcast %cst_122 : f32 to vector<8x4xf32>
    %474 = arith.addf %472, %473 : vector<8x4xf32>
    %cst_123 = arith.constant 5.000000e-01 : f32
    %475 = vector.broadcast %cst_123 : f32 to vector<8x4xf32>
    %476 = arith.mulf %475, %474 : vector<8x4xf32>
    %477 = vector.extract_strided_slice %466 {offsets = [0, 4], sizes = [8, 4], strides = [1, 1]} : vector<8x12xf32> to vector<8x4xf32>
    %478 = vector.extract_strided_slice %465 {offsets = [0, 4], sizes = [8, 4], strides = [1, 1]} : vector<8x12xf32> to vector<8x4xf32>
    %479 = arith.addf %477, %478 : vector<8x4xf32>
    %cst_124 = arith.constant 5.000000e-01 : f32
    %480 = vector.broadcast %cst_124 : f32 to vector<8x4xf32>
    %481 = arith.mulf %480, %479 : vector<8x4xf32>
    %482 = math.tanh %481 : vector<8x4xf32>
    %cst_125 = arith.constant 1.000000e+00 : f32
    %483 = vector.broadcast %cst_125 : f32 to vector<8x4xf32>
    %484 = arith.addf %482, %483 : vector<8x4xf32>
    %cst_126 = arith.constant 5.000000e-01 : f32
    %485 = vector.broadcast %cst_126 : f32 to vector<8x4xf32>
    %486 = arith.mulf %485, %484 : vector<8x4xf32>
    %487 = vector.extract_strided_slice %466 {offsets = [0, 8], sizes = [8, 4], strides = [1, 1]} : vector<8x12xf32> to vector<8x4xf32>
    %488 = vector.extract_strided_slice %465 {offsets = [0, 8], sizes = [8, 4], strides = [1, 1]} : vector<8x12xf32> to vector<8x4xf32>
    %489 = arith.mulf %476, %488 : vector<8x4xf32>
    %490 = arith.addf %487, %489 : vector<8x4xf32>
    %491 = math.tanh %490 : vector<8x4xf32>
    %cst_127 = arith.constant 1.000000e+00 : f32
    %492 = vector.broadcast %cst_127 : f32 to vector<8x4xf32>
    %493 = arith.subf %492, %486 : vector<8x4xf32>
    %494 = arith.mulf %493, %491 : vector<8x4xf32>
    %495 = arith.mulf %486, %462 : vector<8x4xf32>
    %496 = arith.addf %494, %495 : vector<8x4xf32>
    %cst_128 = arith.constant dense<0.000000e+00> : vector<8x12xf32>
    %497 = tpu.matmul %496, %3, %cst_128 {dimension_numbers = #tpu.dot_dimension_numbers<[1], [0], [0], [1], [0, 0, 1, 1], [], []>} : vector<8x4xf32>, vector<4x12xf32>, vector<8x12xf32> -> vector<8x12xf32>
    %498 = vector.broadcast %8 : vector<1x12xf32> to vector<8x12xf32>
    %499 = arith.addf %497, %498 : vector<8x12xf32>
    %500 = vector.extract_strided_slice %18 {offsets = [10, 48], sizes = [8, 12], strides = [1, 1]} : vector<26x60xf32> to vector<8x12xf32>
    %501 = vector.extract_strided_slice %500 {offsets = [0, 0], sizes = [8, 4], strides = [1, 1]} : vector<8x12xf32> to vector<8x4xf32>
    %502 = vector.extract_strided_slice %499 {offsets = [0, 0], sizes = [8, 4], strides = [1, 1]} : vector<8x12xf32> to vector<8x4xf32>
    %503 = arith.addf %501, %502 : vector<8x4xf32>
    %cst_129 = arith.constant 5.000000e-01 : f32
    %504 = vector.broadcast %cst_129 : f32 to vector<8x4xf32>
    %505 = arith.mulf %504, %503 : vector<8x4xf32>
    %506 = math.tanh %505 : vector<8x4xf32>
    %cst_130 = arith.constant 1.000000e+00 : f32
    %507 = vector.broadcast %cst_130 : f32 to vector<8x4xf32>
    %508 = arith.addf %506, %507 : vector<8x4xf32>
    %cst_131 = arith.constant 5.000000e-01 : f32
    %509 = vector.broadcast %cst_131 : f32 to vector<8x4xf32>
    %510 = arith.mulf %509, %508 : vector<8x4xf32>
    %511 = vector.extract_strided_slice %500 {offsets = [0, 4], sizes = [8, 4], strides = [1, 1]} : vector<8x12xf32> to vector<8x4xf32>
    %512 = vector.extract_strided_slice %499 {offsets = [0, 4], sizes = [8, 4], strides = [1, 1]} : vector<8x12xf32> to vector<8x4xf32>
    %513 = arith.addf %511, %512 : vector<8x4xf32>
    %cst_132 = arith.constant 5.000000e-01 : f32
    %514 = vector.broadcast %cst_132 : f32 to vector<8x4xf32>
    %515 = arith.mulf %514, %513 : vector<8x4xf32>
    %516 = math.tanh %515 : vector<8x4xf32>
    %cst_133 = arith.constant 1.000000e+00 : f32
    %517 = vector.broadcast %cst_133 : f32 to vector<8x4xf32>
    %518 = arith.addf %516, %517 : vector<8x4xf32>
    %cst_134 = arith.constant 5.000000e-01 : f32
    %519 = vector.broadcast %cst_134 : f32 to vector<8x4xf32>
    %520 = arith.mulf %519, %518 : vector<8x4xf32>
    %521 = vector.extract_strided_slice %500 {offsets = [0, 8], sizes = [8, 4], strides = [1, 1]} : vector<8x12xf32> to vector<8x4xf32>
    %522 = vector.extract_strided_slice %499 {offsets = [0, 8], sizes = [8, 4], strides = [1, 1]} : vector<8x12xf32> to vector<8x4xf32>
    %523 = arith.mulf %510, %522 : vector<8x4xf32>
    %524 = arith.addf %521, %523 : vector<8x4xf32>
    %525 = math.tanh %524 : vector<8x4xf32>
    %cst_135 = arith.constant 1.000000e+00 : f32
    %526 = vector.broadcast %cst_135 : f32 to vector<8x4xf32>
    %527 = arith.subf %526, %520 : vector<8x4xf32>
    %528 = arith.mulf %527, %525 : vector<8x4xf32>
    %529 = arith.mulf %520, %496 : vector<8x4xf32>
    %530 = arith.addf %528, %529 : vector<8x4xf32>
    %cst_136 = arith.constant dense<0.000000e+00> : vector<8x12xf32>
    %531 = tpu.matmul %530, %3, %cst_136 {dimension_numbers = #tpu.dot_dimension_numbers<[1], [0], [0], [1], [0, 0, 1, 1], [], []>} : vector<8x4xf32>, vector<4x12xf32>, vector<8x12xf32> -> vector<8x12xf32>
    %532 = vector.broadcast %8 : vector<1x12xf32> to vector<8x12xf32>
    %533 = arith.addf %531, %532 : vector<8x12xf32>
    %534 = vector.extract_strided_slice %18 {offsets = [18, 48], sizes = [8, 12], strides = [1, 1]} : vector<26x60xf32> to vector<8x12xf32>
    %535 = vector.extract_strided_slice %534 {offsets = [0, 0], sizes = [8, 4], strides = [1, 1]} : vector<8x12xf32> to vector<8x4xf32>
    %536 = vector.extract_strided_slice %533 {offsets = [0, 0], sizes = [8, 4], strides = [1, 1]} : vector<8x12xf32> to vector<8x4xf32>
    %537 = arith.addf %535, %536 : vector<8x4xf32>
    %cst_137 = arith.constant 5.000000e-01 : f32
    %538 = vector.broadcast %cst_137 : f32 to vector<8x4xf32>
    %539 = arith.mulf %538, %537 : vector<8x4xf32>
    %540 = math.tanh %539 : vector<8x4xf32>
    %cst_138 = arith.constant 1.000000e+00 : f32
    %541 = vector.broadcast %cst_138 : f32 to vector<8x4xf32>
    %542 = arith.addf %540, %541 : vector<8x4xf32>
    %cst_139 = arith.constant 5.000000e-01 : f32
    %543 = vector.broadcast %cst_139 : f32 to vector<8x4xf32>
    %544 = arith.mulf %543, %542 : vector<8x4xf32>
    %545 = vector.extract_strided_slice %534 {offsets = [0, 4], sizes = [8, 4], strides = [1, 1]} : vector<8x12xf32> to vector<8x4xf32>
    %546 = vector.extract_strided_slice %533 {offsets = [0, 4], sizes = [8, 4], strides = [1, 1]} : vector<8x12xf32> to vector<8x4xf32>
    %547 = arith.addf %545, %546 : vector<8x4xf32>
    %cst_140 = arith.constant 5.000000e-01 : f32
    %548 = vector.broadcast %cst_140 : f32 to vector<8x4xf32>
    %549 = arith.mulf %548, %547 : vector<8x4xf32>
    %550 = math.tanh %549 : vector<8x4xf32>
    %cst_141 = arith.constant 1.000000e+00 : f32
    %551 = vector.broadcast %cst_141 : f32 to vector<8x4xf32>
    %552 = arith.addf %550, %551 : vector<8x4xf32>
    %cst_142 = arith.constant 5.000000e-01 : f32
    %553 = vector.broadcast %cst_142 : f32 to vector<8x4xf32>
    %554 = arith.mulf %553, %552 : vector<8x4xf32>
    %555 = vector.extract_strided_slice %534 {offsets = [0, 8], sizes = [8, 4], strides = [1, 1]} : vector<8x12xf32> to vector<8x4xf32>
    %556 = vector.extract_strided_slice %533 {offsets = [0, 8], sizes = [8, 4], strides = [1, 1]} : vector<8x12xf32> to vector<8x4xf32>
    %557 = arith.mulf %544, %556 : vector<8x4xf32>
    %558 = arith.addf %555, %557 : vector<8x4xf32>
    %559 = math.tanh %558 : vector<8x4xf32>
    %cst_143 = arith.constant 1.000000e+00 : f32
    %560 = vector.broadcast %cst_143 : f32 to vector<8x4xf32>
    %561 = arith.subf %560, %554 : vector<8x4xf32>
    %562 = arith.mulf %561, %559 : vector<8x4xf32>
    %563 = arith.mulf %554, %530 : vector<8x4xf32>
    %564 = arith.addf %562, %563 : vector<8x4xf32>
    %565 = vector.extract_strided_slice %4 {offsets = [0, 0], sizes = [16, 8], strides = [1, 1]} : vector<32x8xf32> to vector<16x8xf32>
    %cst_144 = arith.constant dense<0.000000e+00> : vector<2x8xf32>
    %566 = tpu.matmul %461, %565, %cst_144 {dimension_numbers = #tpu.dot_dimension_numbers<[1], [0], [0], [1], [0, 0, 1, 1], [], []>} : vector<2x16xf32>, vector<16x8xf32>, vector<2x8xf32> -> vector<2x8xf32>
    %567 = vector.broadcast %9 : vector<1x8xf32> to vector<2x8xf32>
    %568 = arith.addf %566, %567 : vector<2x8xf32>
    %569 = vector.extract_strided_slice %4 {offsets = [16, 0], sizes = [4, 8], strides = [1, 1]} : vector<32x8xf32> to vector<4x8xf32>
    %570 = vector.extract_strided_slice %564 {offsets = [0, 0], sizes = [2, 4], strides = [1, 1]} : vector<8x4xf32> to vector<2x4xf32>
    %cst_145 = arith.constant dense<0.000000e+00> : vector<2x8xf32>
    %571 = tpu.matmul %570, %569, %cst_145 {dimension_numbers = #tpu.dot_dimension_numbers<[1], [0], [0], [1], [0, 0, 1, 1], [], []>} : vector<2x4xf32>, vector<4x8xf32>, vector<2x8xf32> -> vector<2x8xf32>
    %572 = arith.addf %568, %571 : vector<2x8xf32>
    %573 = vector.extract_strided_slice %4 {offsets = [20, 0], sizes = [4, 8], strides = [1, 1]} : vector<32x8xf32> to vector<4x8xf32>
    %574 = vector.extract_strided_slice %564 {offsets = [2, 0], sizes = [2, 4], strides = [1, 1]} : vector<8x4xf32> to vector<2x4xf32>
    %cst_146 = arith.constant dense<0.000000e+00> : vector<2x8xf32>
    %575 = tpu.matmul %574, %573, %cst_146 {dimension_numbers = #tpu.dot_dimension_numbers<[1], [0], [0], [1], [0, 0, 1, 1], [], []>} : vector<2x4xf32>, vector<4x8xf32>, vector<2x8xf32> -> vector<2x8xf32>
    %576 = arith.addf %572, %575 : vector<2x8xf32>
    %577 = vector.extract_strided_slice %4 {offsets = [24, 0], sizes = [4, 8], strides = [1, 1]} : vector<32x8xf32> to vector<4x8xf32>
    %578 = vector.extract_strided_slice %564 {offsets = [4, 0], sizes = [2, 4], strides = [1, 1]} : vector<8x4xf32> to vector<2x4xf32>
    %cst_147 = arith.constant dense<0.000000e+00> : vector<2x8xf32>
    %579 = tpu.matmul %578, %577, %cst_147 {dimension_numbers = #tpu.dot_dimension_numbers<[1], [0], [0], [1], [0, 0, 1, 1], [], []>} : vector<2x4xf32>, vector<4x8xf32>, vector<2x8xf32> -> vector<2x8xf32>
    %580 = arith.addf %576, %579 : vector<2x8xf32>
    %581 = vector.extract_strided_slice %4 {offsets = [28, 0], sizes = [4, 8], strides = [1, 1]} : vector<32x8xf32> to vector<4x8xf32>
    %582 = vector.extract_strided_slice %564 {offsets = [6, 0], sizes = [2, 4], strides = [1, 1]} : vector<8x4xf32> to vector<2x4xf32>
    %cst_148 = arith.constant dense<0.000000e+00> : vector<2x8xf32>
    %583 = tpu.matmul %582, %581, %cst_148 {dimension_numbers = #tpu.dot_dimension_numbers<[1], [0], [0], [1], [0, 0, 1, 1], [], []>} : vector<2x4xf32>, vector<4x8xf32>, vector<2x8xf32> -> vector<2x8xf32>
    %584 = arith.addf %580, %583 : vector<2x8xf32>
    %c0_149 = arith.constant 0 : index
    %c0_150 = arith.constant 0 : index
    %585 = vector.load %arg1[%c0_149, %c0_150] : memref<2x32xf32, #tpu.memory_space<vmem>>, vector<2x32xf32>
    %c4 = arith.constant 4 : index
    %586 = memref.load %arg3[%c4] : memref<5xf32, #tpu.memory_space<smem>>
    %587 = vector.broadcast %586 : f32 to vector<2x8xf32>
    %588 = arith.addf %584, %587 : vector<2x8xf32>
    %589 = vector.extract_strided_slice %585 {offsets = [0, 0], sizes = [2, 8], strides = [1, 1]} : vector<2x32xf32> to vector<2x8xf32>
    %c0_151 = arith.constant 0 : index
    %590 = memref.load %arg3[%c0_151] : memref<5xf32, #tpu.memory_space<smem>>
    %591 = vector.broadcast %590 : f32 to vector<2x8xf32>
    %592 = arith.mulf %589, %591 : vector<2x8xf32>
    %593 = arith.addf %588, %592 : vector<2x8xf32>
    %594 = vector.extract_strided_slice %585 {offsets = [0, 8], sizes = [2, 8], strides = [1, 1]} : vector<2x32xf32> to vector<2x8xf32>
    %c1 = arith.constant 1 : index
    %595 = memref.load %arg3[%c1] : memref<5xf32, #tpu.memory_space<smem>>
    %596 = vector.broadcast %595 : f32 to vector<2x8xf32>
    %597 = arith.mulf %594, %596 : vector<2x8xf32>
    %598 = arith.addf %593, %597 : vector<2x8xf32>
    %599 = vector.extract_strided_slice %585 {offsets = [0, 16], sizes = [2, 8], strides = [1, 1]} : vector<2x32xf32> to vector<2x8xf32>
    %c2 = arith.constant 2 : index
    %600 = memref.load %arg3[%c2] : memref<5xf32, #tpu.memory_space<smem>>
    %601 = vector.broadcast %600 : f32 to vector<2x8xf32>
    %602 = arith.mulf %599, %601 : vector<2x8xf32>
    %603 = arith.addf %598, %602 : vector<2x8xf32>
    %604 = vector.extract_strided_slice %585 {offsets = [0, 24], sizes = [2, 8], strides = [1, 1]} : vector<2x32xf32> to vector<2x8xf32>
    %c3 = arith.constant 3 : index
    %605 = memref.load %arg3[%c3] : memref<5xf32, #tpu.memory_space<smem>>
    %606 = vector.broadcast %605 : f32 to vector<2x8xf32>
    %607 = arith.mulf %604, %606 : vector<2x8xf32>
    %608 = arith.addf %603, %607 : vector<2x8xf32>
    %cst_152 = arith.constant 5.000000e-01 : f32
    %609 = vector.broadcast %cst_152 : f32 to vector<2x8xf32>
    %610 = arith.mulf %609, %608 : vector<2x8xf32>
    %611 = math.tanh %610 : vector<2x8xf32>
    %cst_153 = arith.constant 1.000000e+00 : f32
    %612 = vector.broadcast %cst_153 : f32 to vector<2x8xf32>
    %613 = arith.addf %611, %612 : vector<2x8xf32>
    %cst_154 = arith.constant 5.000000e-01 : f32
    %614 = vector.broadcast %cst_154 : f32 to vector<2x8xf32>
    %615 = arith.mulf %614, %613 : vector<2x8xf32>
    %c0_155 = arith.constant 0 : index
    %c0_156 = arith.constant 0 : index
    %616 = vector.load %arg4[%c0_155, %c0_156] : memref<2x8xf32, #tpu.memory_space<vmem>>, vector<2x8xf32>
    tpu.vector_store %arg4[%c0_155, %c0_156], %615 {strides = array<i32>} : memref<2x8xf32, #tpu.memory_space<vmem>>, vector<2x8xf32>,
    return
  }
}

</mosaic_0001>

<llo_original>
// kernel: forward.1
$region0: #{forward.1}
  #allocation0 [shape = 'u32[]', space=smem, size = 0x4, offset = 0x4, fixed_abs, tag = 'smem constant byte address 0x4 - core index']
  #allocation1 [shape = 'u32[144,128]{1,0:T(1,128)}', space=vmem, size = 0x12000, scoped, tag = 'internal scratch']
  %s0 = inlined_call_operand.vmem [shape: f32[26,32], index: 0, kind: input, shape index: {}]
  %s1 = inlined_call_operand.vmem [shape: f32[2,32], index: 1, kind: input, shape index: {}]
  %s2 = inlined_call_operand.vmem [shape: f32[144,64], index: 2, kind: input, shape index: {}]
  %s3 = inlined_call_operand.vmem [shape: f32[5], index: 3, kind: input, shape index: {}]
  %s4 = inlined_call_operand.hbm [shape: f32[2,8], index: 4, kind: output, shape index: {}]
  %s5 = sld [smem:[#allocation0]]
  $region30: #{forward.1} parent=0
    _
  %s7 = ssub.s32 1, %s5
  %s8 = scalar_select 0, %s7, %s5
  $region1: #{forward.1} parent=0
    #allocation2 [shape = 'u8[512]{0}', space=smem, size = 0x200, scoped, tag = 'input window, operand 3, single buffered']
    #allocation3 [shape = 's32[1]{0}', space=sflag, size = 0x4, scoped, tag = 'scoped memory for forward.1']
    #allocation4 [shape = 's32[1]{0}', space=sflag, size = 0x4, scoped, tag = 'scoped memory for forward.1']
    #allocation5 [shape = 'u8[1024]{0}', space=vmem, size = 0x400, scoped, tag = 'output window, operand 0, single buffered']
    %9 = vsyncpa [#allocation4], 0
    %10 = vsyncpa [#allocation3], 0
    // Predicated region
    $region2: #{forward.1} parent=1 // pred_check
      _
    $region3: #{forward.1} parent=1 // pred_check_branch
      %12 = sbr.rel (0) target = $region5
    $region4: #{forward.1} parent=1 // pred_region
      _
    $region5: #{forward.1} parent=1 // pred_fallthru
      _
    // Predicated region
    $region6: #{forward.1} parent=1 // pred_check
      _
    $region7: #{forward.1} parent=1 // pred_check_branch
      %14 = sbr.rel (0) target = $region9
    $region8: #{forward.1} parent=1 // pred_region
      _
    $region9: #{forward.1} parent=1 // pred_fallthru
      _
    // Predicated region
    $region10: #{forward.1} parent=1 // pred_check
      _
    $region11: #{forward.1} parent=1 // pred_check_branch
      %16 = sbr.rel (0) target = $region13
    $region12: #{forward.1} parent=1 // pred_region
      _
    $region13: #{forward.1} parent=1 // pred_fallthru
      _
    // Predicated region
    $region14: #{forward.1} parent=1 // pred_check
      _
    $region15: #{forward.1} parent=1 // pred_check_branch
      %18 = sbr.rel (0) target = $region17
    $region16: #{forward.1} parent=1 // pred_region
      %s20 = ssub.s32 16, 16
      %21 = vsyncadd [#allocation4], %s20
      %s23 = sshll.u32 %s3, 4
      %s24 = int_to_ptr.vmem [resolvable:$true] %s23
      %26 = dma.vmem_to_smem %s24, 16, [#allocation2], [#allocation4]
    $region17: #{forward.1} parent=1 // pred_fallthru
      _
    // Predicated region
    $region18: #{forward.1} parent=1 // pred_check
      _
    $region19: #{forward.1} parent=1 // pred_check_branch
      %28 = sbr.rel (0) target = $region21
    $region20: #{forward.1} parent=1 // pred_region
      %29 = dma.done [#allocation4], 16
    $region21: #{forward.1} parent=1 // pred_fallthru
      _
    %30 = sfence
    %v31 = vld [vmem:[%s2] sm:$0xff]
    %v32 = vld [vmem:[%s2 + $0x8] sm:$0xff]
    %v33 = vld [vmem:[%s2 + $0x10] sm:$0xff]
    %v34 = vld [vmem:[%s2 + $0x18] sm:$0xff]
    %v35 = vld [vmem:[%s2 + $0x20] sm:$0xff]
    %v36 = vld [vmem:[%s2 + $0x28] sm:$0xff]
    %v37 = vld [vmem:[%s2 + $0x30] sm:$0xff]
    %v38 = vld [vmem:[%s2 + $0x38] sm:$0xff]
    %v39 = vld [vmem:[%s2 + $0x40] sm:$0xf]
    %v40 = vld [vmem:[%s2 + $0x48] sm:$0xff]
    %v41 = vld [vmem:[%s2 + $0x50] sm:$0xff]
    %v42 = vld [vmem:[%s2 + $0x58] sm:$0xff]
    %v43 = vld [vmem:[%s2 + $0x60] sm:$0xff]
    %v44 = vld [vmem:[%s2 + $0x68] sm:$0x1]
    %v45 = vld [vmem:[%s2 + $0x70] sm:$0x1]
    %v46 = vld [vmem:[%s2 + $0x78] sm:$0x1]
    %v47 = vld [vmem:[%s2 + $0x80] sm:$0x1]
    %v48 = vld [vmem:[%s2 + $0x88] sm:$0x1]
    %v49 = vld [vmem:[%s0] sm:$0xff]
    %v50 = vld [vmem:[%s0 + $0x8] sm:$0xff]
    %v51 = vld [vmem:[%s0 + $0x10] sm:$0xff]
    %v52 = vld [vmem:[%s0 + $0x18] sm:$0x3]
    %v53 = vlaneseq
    %v54 = vshrl.u32 %v53, 7
    %v55 = vsub.s32 0, %v54
    %v56 = vrot.slane %v44, %v55
    %vm57 = vcmask 261120
    %v59 = vsel %vm57, %v49, 0
    %v62 = vsel %vm57, %v50, 0
    %v65 = vsel %vm57, %v51, 0
    %v68 = vsel %vm57, %v52, 0
    %70 = vmatprep.subr.mxu0 0.0
    %71 = vmatpush1.msra.mxu0 0.0
    %72 = vmatprep.subr.mxu0 0.0
    %73 = vmatpush1.msra.mxu0 0.0
    %74 = vmatprep.subr.mxu0 0.0
    %75 = vmatpush1.msra.mxu0 0.0
    %76 = vmatprep.subr.mxu0 0.0
    %77 = vmatpush1.msra.mxu0 0.0
    %78 = vmatprep.subr.mxu0 0.0
    %79 = vmatpush1.msra.mxu0 0.0
    %80 = vmatprep.subr.mxu0 0.0
    %81 = vmatpush1.msra.mxu0 0.0
    %82 = vmatprep.subr.mxu0 0.0
    %83 = vmatpush1.msra.mxu0 0.0
    %84 = vmatprep.subr.mxu0 0.0
    %85 = vmatpush1.msra.mxu0 0.0
    %86 = vmatprep.subr.mxu0 0.0
    %87 = vmatpush1.msra.mxu0 0.0
    %88 = vmatprep.subr.mxu0 0.0
    %89 = vmatpush1.msra.mxu0 0.0
    %90 = vmatprep.subr.mxu0 0.0
    %91 = vmatpush1.msra.mxu0 0.0
    %92 = vmatprep.subr.mxu0 0.0
    %93 = vmatpush1.msra.mxu0 0.0
    %94 = vmatprep.subr.mxu0 0.0
    %95 = vmatpush1.msra.mxu0 %v34
    %96 = vmatprep.subr.mxu0 0.0
    %97 = vmatpush1.msra.mxu0 %v33
    %98 = vmatprep.subr.mxu0 0.0
    %99 = vmatpush1.msra.mxu0 %v32
    %100 = vmatprep.subr.mxu0 0.0
    %101 = vmatpush1.msra.mxu0 %v31
    %102 = vmatprep.subr.mxu0 0.0
    %103 = vmatpush2.msra.mxu0 0.0
    %104 = vmatprep.subr.mxu0 0.0
    %105 = vmatpush2.msra.mxu0 0.0
    %106 = vmatprep.subr.mxu0 0.0
    %107 = vmatpush2.msra.mxu0 0.0
    %108 = vmatprep.subr.mxu0 0.0
    %109 = vmatpush2.msra.mxu0 0.0
    %110 = vmatprep.subr.mxu0 0.0
    %111 = vmatpush2.msra.mxu0 0.0
    %112 = vmatprep.subr.mxu0 0.0
    %113 = vmatpush2.msra.mxu0 0.0
    %114 = vmatprep.subr.mxu0 0.0
    %115 = vmatpush2.msra.mxu0 0.0
    %116 = vmatprep.subr.mxu0 0.0
    %117 = vmatpush2.msra.mxu0 0.0
    %118 = vmatprep.subr.mxu0 0.0
    %119 = vmatpush2.msra.mxu0 0.0
    %120 = vmatprep.subr.mxu0 0.0
    %121 = vmatpush2.msra.mxu0 0.0
    %122 = vmatprep.subr.mxu0 0.0
    %123 = vmatpush2.msra.mxu0 0.0
    %124 = vmatprep.subr.mxu0 0.0
    %125 = vmatpush2.msra.mxu0 0.0
    %126 = vmatprep.subr.mxu0 0.0
    %127 = vmatpush2.msra.mxu0 0.0
    %128 = vmatprep.subr.mxu0 0.0
    %129 = vmatpush2.msra.mxu0 0.0
    %130 = vmatprep.subr.mxu0 0.0
    %131 = vmatpush2.msra.mxu0 0.0
    %132 = vmatprep.subr.mxu0 0.0
    %133 = vmatpush2.msra.mxu0 0.0
    %134 = vmatprep.mubr.f32.mxu0 0.0
    %135 = vmatmul.mubr.f32.gmra.mxu0 %v59
    %v136 = vpop.f32.mrf.mxu0
    %v137 = vadd.f32 %v56, %v136
    %v138 = vpop.f32.mrf.mxu0
    %139 = vmatprep.mubr.f32.mxu0 0.0
    %140 = vmatmul.mubr.f32.gmra.mxu0 %v62
    %v141 = vpop.f32.mrf.mxu0
    %v142 = vadd.f32 %v56, %v141
    %v143 = vpop.f32.mrf.mxu0
    %144 = vmatprep.mubr.f32.mxu0 0.0
    %145 = vmatmul.mubr.f32.gmra.mxu0 %v65
    %v146 = vpop.f32.mrf.mxu0
    %v147 = vadd.f32 %v56, %v146
    %v148 = vpop.f32.mrf.mxu0
    %149 = vmatprep.mubr.f32.mxu0 0.0
    %150 = vmatmul.mubr.f32.gmra.mxu0 %v68
    %v151 = vpop.f32.mrf.mxu0
    %v152 = vadd.f32 %v56, %v151
    %v153 = vpop.f32.mrf.mxu0
    %154 = vdwg.mxu0
    %v155 = vmax.f32 %v137, 0.0
    %v156 = vmax.f32 %v142, 0.0
    %v157 = vmax.f32 %v147, 0.0
    %v158 = vmax.f32 %v152, 0.0
    %v159 = vlaneseq
    %v160 = vshrl.u32 %v159, 7
    %v161 = vsub.s32 0, %v160
    %v162 = vrot.slane %v45, %v161
    %vm163 = vcmask 130048
    %v165 = vsel %vm163, %v155, 0
    %v168 = vsel %vm163, %v156, 0
    %v171 = vsel %vm163, %v157, 0
    %v174 = vsel %vm163, %v158, 0
    %176 = vmatprep.subr.mxu0 0.0
    %177 = vmatpush1.msra.mxu0 0.0
    %178 = vmatprep.subr.mxu0 0.0
    %179 = vmatpush1.msra.mxu0 0.0
    %180 = vmatprep.subr.mxu0 0.0
    %181 = vmatpush1.msra.mxu0 0.0
    %182 = vmatprep.subr.mxu0 0.0
    %183 = vmatpush1.msra.mxu0 0.0
    %184 = vmatprep.subr.mxu0 0.0
    %185 = vmatpush1.msra.mxu0 0.0
    %186 = vmatprep.subr.mxu0 0.0
    %187 = vmatpush1.msra.mxu0 0.0
    %188 = vmatprep.subr.mxu0 0.0
    %189 = vmatpush1.msra.mxu0 0.0
    %190 = vmatprep.subr.mxu0 0.0
    %191 = vmatpush1.msra.mxu0 0.0
    %192 = vmatprep.subr.mxu0 0.0
    %193 = vmatpush1.msra.mxu0 0.0
    %194 = vmatprep.subr.mxu0 0.0
    %195 = vmatpush1.msra.mxu0 0.0
    %196 = vmatprep.subr.mxu0 0.0
    %197 = vmatpush1.msra.mxu0 0.0
    %198 = vmatprep.subr.mxu0 0.0
    %199 = vmatpush1.msra.mxu0 0.0
    %200 = vmatprep.subr.mxu0 0.0
    %201 = vmatpush1.msra.mxu0 0.0
    %202 = vmatprep.subr.mxu0 0.0
    %203 = vmatpush1.msra.mxu0 0.0
    %204 = vmatprep.subr.mxu0 0.0
    %205 = vmatpush1.msra.mxu0 %v36
    %206 = vmatprep.subr.mxu0 0.0
    %207 = vmatpush1.msra.mxu0 %v35
    %208 = vmatprep.subr.mxu0 0.0
    %209 = vmatpush2.msra.mxu0 0.0
    %210 = vmatprep.subr.mxu0 0.0
    %211 = vmatpush2.msra.mxu0 0.0
    %212 = vmatprep.subr.mxu0 0.0
    %213 = vmatpush2.msra.mxu0 0.0
    %214 = vmatprep.subr.mxu0 0.0
    %215 = vmatpush2.msra.mxu0 0.0
    %216 = vmatprep.subr.mxu0 0.0
    %217 = vmatpush2.msra.mxu0 0.0
    %218 = vmatprep.subr.mxu0 0.0
    %219 = vmatpush2.msra.mxu0 0.0
    %220 = vmatprep.subr.mxu0 0.0
    %221 = vmatpush2.msra.mxu0 0.0
    %222 = vmatprep.subr.mxu0 0.0
    %223 = vmatpush2.msra.mxu0 0.0
    %224 = vmatprep.subr.mxu0 0.0
    %225 = vmatpush2.msra.mxu0 0.0
    %226 = vmatprep.subr.mxu0 0.0
    %227 = vmatpush2.msra.mxu0 0.0
    %228 = vmatprep.subr.mxu0 0.0
    %229 = vmatpush2.msra.mxu0 0.0
    %230 = vmatprep.subr.mxu0 0.0
    %231 = vmatpush2.msra.mxu0 0.0
    %232 = vmatprep.subr.mxu0 0.0
    %233 = vmatpush2.msra.mxu0 0.0
    %234 = vmatprep.subr.mxu0 0.0
    %235 = vmatpush2.msra.mxu0 0.0
    %236 = vmatprep.subr.mxu0 0.0
    %237 = vmatpush2.msra.mxu0 0.0
    %238 = vmatprep.subr.mxu0 0.0
    %239 = vmatpush2.msra.mxu0 0.0
    %240 = vmatprep.mubr.f32.mxu0 0.0
    %241 = vmatmul.mubr.f32.gmra.mxu0 %v165
    %v242 = vpop.f32.mrf.mxu0
    %v243 = vadd.f32 %v162, %v242
    %v244 = vpop.f32.mrf.mxu0
    %245 = vmatprep.mubr.f32.mxu0 0.0
    %246 = vmatmul.mubr.f32.gmra.mxu0 %v168
    %v247 = vpop.f32.mrf.mxu0
    %v248 = vadd.f32 %v162, %v247
    %v249 = vpop.f32.mrf.mxu0
    %250 = vmatprep.mubr.f32.mxu0 0.0
    %251 = vmatmul.mubr.f32.gmra.mxu0 %v171
    %v252 = vpop.f32.mrf.mxu0
    %v253 = vadd.f32 %v162, %v252
    %v254 = vpop.f32.mrf.mxu0
    %255 = vmatprep.mubr.f32.mxu0 0.0
    %256 = vmatmul.mubr.f32.gmra.mxu0 %v174
    %v257 = vpop.f32.mrf.mxu0
    %v258 = vadd.f32 %v162, %v257
    %v259 = vpop.f32.mrf.mxu0
    %260 = vdwg.mxu0
    %v261 = vlaneseq
    %v262 = vshrl.u32 %v261, 7
    %v263 = vsub.s32 0, %v262
    %v264 = vrot.slane %v46, %v263
    %v266 = vsel %vm163, 0.0, 0
    %268 = vmatprep.subr.mxu0 0.0
    %269 = vmatpush1.msra.mxu0 0.0
    %270 = vmatprep.subr.mxu0 0.0
    %271 = vmatpush1.msra.mxu0 0.0
    %272 = vmatprep.subr.mxu0 0.0
    %273 = vmatpush1.msra.mxu0 0.0
    %274 = vmatprep.subr.mxu0 0.0
    %275 = vmatpush1.msra.mxu0 0.0
    %276 = vmatprep.subr.mxu0 0.0
    %277 = vmatpush1.msra.mxu0 0.0
    %278 = vmatprep.subr.mxu0 0.0
    %279 = vmatpush1.msra.mxu0 0.0
    %280 = vmatprep.subr.mxu0 0.0
    %281 = vmatpush1.msra.mxu0 0.0
    %282 = vmatprep.subr.mxu0 0.0
    %283 = vmatpush1.msra.mxu0 0.0
    %284 = vmatprep.subr.mxu0 0.0
    %285 = vmatpush1.msra.mxu0 0.0
    %286 = vmatprep.subr.mxu0 0.0
    %287 = vmatpush1.msra.mxu0 0.0
    %288 = vmatprep.subr.mxu0 0.0
    %289 = vmatpush1.msra.mxu0 0.0
    %290 = vmatprep.subr.mxu0 0.0
    %291 = vmatpush1.msra.mxu0 0.0
    %292 = vmatprep.subr.mxu0 0.0
    %293 = vmatpush1.msra.mxu0 0.0
    %294 = vmatprep.subr.mxu0 0.0
    %295 = vmatpush1.msra.mxu0 0.0
    %296 = vmatprep.subr.mxu0 0.0
    %297 = vmatpush1.msra.mxu0 %v38
    %298 = vmatprep.subr.mxu0 0.0
    %299 = vmatpush1.msra.mxu0 %v37
    %300 = vmatprep.subr.mxu0 0.0
    %301 = vmatpush2.msra.mxu0 0.0
    %302 = vmatprep.subr.mxu0 0.0
    %303 = vmatpush2.msra.mxu0 0.0
    %304 = vmatprep.subr.mxu0 0.0
    %305 = vmatpush2.msra.mxu0 0.0
    %306 = vmatprep.subr.mxu0 0.0
    %307 = vmatpush2.msra.mxu0 0.0
    %308 = vmatprep.subr.mxu0 0.0
    %309 = vmatpush2.msra.mxu0 0.0
    %310 = vmatprep.subr.mxu0 0.0
    %311 = vmatpush2.msra.mxu0 0.0
    %312 = vmatprep.subr.mxu0 0.0
    %313 = vmatpush2.msra.mxu0 0.0
    %314 = vmatprep.subr.mxu0 0.0
    %315 = vmatpush2.msra.mxu0 0.0
    %316 = vmatprep.subr.mxu0 0.0
    %317 = vmatpush2.msra.mxu0 0.0
    %318 = vmatprep.subr.mxu0 0.0
    %319 = vmatpush2.msra.mxu0 0.0
    %320 = vmatprep.subr.mxu0 0.0
    %321 = vmatpush2.msra.mxu0 0.0
    %322 = vmatprep.subr.mxu0 0.0
    %323 = vmatpush2.msra.mxu0 0.0
    %324 = vmatprep.subr.mxu0 0.0
    %325 = vmatpush2.msra.mxu0 0.0
    %326 = vmatprep.subr.mxu0 0.0
    %327 = vmatpush2.msra.mxu0 0.0
    %328 = vmatprep.subr.mxu0 0.0
    %329 = vmatpush2.msra.mxu0 0.0
    %330 = vmatprep.subr.mxu0 0.0
    %331 = vmatpush2.msra.mxu0 0.0
    %332 = vmatprep.mubr.f32.mxu0 0.0
    %333 = vmatmul.mubr.f32.gmra.mxu0 %v266
    %v334 = vpop.f32.mrf.mxu0
    %v335 = vadd.f32 %v264, %v334
    %v336 = vpop.f32.mrf.mxu0
    %337 = vdwg.mxu0
    %v338 = vadd.f32 %v243, %v335
    %v339 = vmul.f32 %v338, 0.5
    %v340 = vtanh.pop %v339
    %v341 = vadd.f32 %v340, 1.0
    %v342 = vmul.f32 %v341, 0.5
    %344 = vrot.lane.b32.xlu0 %v335, 96
    %v345 = vpop.permute.xlu0 %344
    %v347 = vmul.f32 %v342, %v345
    %349 = vrot.lane.b32.xlu0 %v347, 32
    %v350 = vpop.permute.xlu0 %349
    %v352 = vadd.f32 %v243, %v350
    %v353 = vtanh.pop %v352
    %v354 = vsub.f32 1.0, %v342
    %356 = vrot.lane.b32.xlu0 %v353, 112
    %v357 = vpop.permute.xlu0 %356
    %v359 = vmul.f32 %v354, %v357
    %v360 = vmul.f32 %v342, 0.0
    %v361 = vadd.f32 %v359, %v360
    %363 = vrot.lane.b32.xlu0 %v361, 112
    %v364 = vpop.permute.xlu0 %363
    %v365 = vsel %vm163, %v364, 0
    %367 = vmatprep.subr.mxu0 0.0
    %368 = vmatpush1.msra.mxu0 0.0
    %369 = vmatprep.subr.mxu0 0.0
    %370 = vmatpush1.msra.mxu0 0.0
    %371 = vmatprep.subr.mxu0 0.0
    %372 = vmatpush1.msra.mxu0 0.0
    %373 = vmatprep.subr.mxu0 0.0
    %374 = vmatpush1.msra.mxu0 0.0
    %375 = vmatprep.subr.mxu0 0.0
    %376 = vmatpush1.msra.mxu0 0.0
    %377 = vmatprep.subr.mxu0 0.0
    %378 = vmatpush1.msra.mxu0 0.0
    %379 = vmatprep.subr.mxu0 0.0
    %380 = vmatpush1.msra.mxu0 0.0
    %381 = vmatprep.subr.mxu0 0.0
    %382 = vmatpush1.msra.mxu0 0.0
    %383 = vmatprep.subr.mxu0 0.0
    %384 = vmatpush1.msra.mxu0 0.0
    %385 = vmatprep.subr.mxu0 0.0
    %386 = vmatpush1.msra.mxu0 0.0
    %387 = vmatprep.subr.mxu0 0.0
    %388 = vmatpush1.msra.mxu0 0.0
    %389 = vmatprep.subr.mxu0 0.0
    %390 = vmatpush1.msra.mxu0 0.0
    %391 = vmatprep.subr.mxu0 0.0
    %392 = vmatpush1.msra.mxu0 0.0
    %393 = vmatprep.subr.mxu0 0.0
    %394 = vmatpush1.msra.mxu0 0.0
    %395 = vmatprep.subr.mxu0 0.0
    %396 = vmatpush1.msra.mxu0 %v38
    %397 = vmatprep.subr.mxu0 0.0
    %398 = vmatpush1.msra.mxu0 %v37
    %399 = vmatprep.subr.mxu0 0.0
    %400 = vmatpush2.msra.mxu0 0.0
    %401 = vmatprep.subr.mxu0 0.0
    %402 = vmatpush2.msra.mxu0 0.0
    %403 = vmatprep.subr.mxu0 0.0
    %404 = vmatpush2.msra.mxu0 0.0
    %405 = vmatprep.subr.mxu0 0.0
    %406 = vmatpush2.msra.mxu0 0.0
    %407 = vmatprep.subr.mxu0 0.0
    %408 = vmatpush2.msra.mxu0 0.0
    %409 = vmatprep.subr.mxu0 0.0
    %410 = vmatpush2.msra.mxu0 0.0
    %411 = vmatprep.subr.mxu0 0.0
    %412 = vmatpush2.msra.mxu0 0.0
    %413 = vmatprep.subr.mxu0 0.0
    %414 = vmatpush2.msra.mxu0 0.0
    %415 = vmatprep.subr.mxu0 0.0
    %416 = vmatpush2.msra.mxu0 0.0
    %417 = vmatprep.subr.mxu0 0.0
    %418 = vmatpush2.msra.mxu0 0.0
    %419 = vmatprep.subr.mxu0 0.0
    %420 = vmatpush2.msra.mxu0 0.0
    %421 = vmatprep.subr.mxu0 0.0
    %422 = vmatpush2.msra.mxu0 0.0
    %423 = vmatprep.subr.mxu0 0.0
    %424 = vmatpush2.msra.mxu0 0.0
    %425 = vmatprep.subr.mxu0 0.0
    %426 = vmatpush2.msra.mxu0 0.0
    %427 = vmatprep.subr.mxu0 0.0
    %428 = vmatpush2.msra.mxu0 0.0
    %429 = vmatprep.subr.mxu0 0.0
    %430 = vmatpush2.msra.mxu0 0.0
    %431 = vmatprep.mubr.f32.mxu0 0.0
    %432 = vmatmul.mubr.f32.gmra.mxu0 %v365
    %v433 = vpop.f32.mrf.mxu0
    %v434 = vadd.f32 %v264, %v433
    %v435 = vpop.f32.mrf.mxu0
    %436 = vdwg.mxu0
    %v438 = vrot.slane %v434, 6
    %v440 = vadd.f32 %v243, %v438
    %v441 = vmul.f32 %v440, 0.5
    %v442 = vtanh.pop %v441
    %v443 = vadd.f32 %v442, 1.0
    %v444 = vmul.f32 %v443, 0.5
    %445 = vrot.lane.b32.xlu0 %v438, 96
    %v446 = vpop.permute.xlu0 %445
    %v448 = vmul.f32 %v444, %v446
    %450 = vrot.lane.b32.xlu0 %v448, 32
    %v451 = vpop.permute.xlu0 %450
    %v453 = vadd.f32 %v243, %v451
    %v454 = vtanh.pop %v453
    %v455 = vsub.f32 1.0, %v444
    %457 = vrot.lane.b32.xlu0 %v454, 112
    %v458 = vpop.permute.xlu0 %457
    %v460 = vmul.f32 %v455, %v458
    %v461 = vrot.slane %v361, 6
    %v463 = vmul.f32 %v444, %v461
    %v464 = vadd.f32 %v460, %v463
    %v466 = vrot.slane %v464, 2
    %467 = vrot.lane.b32.xlu0 %v466, 112
    %v468 = vpop.permute.xlu0 %467
    %v469 = vsel %vm163, %v468, 0
    %471 = vmatprep.subr.mxu0 0.0
    %472 = vmatpush1.msra.mxu0 0.0
    %473 = vmatprep.subr.mxu0 0.0
    %474 = vmatpush1.msra.mxu0 0.0
    %475 = vmatprep.subr.mxu0 0.0
    %476 = vmatpush1.msra.mxu0 0.0
    %477 = vmatprep.subr.mxu0 0.0
    %478 = vmatpush1.msra.mxu0 0.0
    %479 = vmatprep.subr.mxu0 0.0
    %480 = vmatpush1.msra.mxu0 0.0
    %481 = vmatprep.subr.mxu0 0.0
    %482 = vmatpush1.msra.mxu0 0.0
    %483 = vmatprep.subr.mxu0 0.0
    %484 = vmatpush1.msra.mxu0 0.0
    %485 = vmatprep.subr.mxu0 0.0
    %486 = vmatpush1.msra.mxu0 0.0
    %487 = vmatprep.subr.mxu0 0.0
    %488 = vmatpush1.msra.mxu0 0.0
    %489 = vmatprep.subr.mxu0 0.0
    %490 = vmatpush1.msra.mxu0 0.0
    %491 = vmatprep.subr.mxu0 0.0
    %492 = vmatpush1.msra.mxu0 0.0
    %493 = vmatprep.subr.mxu0 0.0
    %494 = vmatpush1.msra.mxu0 0.0
    %495 = vmatprep.subr.mxu0 0.0
    %496 = vmatpush1.msra.mxu0 0.0
    %497 = vmatprep.subr.mxu0 0.0
    %498 = vmatpush1.msra.mxu0 0.0
    %499 = vmatprep.subr.mxu0 0.0
    %500 = vmatpush1.msra.mxu0 %v38
    %501 = vmatprep.subr.mxu0 0.0
    %502 = vmatpush1.msra.mxu0 %v37
    %503 = vmatprep.subr.mxu0 0.0
    %504 = vmatpush2.msra.mxu0 0.0
    %505 = vmatprep.subr.mxu0 0.0
    %506 = vmatpush2.msra.mxu0 0.0
    %507 = vmatprep.subr.mxu0 0.0
    %508 = vmatpush2.msra.mxu0 0.0
    %509 = vmatprep.subr.mxu0 0.0
    %510 = vmatpush2.msra.mxu0 0.0
    %511 = vmatprep.subr.mxu0 0.0
    %512 = vmatpush2.msra.mxu0 0.0
    %513 = vmatprep.subr.mxu0 0.0
    %514 = vmatpush2.msra.mxu0 0.0
    %515 = vmatprep.subr.mxu0 0.0
    %516 = vmatpush2.msra.mxu0 0.0
    %517 = vmatprep.subr.mxu0 0.0
    %518 = vmatpush2.msra.mxu0 0.0
    %519 = vmatprep.subr.mxu0 0.0
    %520 = vmatpush2.msra.mxu0 0.0
    %521 = vmatprep.subr.mxu0 0.0
    %522 = vmatpush2.msra.mxu0 0.0
    %523 = vmatprep.subr.mxu0 0.0
    %524 = vmatpush2.msra.mxu0 0.0
    %525 = vmatprep.subr.mxu0 0.0
    %526 = vmatpush2.msra.mxu0 0.0
    %527 = vmatprep.subr.mxu0 0.0
    %528 = vmatpush2.msra.mxu0 0.0
    %529 = vmatprep.subr.mxu0 0.0
    %530 = vmatpush2.msra.mxu0 0.0
    %531 = vmatprep.subr.mxu0 0.0
    %532 = vmatpush2.msra.mxu0 0.0
    %533 = vmatprep.subr.mxu0 0.0
    %534 = vmatpush2.msra.mxu0 0.0
    %535 = vmatprep.mubr.f32.mxu0 0.0
    %536 = vmatmul.mubr.f32.gmra.mxu0 %v469
    %v537 = vpop.f32.mrf.mxu0
    %v538 = vadd.f32 %v264, %v537
    %v539 = vpop.f32.mrf.mxu0
    %540 = vdwg.mxu0
    %v542 = vrot.slane %v538, 4
    %v544 = vadd.f32 %v243, %v542
    %v545 = vmul.f32 %v544, 0.5
    %v546 = vtanh.pop %v545
    %v547 = vadd.f32 %v546, 1.0
    %v548 = vmul.f32 %v547, 0.5
    %549 = vrot.lane.b32.xlu0 %v542, 96
    %v550 = vpop.permute.xlu0 %549
    %v552 = vmul.f32 %v548, %v550
    %554 = vrot.lane.b32.xlu0 %v552, 32
    %v555 = vpop.permute.xlu0 %554
    %v557 = vadd.f32 %v243, %v555
    %v558 = vtanh.pop %v557
    %v559 = vsub.f32 1.0, %v548
    %561 = vrot.lane.b32.xlu0 %v558, 112
    %v562 = vpop.permute.xlu0 %561
    %v564 = vmul.f32 %v559, %v562
    %v565 = vrot.slane %v464, 6
    %v567 = vmul.f32 %v548, %v565
    %v568 = vadd.f32 %v564, %v567
    %v570 = vrot.slane %v568, 4
    %571 = vrot.lane.b32.xlu0 %v570, 112
    %v572 = vpop.permute.xlu0 %571
    %v573 = vsel %vm163, %v572, 0
    %575 = vmatprep.subr.mxu0 0.0
    %576 = vmatpush1.msra.mxu0 0.0
    %577 = vmatprep.subr.mxu0 0.0
    %578 = vmatpush1.msra.mxu0 0.0
    %579 = vmatprep.subr.mxu0 0.0
    %580 = vmatpush1.msra.mxu0 0.0
    %581 = vmatprep.subr.mxu0 0.0
    %582 = vmatpush1.msra.mxu0 0.0
    %583 = vmatprep.subr.mxu0 0.0
    %584 = vmatpush1.msra.mxu0 0.0
    %585 = vmatprep.subr.mxu0 0.0
    %586 = vmatpush1.msra.mxu0 0.0
    %587 = vmatprep.subr.mxu0 0.0
    %588 = vmatpush1.msra.mxu0 0.0
    %589 = vmatprep.subr.mxu0 0.0
    %590 = vmatpush1.msra.mxu0 0.0
    %591 = vmatprep.subr.mxu0 0.0
    %592 = vmatpush1.msra.mxu0 0.0
    %593 = vmatprep.subr.mxu0 0.0
    %594 = vmatpush1.msra.mxu0 0.0
    %595 = vmatprep.subr.mxu0 0.0
    %596 = vmatpush1.msra.mxu0 0.0
    %597 = vmatprep.subr.mxu0 0.0
    %598 = vmatpush1.msra.mxu0 0.0
    %599 = vmatprep.subr.mxu0 0.0
    %600 = vmatpush1.msra.mxu0 0.0
    %601 = vmatprep.subr.mxu0 0.0
    %602 = vmatpush1.msra.mxu0 0.0
    %603 = vmatprep.subr.mxu0 0.0
    %604 = vmatpush1.msra.mxu0 %v38
    %605 = vmatprep.subr.mxu0 0.0
    %606 = vmatpush1.msra.mxu0 %v37
    %607 = vmatprep.subr.mxu0 0.0
    %608 = vmatpush2.msra.mxu0 0.0
    %609 = vmatprep.subr.mxu0 0.0
    %610 = vmatpush2.msra.mxu0 0.0
    %611 = vmatprep.subr.mxu0 0.0
    %612 = vmatpush2.msra.mxu0 0.0
    %613 = vmatprep.subr.mxu0 0.0
    %614 = vmatpush2.msra.mxu0 0.0
    %615 = vmatprep.subr.mxu0 0.0
    %616 = vmatpush2.msra.mxu0 0.0
    %617 = vmatprep.subr.mxu0 0.0
    %618 = vmatpush2.msra.mxu0 0.0
    %619 = vmatprep.subr.mxu0 0.0
    %620 = vmatpush2.msra.mxu0 0.0
    %621 = vmatprep.subr.mxu0 0.0
    %622 = vmatpush2.msra.mxu0 0.0
    %623 = vmatprep.subr.mxu0 0.0
    %624 = vmatpush2.msra.mxu0 0.0
    %625 = vmatprep.subr.mxu0 0.0
    %626 = vmatpush2.msra.mxu0 0.0
    %627 = vmatprep.subr.mxu0 0.0
    %628 = vmatpush2.msra.mxu0 0.0
    %629 = vmatprep.subr.mxu0 0.0
    %630 = vmatpush2.msra.mxu0 0.0
    %631 = vmatprep.subr.mxu0 0.0
    %632 = vmatpush2.msra.mxu0 0.0
    %633 = vmatprep.subr.mxu0 0.0
    %634 = vmatpush2.msra.mxu0 0.0
    %635 = vmatprep.subr.mxu0 0.0
    %636 = vmatpush2.msra.mxu0 0.0
    %637 = vmatprep.subr.mxu0 0.0
    %638 = vmatpush2.msra.mxu0 0.0
    %639 = vmatprep.mubr.f32.mxu0 0.0
    %640 = vmatmul.mubr.f32.gmra.mxu0 %v573
    %v641 = vpop.f32.mrf.mxu0
    %v642 = vadd.f32 %v264, %v641
    %v643 = vpop.f32.mrf.mxu0
    %644 = vdwg.mxu0
    %v646 = vrot.slane %v642, 2
    %v648 = vadd.f32 %v243, %v646
    %v649 = vmul.f32 %v648, 0.5
    %v650 = vtanh.pop %v649
    %v651 = vadd.f32 %v650, 1.0
    %v652 = vmul.f32 %v651, 0.5
    %653 = vrot.lane.b32.xlu0 %v646, 96
    %v654 = vpop.permute.xlu0 %653
    %v656 = vmul.f32 %v652, %v654
    %658 = vrot.lane.b32.xlu0 %v656, 32
    %v659 = vpop.permute.xlu0 %658
    %v661 = vadd.f32 %v243, %v659
    %v662 = vtanh.pop %v661
    %v663 = vsub.f32 1.0, %v652
    %665 = vrot.lane.b32.xlu0 %v662, 112
    %v666 = vpop.permute.xlu0 %665
    %v668 = vmul.f32 %v663, %v666
    %v669 = vrot.slane %v568, 6
    %v671 = vmul.f32 %v652, %v669
    %v672 = vadd.f32 %v668, %v671
    %v674 = vrot.slane %v672, 6
    %675 = vrot.lane.b32.xlu0 %v674, 112
    %v676 = vpop.permute.xlu0 %675
    %v677 = vsel %vm163, %v676, 0
    %679 = vmatprep.subr.mxu0 0.0
    %680 = vmatpush1.msra.mxu0 0.0
    %681 = vmatprep.subr.mxu0 0.0
    %682 = vmatpush1.msra.mxu0 0.0
    %683 = vmatprep.subr.mxu0 0.0
    %684 = vmatpush1.msra.mxu0 0.0
    %685 = vmatprep.subr.mxu0 0.0
    %686 = vmatpush1.msra.mxu0 0.0
    %687 = vmatprep.subr.mxu0 0.0
    %688 = vmatpush1.msra.mxu0 0.0
    %689 = vmatprep.subr.mxu0 0.0
    %690 = vmatpush1.msra.mxu0 0.0
    %691 = vmatprep.subr.mxu0 0.0
    %692 = vmatpush1.msra.mxu0 0.0
    %693 = vmatprep.subr.mxu0 0.0
    %694 = vmatpush1.msra.mxu0 0.0
    %695 = vmatprep.subr.mxu0 0.0
    %696 = vmatpush1.msra.mxu0 0.0
    %697 = vmatprep.subr.mxu0 0.0
    %698 = vmatpush1.msra.mxu0 0.0
    %699 = vmatprep.subr.mxu0 0.0
    %700 = vmatpush1.msra.mxu0 0.0
    %701 = vmatprep.subr.mxu0 0.0
    %702 = vmatpush1.msra.mxu0 0.0
    %703 = vmatprep.subr.mxu0 0.0
    %704 = vmatpush1.msra.mxu0 0.0
    %705 = vmatprep.subr.mxu0 0.0
    %706 = vmatpush1.msra.mxu0 0.0
    %707 = vmatprep.subr.mxu0 0.0
    %708 = vmatpush1.msra.mxu0 %v38
    %709 = vmatprep.subr.mxu0 0.0
    %710 = vmatpush1.msra.mxu0 %v37
    %711 = vmatprep.subr.mxu0 0.0
    %712 = vmatpush2.msra.mxu0 0.0
    %713 = vmatprep.subr.mxu0 0.0
    %714 = vmatpush2.msra.mxu0 0.0
    %715 = vmatprep.subr.mxu0 0.0
    %716 = vmatpush2.msra.mxu0 0.0
    %717 = vmatprep.subr.mxu0 0.0
    %718 = vmatpush2.msra.mxu0 0.0
    %719 = vmatprep.subr.mxu0 0.0
    %720 = vmatpush2.msra.mxu0 0.0
    %721 = vmatprep.subr.mxu0 0.0
    %722 = vmatpush2.msra.mxu0 0.0
    %723 = vmatprep.subr.mxu0 0.0
    %724 = vmatpush2.msra.mxu0 0.0
    %725 = vmatprep.subr.mxu0 0.0
    %726 = vmatpush2.msra.mxu0 0.0
    %727 = vmatprep.subr.mxu0 0.0
    %728 = vmatpush2.msra.mxu0 0.0
    %729 = vmatprep.subr.mxu0 0.0
    %730 = vmatpush2.msra.mxu0 0.0
    %731 = vmatprep.subr.mxu0 0.0
    %732 = vmatpush2.msra.mxu0 0.0
    %733 = vmatprep.subr.mxu0 0.0
    %734 = vmatpush2.msra.mxu0 0.0
    %735 = vmatprep.subr.mxu0 0.0
    %736 = vmatpush2.msra.mxu0 0.0
    %737 = vmatprep.subr.mxu0 0.0
    %738 = vmatpush2.msra.mxu0 0.0
    %739 = vmatprep.subr.mxu0 0.0
    %740 = vmatpush2.msra.mxu0 0.0
    %741 = vmatprep.subr.mxu0 0.0
    %742 = vmatpush2.msra.mxu0 0.0
    %743 = vmatprep.mubr.f32.mxu0 0.0
    %744 = vmatmul.mubr.f32.gmra.mxu0 %v677
    %v745 = vpop.f32.mrf.mxu0
    %v746 = vadd.f32 %v264, %v745
    %v747 = vpop.f32.mrf.mxu0
    %748 = vdwg.mxu0
    %v749 = vadd.f32 %v248, %v746
    %v750 = vmul.f32 %v749, 0.5
    %v751 = vtanh.pop %v750
    %v752 = vadd.f32 %v751, 1.0
    %v753 = vmul.f32 %v752, 0.5
    %755 = vrot.lane.b32.xlu0 %v746, 96
    %v756 = vpop.permute.xlu0 %755
    %v758 = vmul.f32 %v753, %v756
    %760 = vrot.lane.b32.xlu0 %v758, 32
    %v761 = vpop.permute.xlu0 %760
    %v763 = vadd.f32 %v248, %v761
    %v764 = vtanh.pop %v763
    %v765 = vsub.f32 1.0, %v753
    %767 = vrot.lane.b32.xlu0 %v764, 112
    %v768 = vpop.permute.xlu0 %767
    %v770 = vmul.f32 %v765, %v768
    %v772 = vmul.f32 %v753, %v674
    %v773 = vadd.f32 %v770, %v772
    %775 = vrot.lane.b32.xlu0 %v773, 112
    %v776 = vpop.permute.xlu0 %775
    %v777 = vsel %vm163, %v776, 0
    %779 = vmatprep.subr.mxu0 0.0
    %780 = vmatpush1.msra.mxu0 0.0
    %781 = vmatprep.subr.mxu0 0.0
    %782 = vmatpush1.msra.mxu0 0.0
    %783 = vmatprep.subr.mxu0 0.0
    %784 = vmatpush1.msra.mxu0 0.0
    %785 = vmatprep.subr.mxu0 0.0
    %786 = vmatpush1.msra.mxu0 0.0
    %787 = vmatprep.subr.mxu0 0.0
    %788 = vmatpush1.msra.mxu0 0.0
    %789 = vmatprep.subr.mxu0 0.0
    %790 = vmatpush1.msra.mxu0 0.0
    %791 = vmatprep.subr.mxu0 0.0
    %792 = vmatpush1.msra.mxu0 0.0
    %793 = vmatprep.subr.mxu0 0.0
    %794 = vmatpush1.msra.mxu0 0.0
    %795 = vmatprep.subr.mxu0 0.0
    %796 = vmatpush1.msra.mxu0 0.0
    %797 = vmatprep.subr.mxu0 0.0
    %798 = vmatpush1.msra.mxu0 0.0
    %799 = vmatprep.subr.mxu0 0.0
    %800 = vmatpush1.msra.mxu0 0.0
    %801 = vmatprep.subr.mxu0 0.0
    %802 = vmatpush1.msra.mxu0 0.0
    %803 = vmatprep.subr.mxu0 0.0
    %804 = vmatpush1.msra.mxu0 0.0
    %805 = vmatprep.subr.mxu0 0.0
    %806 = vmatpush1.msra.mxu0 0.0
    %807 = vmatprep.subr.mxu0 0.0
    %808 = vmatpush1.msra.mxu0 %v38
    %809 = vmatprep.subr.mxu0 0.0
    %810 = vmatpush1.msra.mxu0 %v37
    %811 = vmatprep.subr.mxu0 0.0
    %812 = vmatpush2.msra.mxu0 0.0
    %813 = vmatprep.subr.mxu0 0.0
    %814 = vmatpush2.msra.mxu0 0.0
    %815 = vmatprep.subr.mxu0 0.0
    %816 = vmatpush2.msra.mxu0 0.0
    %817 = vmatprep.subr.mxu0 0.0
    %818 = vmatpush2.msra.mxu0 0.0
    %819 = vmatprep.subr.mxu0 0.0
    %820 = vmatpush2.msra.mxu0 0.0
    %821 = vmatprep.subr.mxu0 0.0
    %822 = vmatpush2.msra.mxu0 0.0
    %823 = vmatprep.subr.mxu0 0.0
    %824 = vmatpush2.msra.mxu0 0.0
    %825 = vmatprep.subr.mxu0 0.0
    %826 = vmatpush2.msra.mxu0 0.0
    %827 = vmatprep.subr.mxu0 0.0
    %828 = vmatpush2.msra.mxu0 0.0
    %829 = vmatprep.subr.mxu0 0.0
    %830 = vmatpush2.msra.mxu0 0.0
    %831 = vmatprep.subr.mxu0 0.0
    %832 = vmatpush2.msra.mxu0 0.0
    %833 = vmatprep.subr.mxu0 0.0
    %834 = vmatpush2.msra.mxu0 0.0
    %835 = vmatprep.subr.mxu0 0.0
    %836 = vmatpush2.msra.mxu0 0.0
    %837 = vmatprep.subr.mxu0 0.0
    %838 = vmatpush2.msra.mxu0 0.0
    %839 = vmatprep.subr.mxu0 0.0
    %840 = vmatpush2.msra.mxu0 0.0
    %841 = vmatprep.subr.mxu0 0.0
    %842 = vmatpush2.msra.mxu0 0.0
    %843 = vmatprep.mubr.f32.mxu0 0.0
    %844 = vmatmul.mubr.f32.gmra.mxu0 %v777
    %v845 = vpop.f32.mrf.mxu0
    %v846 = vadd.f32 %v264, %v845
    %v847 = vpop.f32.mrf.mxu0
    %848 = vdwg.mxu0
    %v850 = vrot.slane %v846, 6
    %v852 = vadd.f32 %v248, %v850
    %v853 = vmul.f32 %v852, 0.5
    %v854 = vtanh.pop %v853
    %v855 = vadd.f32 %v854, 1.0
    %v856 = vmul.f32 %v855, 0.5
    %857 = vrot.lane.b32.xlu0 %v850, 96
    %v858 = vpop.permute.xlu0 %857
    %v860 = vmul.f32 %v856, %v858
    %862 = vrot.lane.b32.xlu0 %v860, 32
    %v863 = vpop.permute.xlu0 %862
    %v865 = vadd.f32 %v248, %v863
    %v866 = vtanh.pop %v865
    %v867 = vsub.f32 1.0, %v856
    %869 = vrot.lane.b32.xlu0 %v866, 112
    %v870 = vpop.permute.xlu0 %869
    %v872 = vmul.f32 %v867, %v870
    %v873 = vrot.slane %v773, 6
    %v875 = vmul.f32 %v856, %v873
    %v876 = vadd.f32 %v872, %v875
    %v878 = vrot.slane %v876, 2
    %879 = vrot.lane.b32.xlu0 %v878, 112
    %v880 = vpop.permute.xlu0 %879
    %v881 = vsel %vm163, %v880, 0
    %883 = vmatprep.subr.mxu0 0.0
    %884 = vmatpush1.msra.mxu0 0.0
    %885 = vmatprep.subr.mxu0 0.0
    %886 = vmatpush1.msra.mxu0 0.0
    %887 = vmatprep.subr.mxu0 0.0
    %888 = vmatpush1.msra.mxu0 0.0
    %889 = vmatprep.subr.mxu0 0.0
    %890 = vmatpush1.msra.mxu0 0.0
    %891 = vmatprep.subr.mxu0 0.0
    %892 = vmatpush1.msra.mxu0 0.0
    %893 = vmatprep.subr.mxu0 0.0
    %894 = vmatpush1.msra.mxu0 0.0
    %895 = vmatprep.subr.mxu0 0.0
    %896 = vmatpush1.msra.mxu0 0.0
    %897 = vmatprep.subr.mxu0 0.0
    %898 = vmatpush1.msra.mxu0 0.0
    %899 = vmatprep.subr.mxu0 0.0
    %900 = vmatpush1.msra.mxu0 0.0
    %901 = vmatprep.subr.mxu0 0.0
    %902 = vmatpush1.msra.mxu0 0.0
    %903 = vmatprep.subr.mxu0 0.0
    %904 = vmatpush1.msra.mxu0 0.0
    %905 = vmatprep.subr.mxu0 0.0
    %906 = vmatpush1.msra.mxu0 0.0
    %907 = vmatprep.subr.mxu0 0.0
    %908 = vmatpush1.msra.mxu0 0.0
    %909 = vmatprep.subr.mxu0 0.0
    %910 = vmatpush1.msra.mxu0 0.0
    %911 = vmatprep.subr.mxu0 0.0
    %912 = vmatpush1.msra.mxu0 %v38
    %913 = vmatprep.subr.mxu0 0.0
    %914 = vmatpush1.msra.mxu0 %v37
    %915 = vmatprep.subr.mxu0 0.0
    %916 = vmatpush2.msra.mxu0 0.0
    %917 = vmatprep.subr.mxu0 0.0
    %918 = vmatpush2.msra.mxu0 0.0
    %919 = vmatprep.subr.mxu0 0.0
    %920 = vmatpush2.msra.mxu0 0.0
    %921 = vmatprep.subr.mxu0 0.0
    %922 = vmatpush2.msra.mxu0 0.0
    %923 = vmatprep.subr.mxu0 0.0
    %924 = vmatpush2.msra.mxu0 0.0
    %925 = vmatprep.subr.mxu0 0.0
    %926 = vmatpush2.msra.mxu0 0.0
    %927 = vmatprep.subr.mxu0 0.0
    %928 = vmatpush2.msra.mxu0 0.0
    %929 = vmatprep.subr.mxu0 0.0
    %930 = vmatpush2.msra.mxu0 0.0
    %931 = vmatprep.subr.mxu0 0.0
    %932 = vmatpush2.msra.mxu0 0.0
    %933 = vmatprep.subr.mxu0 0.0
    %934 = vmatpush2.msra.mxu0 0.0
    %935 = vmatprep.subr.mxu0 0.0
    %936 = vmatpush2.msra.mxu0 0.0
    %937 = vmatprep.subr.mxu0 0.0
    %938 = vmatpush2.msra.mxu0 0.0
    %939 = vmatprep.subr.mxu0 0.0
    %940 = vmatpush2.msra.mxu0 0.0
    %941 = vmatprep.subr.mxu0 0.0
    %942 = vmatpush2.msra.mxu0 0.0
    %943 = vmatprep.subr.mxu0 0.0
    %944 = vmatpush2.msra.mxu0 0.0
    %945 = vmatprep.subr.mxu0 0.0
    %946 = vmatpush2.msra.mxu0 0.0
    %947 = vmatprep.mubr.f32.mxu0 0.0
    %948 = vmatmul.mubr.f32.gmra.mxu0 %v881
    %v949 = vpop.f32.mrf.mxu0
    %v950 = vadd.f32 %v264, %v949
    %v951 = vpop.f32.mrf.mxu0
    %952 = vdwg.mxu0
    %v954 = vrot.slane %v950, 4
    %v956 = vadd.f32 %v248, %v954
    %v957 = vmul.f32 %v956, 0.5
    %v958 = vtanh.pop %v957
    %v959 = vadd.f32 %v958, 1.0
    %v960 = vmul.f32 %v959, 0.5
    %961 = vrot.lane.b32.xlu0 %v954, 96
    %v962 = vpop.permute.xlu0 %961
    %v964 = vmul.f32 %v960, %v962
    %966 = vrot.lane.b32.xlu0 %v964, 32
    %v967 = vpop.permute.xlu0 %966
    %v969 = vadd.f32 %v248, %v967
    %v970 = vtanh.pop %v969
    %v971 = vsub.f32 1.0, %v960
    %973 = vrot.lane.b32.xlu0 %v970, 112
    %v974 = vpop.permute.xlu0 %973
    %v976 = vmul.f32 %v971, %v974
    %v977 = vrot.slane %v876, 6
    %v979 = vmul.f32 %v960, %v977
    %v980 = vadd.f32 %v976, %v979
    %v982 = vrot.slane %v980, 4
    %983 = vrot.lane.b32.xlu0 %v982, 112
    %v984 = vpop.permute.xlu0 %983
    %v985 = vsel %vm163, %v984, 0
    %987 = vmatprep.subr.mxu0 0.0
    %988 = vmatpush1.msra.mxu0 0.0
    %989 = vmatprep.subr.mxu0 0.0
    %990 = vmatpush1.msra.mxu0 0.0
    %991 = vmatprep.subr.mxu0 0.0
    %992 = vmatpush1.msra.mxu0 0.0
    %993 = vmatprep.subr.mxu0 0.0
    %994 = vmatpush1.msra.mxu0 0.0
    %995 = vmatprep.subr.mxu0 0.0
    %996 = vmatpush1.msra.mxu0 0.0
    %997 = vmatprep.subr.mxu0 0.0
    %998 = vmatpush1.msra.mxu0 0.0
    %999 = vmatprep.subr.mxu0 0.0
    %1000 = vmatpush1.msra.mxu0 0.0
    %1001 = vmatprep.subr.mxu0 0.0
    %1002 = vmatpush1.msra.mxu0 0.0
    %1003 = vmatprep.subr.mxu0 0.0
    %1004 = vmatpush1.msra.mxu0 0.0
    %1005 = vmatprep.subr.mxu0 0.0
    %1006 = vmatpush1.msra.mxu0 0.0
    %1007 = vmatprep.subr.mxu0 0.0
    %1008 = vmatpush1.msra.mxu0 0.0
    %1009 = vmatprep.subr.mxu0 0.0
    %1010 = vmatpush1.msra.mxu0 0.0
    %1011 = vmatprep.subr.mxu0 0.0
    %1012 = vmatpush1.msra.mxu0 0.0
    %1013 = vmatprep.subr.mxu0 0.0
    %1014 = vmatpush1.msra.mxu0 0.0
    %1015 = vmatprep.subr.mxu0 0.0
    %1016 = vmatpush1.msra.mxu0 %v38
    %1017 = vmatprep.subr.mxu0 0.0
    %1018 = vmatpush1.msra.mxu0 %v37
    %1019 = vmatprep.subr.mxu0 0.0
    %1020 = vmatpush2.msra.mxu0 0.0
    %1021 = vmatprep.subr.mxu0 0.0
    %1022 = vmatpush2.msra.mxu0 0.0
    %1023 = vmatprep.subr.mxu0 0.0
    %1024 = vmatpush2.msra.mxu0 0.0
    %1025 = vmatprep.subr.mxu0 0.0
    %1026 = vmatpush2.msra.mxu0 0.0
    %1027 = vmatprep.subr.mxu0 0.0
    %1028 = vmatpush2.msra.mxu0 0.0
    %1029 = vmatprep.subr.mxu0 0.0
    %1030 = vmatpush2.msra.mxu0 0.0
    %1031 = vmatprep.subr.mxu0 0.0
    %1032 = vmatpush2.msra.mxu0 0.0
    %1033 = vmatprep.subr.mxu0 0.0
    %1034 = vmatpush2.msra.mxu0 0.0
    %1035 = vmatprep.subr.mxu0 0.0
    %1036 = vmatpush2.msra.mxu0 0.0
    %1037 = vmatprep.subr.mxu0 0.0
    %1038 = vmatpush2.msra.mxu0 0.0
    %1039 = vmatprep.subr.mxu0 0.0
    %1040 = vmatpush2.msra.mxu0 0.0
    %1041 = vmatprep.subr.mxu0 0.0
    %1042 = vmatpush2.msra.mxu0 0.0
    %1043 = vmatprep.subr.mxu0 0.0
    %1044 = vmatpush2.msra.mxu0 0.0
    %1045 = vmatprep.subr.mxu0 0.0
    %1046 = vmatpush2.msra.mxu0 0.0
    %1047 = vmatprep.subr.mxu0 0.0
    %1048 = vmatpush2.msra.mxu0 0.0
    %1049 = vmatprep.subr.mxu0 0.0
    %1050 = vmatpush2.msra.mxu0 0.0
    %1051 = vmatprep.mubr.f32.mxu0 0.0
    %1052 = vmatmul.mubr.f32.gmra.mxu0 %v985
    %v1053 = vpop.f32.mrf.mxu0
    %v1054 = vadd.f32 %v264, %v1053
    %v1055 = vpop.f32.mrf.mxu0
    %1056 = vdwg.mxu0
    %v1058 = vrot.slane %v1054, 2
    %v1060 = vadd.f32 %v248, %v1058
    %v1061 = vmul.f32 %v1060, 0.5
    %v1062 = vtanh.pop %v1061
    %v1063 = vadd.f32 %v1062, 1.0
    %v1064 = vmul.f32 %v1063, 0.5
    %1065 = vrot.lane.b32.xlu0 %v1058, 96
    %v1066 = vpop.permute.xlu0 %1065
    %v1068 = vmul.f32 %v1064, %v1066
    %1070 = vrot.lane.b32.xlu0 %v1068, 32
    %v1071 = vpop.permute.xlu0 %1070
    %v1073 = vadd.f32 %v248, %v1071
    %v1074 = vtanh.pop %v1073
    %v1075 = vsub.f32 1.0, %v1064
    %1077 = vrot.lane.b32.xlu0 %v1074, 112
    %v1078 = vpop.permute.xlu0 %1077
    %v1080 = vmul.f32 %v1075, %v1078
    %v1081 = vrot.slane %v980, 6
    %v1083 = vmul.f32 %v1064, %v1081
    %v1084 = vadd.f32 %v1080, %v1083
    %v1086 = vrot.slane %v1084, 6
    %1087 = vrot.lane.b32.xlu0 %v1086, 112
    %v1088 = vpop.permute.xlu0 %1087
    %v1089 = vsel %vm163, %v1088, 0
    %1091 = vmatprep.subr.mxu0 0.0
    %1092 = vmatpush1.msra.mxu0 0.0
    %1093 = vmatprep.subr.mxu0 0.0
    %1094 = vmatpush1.msra.mxu0 0.0
    %1095 = vmatprep.subr.mxu0 0.0
    %1096 = vmatpush1.msra.mxu0 0.0
    %1097 = vmatprep.subr.mxu0 0.0
    %1098 = vmatpush1.msra.mxu0 0.0
    %1099 = vmatprep.subr.mxu0 0.0
    %1100 = vmatpush1.msra.mxu0 0.0
    %1101 = vmatprep.subr.mxu0 0.0
    %1102 = vmatpush1.msra.mxu0 0.0
    %1103 = vmatprep.subr.mxu0 0.0
    %1104 = vmatpush1.msra.mxu0 0.0
    %1105 = vmatprep.subr.mxu0 0.0
    %1106 = vmatpush1.msra.mxu0 0.0
    %1107 = vmatprep.subr.mxu0 0.0
    %1108 = vmatpush1.msra.mxu0 0.0
    %1109 = vmatprep.subr.mxu0 0.0
    %1110 = vmatpush1.msra.mxu0 0.0
    %1111 = vmatprep.subr.mxu0 0.0
    %1112 = vmatpush1.msra.mxu0 0.0
    %1113 = vmatprep.subr.mxu0 0.0
    %1114 = vmatpush1.msra.mxu0 0.0
    %1115 = vmatprep.subr.mxu0 0.0
    %1116 = vmatpush1.msra.mxu0 0.0
    %1117 = vmatprep.subr.mxu0 0.0
    %1118 = vmatpush1.msra.mxu0 0.0
    %1119 = vmatprep.subr.mxu0 0.0
    %1120 = vmatpush1.msra.mxu0 %v38
    %1121 = vmatprep.subr.mxu0 0.0
    %1122 = vmatpush1.msra.mxu0 %v37
    %1123 = vmatprep.subr.mxu0 0.0
    %1124 = vmatpush2.msra.mxu0 0.0
    %1125 = vmatprep.subr.mxu0 0.0
    %1126 = vmatpush2.msra.mxu0 0.0
    %1127 = vmatprep.subr.mxu0 0.0
    %1128 = vmatpush2.msra.mxu0 0.0
    %1129 = vmatprep.subr.mxu0 0.0
    %1130 = vmatpush2.msra.mxu0 0.0
    %1131 = vmatprep.subr.mxu0 0.0
    %1132 = vmatpush2.msra.mxu0 0.0
    %1133 = vmatprep.subr.mxu0 0.0
    %1134 = vmatpush2.msra.mxu0 0.0
    %1135 = vmatprep.subr.mxu0 0.0
    %1136 = vmatpush2.msra.mxu0 0.0
    %1137 = vmatprep.subr.mxu0 0.0
    %1138 = vmatpush2.msra.mxu0 0.0
    %1139 = vmatprep.subr.mxu0 0.0
    %1140 = vmatpush2.msra.mxu0 0.0
    %1141 = vmatprep.subr.mxu0 0.0
    %1142 = vmatpush2.msra.mxu0 0.0
    %1143 = vmatprep.subr.mxu0 0.0
    %1144 = vmatpush2.msra.mxu0 0.0
    %1145 = vmatprep.subr.mxu0 0.0
    %1146 = vmatpush2.msra.mxu0 0.0
    %1147 = vmatprep.subr.mxu0 0.0
    %1148 = vmatpush2.msra.mxu0 0.0
    %1149 = vmatprep.subr.mxu0 0.0
    %1150 = vmatpush2.msra.mxu0 0.0
    %1151 = vmatprep.subr.mxu0 0.0
    %1152 = vmatpush2.msra.mxu0 0.0
    %1153 = vmatprep.subr.mxu0 0.0
    %1154 = vmatpush2.msra.mxu0 0.0
    %1155 = vmatprep.mubr.f32.mxu0 0.0
    %1156 = vmatmul.mubr.f32.gmra.mxu0 %v1089
    %v1157 = vpop.f32.mrf.mxu0
    %v1158 = vadd.f32 %v264, %v1157
    %v1159 = vpop.f32.mrf.mxu0
    %1160 = vdwg.mxu0
    %v1161 = vadd.f32 %v253, %v1158
    %v1162 = vmul.f32 %v1161, 0.5
    %v1163 = vtanh.pop %v1162
    %v1164 = vadd.f32 %v1163, 1.0
    %v1165 = vmul.f32 %v1164, 0.5
    %1167 = vrot.lane.b32.xlu0 %v1158, 96
    %v1168 = vpop.permute.xlu0 %1167
    %v1170 = vmul.f32 %v1165, %v1168
    %1172 = vrot.lane.b32.xlu0 %v1170, 32
    %v1173 = vpop.permute.xlu0 %1172
    %v1175 = vadd.f32 %v253, %v1173
    %v1176 = vtanh.pop %v1175
    %v1177 = vsub.f32 1.0, %v1165
    %1179 = vrot.lane.b32.xlu0 %v1176, 112
    %v1180 = vpop.permute.xlu0 %1179
    %v1182 = vmul.f32 %v1177, %v1180
    %v1184 = vmul.f32 %v1165, %v1086
    %v1185 = vadd.f32 %v1182, %v1184
    %1187 = vrot.lane.b32.xlu0 %v1185, 112
    %v1188 = vpop.permute.xlu0 %1187
    %v1189 = vsel %vm163, %v1188, 0
    %1191 = vmatprep.subr.mxu0 0.0
    %1192 = vmatpush1.msra.mxu0 0.0
    %1193 = vmatprep.subr.mxu0 0.0
    %1194 = vmatpush1.msra.mxu0 0.0
    %1195 = vmatprep.subr.mxu0 0.0
    %1196 = vmatpush1.msra.mxu0 0.0
    %1197 = vmatprep.subr.mxu0 0.0
    %1198 = vmatpush1.msra.mxu0 0.0
    %1199 = vmatprep.subr.mxu0 0.0
    %1200 = vmatpush1.msra.mxu0 0.0
    %1201 = vmatprep.subr.mxu0 0.0
    %1202 = vmatpush1.msra.mxu0 0.0
    %1203 = vmatprep.subr.mxu0 0.0
    %1204 = vmatpush1.msra.mxu0 0.0
    %1205 = vmatprep.subr.mxu0 0.0
    %1206 = vmatpush1.msra.mxu0 0.0
    %1207 = vmatprep.subr.mxu0 0.0
    %1208 = vmatpush1.msra.mxu0 0.0
    %1209 = vmatprep.subr.mxu0 0.0
    %1210 = vmatpush1.msra.mxu0 0.0
    %1211 = vmatprep.subr.mxu0 0.0
    %1212 = vmatpush1.msra.mxu0 0.0
    %1213 = vmatprep.subr.mxu0 0.0
    %1214 = vmatpush1.msra.mxu0 0.0
    %1215 = vmatprep.subr.mxu0 0.0
    %1216 = vmatpush1.msra.mxu0 0.0
    %1217 = vmatprep.subr.mxu0 0.0
    %1218 = vmatpush1.msra.mxu0 0.0
    %1219 = vmatprep.subr.mxu0 0.0
    %1220 = vmatpush1.msra.mxu0 %v38
    %1221 = vmatprep.subr.mxu0 0.0
    %1222 = vmatpush1.msra.mxu0 %v37
    %1223 = vmatprep.subr.mxu0 0.0
    %1224 = vmatpush2.msra.mxu0 0.0
    %1225 = vmatprep.subr.mxu0 0.0
    %1226 = vmatpush2.msra.mxu0 0.0
    %1227 = vmatprep.subr.mxu0 0.0
    %1228 = vmatpush2.msra.mxu0 0.0
    %1229 = vmatprep.subr.mxu0 0.0
    %1230 = vmatpush2.msra.mxu0 0.0
    %1231 = vmatprep.subr.mxu0 0.0
    %1232 = vmatpush2.msra.mxu0 0.0
    %1233 = vmatprep.subr.mxu0 0.0
    %1234 = vmatpush2.msra.mxu0 0.0
    %1235 = vmatprep.subr.mxu0 0.0
    %1236 = vmatpush2.msra.mxu0 0.0
    %1237 = vmatprep.subr.mxu0 0.0
    %1238 = vmatpush2.msra.mxu0 0.0
    %1239 = vmatprep.subr.mxu0 0.0
    %1240 = vmatpush2.msra.mxu0 0.0
    %1241 = vmatprep.subr.mxu0 0.0
    %1242 = vmatpush2.msra.mxu0 0.0
    %1243 = vmatprep.subr.mxu0 0.0
    %1244 = vmatpush2.msra.mxu0 0.0
    %1245 = vmatprep.subr.mxu0 0.0
    %1246 = vmatpush2.msra.mxu0 0.0
    %1247 = vmatprep.subr.mxu0 0.0
    %1248 = vmatpush2.msra.mxu0 0.0
    %1249 = vmatprep.subr.mxu0 0.0
    %1250 = vmatpush2.msra.mxu0 0.0
    %1251 = vmatprep.subr.mxu0 0.0
    %1252 = vmatpush2.msra.mxu0 0.0
    %1253 = vmatprep.subr.mxu0 0.0
    %1254 = vmatpush2.msra.mxu0 0.0
    %1255 = vmatprep.mubr.f32.mxu0 0.0
    %1256 = vmatmul.mubr.f32.gmra.mxu0 %v1189
    %v1257 = vpop.f32.mrf.mxu0
    %v1258 = vadd.f32 %v264, %v1257
    %v1259 = vpop.f32.mrf.mxu0
    %1260 = vdwg.mxu0
    %v1262 = vrot.slane %v1258, 6
    %v1264 = vadd.f32 %v253, %v1262
    %v1265 = vmul.f32 %v1264, 0.5
    %v1266 = vtanh.pop %v1265
    %v1267 = vadd.f32 %v1266, 1.0
    %v1268 = vmul.f32 %v1267, 0.5
    %1269 = vrot.lane.b32.xlu0 %v1262, 96
    %v1270 = vpop.permute.xlu0 %1269
    %v1272 = vmul.f32 %v1268, %v1270
    %1274 = vrot.lane.b32.xlu0 %v1272, 32
    %v1275 = vpop.permute.xlu0 %1274
    %v1277 = vadd.f32 %v253, %v1275
    %v1278 = vtanh.pop %v1277
    %v1279 = vsub.f32 1.0, %v1268
    %1281 = vrot.lane.b32.xlu0 %v1278, 112
    %v1282 = vpop.permute.xlu0 %1281
    %v1284 = vmul.f32 %v1279, %v1282
    %v1285 = vrot.slane %v1185, 6
    %v1287 = vmul.f32 %v1268, %v1285
    %v1288 = vadd.f32 %v1284, %v1287
    %v1290 = vrot.slane %v1288, 2
    %1291 = vrot.lane.b32.xlu0 %v1290, 112
    %v1292 = vpop.permute.xlu0 %1291
    %v1293 = vsel %vm163, %v1292, 0
    %1295 = vmatprep.subr.mxu0 0.0
    %1296 = vmatpush1.msra.mxu0 0.0
    %1297 = vmatprep.subr.mxu0 0.0
    %1298 = vmatpush1.msra.mxu0 0.0
    %1299 = vmatprep.subr.mxu0 0.0
    %1300 = vmatpush1.msra.mxu0 0.0
    %1301 = vmatprep.subr.mxu0 0.0
    %1302 = vmatpush1.msra.mxu0 0.0
    %1303 = vmatprep.subr.mxu0 0.0
    %1304 = vmatpush1.msra.mxu0 0.0
    %1305 = vmatprep.subr.mxu0 0.0
    %1306 = vmatpush1.msra.mxu0 0.0
    %1307 = vmatprep.subr.mxu0 0.0
    %1308 = vmatpush1.msra.mxu0 0.0
    %1309 = vmatprep.subr.mxu0 0.0
    %1310 = vmatpush1.msra.mxu0 0.0
    %1311 = vmatprep.subr.mxu0 0.0
    %1312 = vmatpush1.msra.mxu0 0.0
    %1313 = vmatprep.subr.mxu0 0.0
    %1314 = vmatpush1.msra.mxu0 0.0
    %1315 = vmatprep.subr.mxu0 0.0
    %1316 = vmatpush1.msra.mxu0 0.0
    %1317 = vmatprep.subr.mxu0 0.0
    %1318 = vmatpush1.msra.mxu0 0.0
    %1319 = vmatprep.subr.mxu0 0.0
    %1320 = vmatpush1.msra.mxu0 0.0
    %1321 = vmatprep.subr.mxu0 0.0
    %1322 = vmatpush1.msra.mxu0 0.0
    %1323 = vmatprep.subr.mxu0 0.0
    %1324 = vmatpush1.msra.mxu0 %v38
    %1325 = vmatprep.subr.mxu0 0.0
    %1326 = vmatpush1.msra.mxu0 %v37
    %1327 = vmatprep.subr.mxu0 0.0
    %1328 = vmatpush2.msra.mxu0 0.0
    %1329 = vmatprep.subr.mxu0 0.0
    %1330 = vmatpush2.msra.mxu0 0.0
    %1331 = vmatprep.subr.mxu0 0.0
    %1332 = vmatpush2.msra.mxu0 0.0
    %1333 = vmatprep.subr.mxu0 0.0
    %1334 = vmatpush2.msra.mxu0 0.0
    %1335 = vmatprep.subr.mxu0 0.0
    %1336 = vmatpush2.msra.mxu0 0.0
    %1337 = vmatprep.subr.mxu0 0.0
    %1338 = vmatpush2.msra.mxu0 0.0
    %1339 = vmatprep.subr.mxu0 0.0
    %1340 = vmatpush2.msra.mxu0 0.0
    %1341 = vmatprep.subr.mxu0 0.0
    %1342 = vmatpush2.msra.mxu0 0.0
    %1343 = vmatprep.subr.mxu0 0.0
    %1344 = vmatpush2.msra.mxu0 0.0
    %1345 = vmatprep.subr.mxu0 0.0
    %1346 = vmatpush2.msra.mxu0 0.0
    %1347 = vmatprep.subr.mxu0 0.0
    %1348 = vmatpush2.msra.mxu0 0.0
    %1349 = vmatprep.subr.mxu0 0.0
    %1350 = vmatpush2.msra.mxu0 0.0
    %1351 = vmatprep.subr.mxu0 0.0
    %1352 = vmatpush2.msra.mxu0 0.0
    %1353 = vmatprep.subr.mxu0 0.0
    %1354 = vmatpush2.msra.mxu0 0.0
    %1355 = vmatprep.subr.mxu0 0.0
    %1356 = vmatpush2.msra.mxu0 0.0
    %1357 = vmatprep.subr.mxu0 0.0
    %1358 = vmatpush2.msra.mxu0 0.0
    %1359 = vmatprep.mubr.f32.mxu0 0.0
    %1360 = vmatmul.mubr.f32.gmra.mxu0 %v1293
    %v1361 = vpop.f32.mrf.mxu0
    %v1362 = vadd.f32 %v264, %v1361
    %v1363 = vpop.f32.mrf.mxu0
    %1364 = vdwg.mxu0
    %v1366 = vrot.slane %v1362, 4
    %v1368 = vadd.f32 %v253, %v1366
    %v1369 = vmul.f32 %v1368, 0.5
    %v1370 = vtanh.pop %v1369
    %v1371 = vadd.f32 %v1370, 1.0
    %v1372 = vmul.f32 %v1371, 0.5
    %1373 = vrot.lane.b32.xlu0 %v1366, 96
    %v1374 = vpop.permute.xlu0 %1373
    %v1376 = vmul.f32 %v1372, %v1374
    %1378 = vrot.lane.b32.xlu0 %v1376, 32
    %v1379 = vpop.permute.xlu0 %1378
    %v1381 = vadd.f32 %v253, %v1379
    %v1382 = vtanh.pop %v1381
    %v1383 = vsub.f32 1.0, %v1372
    %1385 = vrot.lane.b32.xlu0 %v1382, 112
    %v1386 = vpop.permute.xlu0 %1385
    %v1388 = vmul.f32 %v1383, %v1386
    %v1389 = vrot.slane %v1288, 6
    %v1391 = vmul.f32 %v1372, %v1389
    %v1392 = vadd.f32 %v1388, %v1391
    %v1394 = vrot.slane %v1392, 4
    %1395 = vrot.lane.b32.xlu0 %v1394, 112
    %v1396 = vpop.permute.xlu0 %1395
    %v1397 = vsel %vm163, %v1396, 0
    %1399 = vmatprep.subr.mxu0 0.0
    %1400 = vmatpush1.msra.mxu0 0.0
    %1401 = vmatprep.subr.mxu0 0.0
    %1402 = vmatpush1.msra.mxu0 0.0
    %1403 = vmatprep.subr.mxu0 0.0
    %1404 = vmatpush1.msra.mxu0 0.0
    %1405 = vmatprep.subr.mxu0 0.0
    %1406 = vmatpush1.msra.mxu0 0.0
    %1407 = vmatprep.subr.mxu0 0.0
    %1408 = vmatpush1.msra.mxu0 0.0
    %1409 = vmatprep.subr.mxu0 0.0
    %1410 = vmatpush1.msra.mxu0 0.0
    %1411 = vmatprep.subr.mxu0 0.0
    %1412 = vmatpush1.msra.mxu0 0.0
    %1413 = vmatprep.subr.mxu0 0.0
    %1414 = vmatpush1.msra.mxu0 0.0
    %1415 = vmatprep.subr.mxu0 0.0
    %1416 = vmatpush1.msra.mxu0 0.0
    %1417 = vmatprep.subr.mxu0 0.0
    %1418 = vmatpush1.msra.mxu0 0.0
    %1419 = vmatprep.subr.mxu0 0.0
    %1420 = vmatpush1.msra.mxu0 0.0
    %1421 = vmatprep.subr.mxu0 0.0
    %1422 = vmatpush1.msra.mxu0 0.0
    %1423 = vmatprep.subr.mxu0 0.0
    %1424 = vmatpush1.msra.mxu0 0.0
    %1425 = vmatprep.subr.mxu0 0.0
    %1426 = vmatpush1.msra.mxu0 0.0
    %1427 = vmatprep.subr.mxu0 0.0
    %1428 = vmatpush1.msra.mxu0 %v38
    %1429 = vmatprep.subr.mxu0 0.0
    %1430 = vmatpush1.msra.mxu0 %v37
    %1431 = vmatprep.subr.mxu0 0.0
    %1432 = vmatpush2.msra.mxu0 0.0
    %1433 = vmatprep.subr.mxu0 0.0
    %1434 = vmatpush2.msra.mxu0 0.0
    %1435 = vmatprep.subr.mxu0 0.0
    %1436 = vmatpush2.msra.mxu0 0.0
    %1437 = vmatprep.subr.mxu0 0.0
    %1438 = vmatpush2.msra.mxu0 0.0
    %1439 = vmatprep.subr.mxu0 0.0
    %1440 = vmatpush2.msra.mxu0 0.0
    %1441 = vmatprep.subr.mxu0 0.0
    %1442 = vmatpush2.msra.mxu0 0.0
    %1443 = vmatprep.subr.mxu0 0.0
    %1444 = vmatpush2.msra.mxu0 0.0
    %1445 = vmatprep.subr.mxu0 0.0
    %1446 = vmatpush2.msra.mxu0 0.0
    %1447 = vmatprep.subr.mxu0 0.0
    %1448 = vmatpush2.msra.mxu0 0.0
    %1449 = vmatprep.subr.mxu0 0.0
    %1450 = vmatpush2.msra.mxu0 0.0
    %1451 = vmatprep.subr.mxu0 0.0
    %1452 = vmatpush2.msra.mxu0 0.0
    %1453 = vmatprep.subr.mxu0 0.0
    %1454 = vmatpush2.msra.mxu0 0.0
    %1455 = vmatprep.subr.mxu0 0.0
    %1456 = vmatpush2.msra.mxu0 0.0
    %1457 = vmatprep.subr.mxu0 0.0
    %1458 = vmatpush2.msra.mxu0 0.0
    %1459 = vmatprep.subr.mxu0 0.0
    %1460 = vmatpush2.msra.mxu0 0.0
    %1461 = vmatprep.subr.mxu0 0.0
    %1462 = vmatpush2.msra.mxu0 0.0
    %1463 = vmatprep.mubr.f32.mxu0 0.0
    %1464 = vmatmul.mubr.f32.gmra.mxu0 %v1397
    %v1465 = vpop.f32.mrf.mxu0
    %v1466 = vadd.f32 %v264, %v1465
    %v1467 = vpop.f32.mrf.mxu0
    %1468 = vdwg.mxu0
    %v1470 = vrot.slane %v1466, 2
    %v1472 = vadd.f32 %v253, %v1470
    %v1473 = vmul.f32 %v1472, 0.5
    %v1474 = vtanh.pop %v1473
    %v1475 = vadd.f32 %v1474, 1.0
    %v1476 = vmul.f32 %v1475, 0.5
    %1477 = vrot.lane.b32.xlu0 %v1470, 96
    %v1478 = vpop.permute.xlu0 %1477
    %v1480 = vmul.f32 %v1476, %v1478
    %1482 = vrot.lane.b32.xlu0 %v1480, 32
    %v1483 = vpop.permute.xlu0 %1482
    %v1485 = vadd.f32 %v253, %v1483
    %v1486 = vtanh.pop %v1485
    %v1487 = vsub.f32 1.0, %v1476
    %1489 = vrot.lane.b32.xlu0 %v1486, 112
    %v1490 = vpop.permute.xlu0 %1489
    %v1492 = vmul.f32 %v1487, %v1490
    %v1493 = vrot.slane %v1392, 6
    %v1495 = vmul.f32 %v1476, %v1493
    %v1496 = vadd.f32 %v1492, %v1495
    %v1498 = vrot.slane %v1496, 6
    %1499 = vrot.lane.b32.xlu0 %v1498, 112
    %v1500 = vpop.permute.xlu0 %1499
    %v1501 = vsel %vm163, %v1500, 0
    %1503 = vmatprep.subr.mxu0 0.0
    %1504 = vmatpush1.msra.mxu0 0.0
    %1505 = vmatprep.subr.mxu0 0.0
    %1506 = vmatpush1.msra.mxu0 0.0
    %1507 = vmatprep.subr.mxu0 0.0
    %1508 = vmatpush1.msra.mxu0 0.0
    %1509 = vmatprep.subr.mxu0 0.0
    %1510 = vmatpush1.msra.mxu0 0.0
    %1511 = vmatprep.subr.mxu0 0.0
    %1512 = vmatpush1.msra.mxu0 0.0
    %1513 = vmatprep.subr.mxu0 0.0
    %1514 = vmatpush1.msra.mxu0 0.0
    %1515 = vmatprep.subr.mxu0 0.0
    %1516 = vmatpush1.msra.mxu0 0.0
    %1517 = vmatprep.subr.mxu0 0.0
    %1518 = vmatpush1.msra.mxu0 0.0
    %1519 = vmatprep.subr.mxu0 0.0
    %1520 = vmatpush1.msra.mxu0 0.0
    %1521 = vmatprep.subr.mxu0 0.0
    %1522 = vmatpush1.msra.mxu0 0.0
    %1523 = vmatprep.subr.mxu0 0.0
    %1524 = vmatpush1.msra.mxu0 0.0
    %1525 = vmatprep.subr.mxu0 0.0
    %1526 = vmatpush1.msra.mxu0 0.0
    %1527 = vmatprep.subr.mxu0 0.0
    %1528 = vmatpush1.msra.mxu0 0.0
    %1529 = vmatprep.subr.mxu0 0.0
    %1530 = vmatpush1.msra.mxu0 0.0
    %1531 = vmatprep.subr.mxu0 0.0
    %1532 = vmatpush1.msra.mxu0 %v38
    %1533 = vmatprep.subr.mxu0 0.0
    %1534 = vmatpush1.msra.mxu0 %v37
    %1535 = vmatprep.subr.mxu0 0.0
    %1536 = vmatpush2.msra.mxu0 0.0
    %1537 = vmatprep.subr.mxu0 0.0
    %1538 = vmatpush2.msra.mxu0 0.0
    %1539 = vmatprep.subr.mxu0 0.0
    %1540 = vmatpush2.msra.mxu0 0.0
    %1541 = vmatprep.subr.mxu0 0.0
    %1542 = vmatpush2.msra.mxu0 0.0
    %1543 = vmatprep.subr.mxu0 0.0
    %1544 = vmatpush2.msra.mxu0 0.0
    %1545 = vmatprep.subr.mxu0 0.0
    %1546 = vmatpush2.msra.mxu0 0.0
    %1547 = vmatprep.subr.mxu0 0.0
    %1548 = vmatpush2.msra.mxu0 0.0
    %1549 = vmatprep.subr.mxu0 0.0
    %1550 = vmatpush2.msra.mxu0 0.0
    %1551 = vmatprep.subr.mxu0 0.0
    %1552 = vmatpush2.msra.mxu0 0.0
    %1553 = vmatprep.subr.mxu0 0.0
    %1554 = vmatpush2.msra.mxu0 0.0
    %1555 = vmatprep.subr.mxu0 0.0
    %1556 = vmatpush2.msra.mxu0 0.0
    %1557 = vmatprep.subr.mxu0 0.0
    %1558 = vmatpush2.msra.mxu0 0.0
    %1559 = vmatprep.subr.mxu0 0.0
    %1560 = vmatpush2.msra.mxu0 0.0
    %1561 = vmatprep.subr.mxu0 0.0
    %1562 = vmatpush2.msra.mxu0 0.0
    %1563 = vmatprep.subr.mxu0 0.0
    %1564 = vmatpush2.msra.mxu0 0.0
    %1565 = vmatprep.subr.mxu0 0.0
    %1566 = vmatpush2.msra.mxu0 0.0
    %1567 = vmatprep.mubr.f32.mxu0 0.0
    %1568 = vmatmul.mubr.f32.gmra.mxu0 %v1501
    %v1569 = vpop.f32.mrf.mxu0
    %v1570 = vadd.f32 %v264, %v1569
    %v1571 = vpop.f32.mrf.mxu0
    %1572 = vdwg.mxu0
    %v1573 = vadd.f32 %v258, %v1570
    %v1574 = vmul.f32 %v1573, 0.5
    %v1575 = vtanh.pop %v1574
    %v1576 = vadd.f32 %v1575, 1.0
    %v1577 = vmul.f32 %v1576, 0.5
    %1579 = vrot.lane.b32.xlu0 %v1570, 96
    %v1580 = vpop.permute.xlu0 %1579
    %v1582 = vmul.f32 %v1577, %v1580
    %1584 = vrot.lane.b32.xlu0 %v1582, 32
    %v1585 = vpop.permute.xlu0 %1584
    %v1587 = vadd.f32 %v258, %v1585
    %v1588 = vtanh.pop %v1587
    %v1589 = vsub.f32 1.0, %v1577
    %1591 = vrot.lane.b32.xlu0 %v1588, 112
    %v1592 = vpop.permute.xlu0 %1591
    %v1594 = vmul.f32 %v1589, %v1592
    %v1596 = vmul.f32 %v1577, %v1498
    %v1597 = vadd.f32 %v1594, %v1596
    %v1598 = vlaneseq
    %v1599 = vshrl.u32 %v1598, 7
    %v1600 = vsub.s32 0, %v1599
    %v1601 = vrot.slane %v47, %v1600
    %vm1602 = vcmask 31744
    %v1603 = vsel %vm1602, 0.0, 0
    %vm1605 = vcmask 1043456
    %v1607 = vsel %vm1605, %v39, 0
    %1609 = vmatprep.subr.mxu0 0.0
    %1610 = vmatpush1.msra.mxu0 0.0
    %1611 = vmatprep.subr.mxu0 0.0
    %1612 = vmatpush1.msra.mxu0 0.0
    %1613 = vmatprep.subr.mxu0 0.0
    %1614 = vmatpush1.msra.mxu0 0.0
    %1615 = vmatprep.subr.mxu0 0.0
    %1616 = vmatpush1.msra.mxu0 0.0
    %1617 = vmatprep.subr.mxu0 0.0
    %1618 = vmatpush1.msra.mxu0 0.0
    %1619 = vmatprep.subr.mxu0 0.0
    %1620 = vmatpush1.msra.mxu0 0.0
    %1621 = vmatprep.subr.mxu0 0.0
    %1622 = vmatpush1.msra.mxu0 0.0
    %1623 = vmatprep.subr.mxu0 0.0
    %1624 = vmatpush1.msra.mxu0 0.0
    %1625 = vmatprep.subr.mxu0 0.0
    %1626 = vmatpush1.msra.mxu0 0.0
    %1627 = vmatprep.subr.mxu0 0.0
    %1628 = vmatpush1.msra.mxu0 0.0
    %1629 = vmatprep.subr.mxu0 0.0
    %1630 = vmatpush1.msra.mxu0 0.0
    %1631 = vmatprep.subr.mxu0 0.0
    %1632 = vmatpush1.msra.mxu0 0.0
    %1633 = vmatprep.subr.mxu0 0.0
    %1634 = vmatpush1.msra.mxu0 0.0
    %1635 = vmatprep.subr.mxu0 0.0
    %1636 = vmatpush1.msra.mxu0 0.0
    %1637 = vmatprep.subr.mxu0 0.0
    %1638 = vmatpush1.msra.mxu0 0.0
    %1639 = vmatprep.subr.mxu0 0.0
    %1640 = vmatpush1.msra.mxu0 %v1607
    %1641 = vmatprep.subr.mxu0 0.0
    %1642 = vmatpush2.msra.mxu0 0.0
    %1643 = vmatprep.subr.mxu0 0.0
    %1644 = vmatpush2.msra.mxu0 0.0
    %1645 = vmatprep.subr.mxu0 0.0
    %1646 = vmatpush2.msra.mxu0 0.0
    %1647 = vmatprep.subr.mxu0 0.0
    %1648 = vmatpush2.msra.mxu0 0.0
    %1649 = vmatprep.subr.mxu0 0.0
    %1650 = vmatpush2.msra.mxu0 0.0
    %1651 = vmatprep.subr.mxu0 0.0
    %1652 = vmatpush2.msra.mxu0 0.0
    %1653 = vmatprep.subr.mxu0 0.0
    %1654 = vmatpush2.msra.mxu0 0.0
    %1655 = vmatprep.subr.mxu0 0.0
    %1656 = vmatpush2.msra.mxu0 0.0
    %1657 = vmatprep.subr.mxu0 0.0
    %1658 = vmatpush2.msra.mxu0 0.0
    %1659 = vmatprep.subr.mxu0 0.0
    %1660 = vmatpush2.msra.mxu0 0.0
    %1661 = vmatprep.subr.mxu0 0.0
    %1662 = vmatpush2.msra.mxu0 0.0
    %1663 = vmatprep.subr.mxu0 0.0
    %1664 = vmatpush2.msra.mxu0 0.0
    %1665 = vmatprep.subr.mxu0 0.0
    %1666 = vmatpush2.msra.mxu0 0.0
    %1667 = vmatprep.subr.mxu0 0.0
    %1668 = vmatpush2.msra.mxu0 0.0
    %1669 = vmatprep.subr.mxu0 0.0
    %1670 = vmatpush2.msra.mxu0 0.0
    %1671 = vmatprep.subr.mxu0 0.0
    %1672 = vmatpush2.msra.mxu0 0.0
    %1673 = vmatprep.mubr.f32.mxu0 0.0
    %1674 = vmatmul.mubr.f32.gmra.mxu0 %v1603
    %v1675 = vpop.f32.mrf.mxu0
    %v1676 = vadd.f32 %v1601, %v1675
    %v1677 = vpop.f32.mrf.mxu0
    %1678 = vdwg.mxu0
    %v1680 = vrot.slane %v1676, 6
    %1681 = vrot.lane.b32.xlu0 %v1680, 48
    %v1682 = vpop.permute.xlu0 %1681
    %v1684 = vadd.f32 %v243, %v1682
    %v1685 = vadd.f32 %v248, %v1682
    %v1686 = vmul.f32 %v1684, 0.5
    %v1687 = vmul.f32 %v1685, 0.5
    %v1688 = vtanh.pop %v1686
    %v1689 = vtanh.pop %v1687
    %v1690 = vadd.f32 %v1688, 1.0
    %v1691 = vadd.f32 %v1689, 1.0
    %v1692 = vmul.f32 %v1690, 0.5
    %v1693 = vmul.f32 %v1691, 0.5
    %1694 = vrot.lane.b32.xlu0 %v1680, 40
    %v1695 = vpop.permute.xlu0 %1694
    %v1697 = vmul.f32 %v1692, %v1695
    %v1698 = vmul.f32 %v1693, %v1695
    %1701 = vrot.lane.b32.xlu0 %v1697, 8
    %v1702 = vpop.permute.xlu0 %1701
    %1703 = vrot.lane.b32.xlu0 %v1698, 8
    %v1704 = vpop.permute.xlu0 %1703
    %v1707 = vadd.f32 %v243, %v1702
    %v1708 = vadd.f32 %v248, %v1704
    %v1709 = vtanh.pop %v1707
    %v1710 = vtanh.pop %v1708
    %v1711 = vsub.f32 1.0, %v1692
    %v1712 = vsub.f32 1.0, %v1693
    %1715 = vrot.lane.b32.xlu0 %v1709, 124
    %v1716 = vpop.permute.xlu0 %1715
    %1717 = vrot.lane.b32.xlu0 %v1710, 124
    %v1718 = vpop.permute.xlu0 %1717
    %v1721 = vmul.f32 %v1711, %v1716
    %v1722 = vmul.f32 %v1712, %v1718
    %v1723 = vmul.f32 %v1692, 0.0
    %v1724 = vmul.f32 %v1693, 0.0
    %v1725 = vadd.f32 %v1721, %v1723
    %v1726 = vadd.f32 %v1722, %v1724
    %vm1729 = vcmask 1045504
    %v1730 = vrot.slane %v1725, 2
    %v1731 = vrot.slane %v1726, 2
    %v1732 = vsel %vm1729, %v1730, %v1731
    %1733 = vrot.lane.b32.xlu0 %v1732, 76
    %v1734 = vpop.permute.xlu0 %1733
    %v1735 = vsel %vm1602, %v1734, 0
    %1737 = vmatprep.subr.mxu0 0.0
    %1738 = vmatpush1.msra.mxu0 0.0
    %1739 = vmatprep.subr.mxu0 0.0
    %1740 = vmatpush1.msra.mxu0 0.0
    %1741 = vmatprep.subr.mxu0 0.0
    %1742 = vmatpush1.msra.mxu0 0.0
    %1743 = vmatprep.subr.mxu0 0.0
    %1744 = vmatpush1.msra.mxu0 0.0
    %1745 = vmatprep.subr.mxu0 0.0
    %1746 = vmatpush1.msra.mxu0 0.0
    %1747 = vmatprep.subr.mxu0 0.0
    %1748 = vmatpush1.msra.mxu0 0.0
    %1749 = vmatprep.subr.mxu0 0.0
    %1750 = vmatpush1.msra.mxu0 0.0
    %1751 = vmatprep.subr.mxu0 0.0
    %1752 = vmatpush1.msra.mxu0 0.0
    %1753 = vmatprep.subr.mxu0 0.0
    %1754 = vmatpush1.msra.mxu0 0.0
    %1755 = vmatprep.subr.mxu0 0.0
    %1756 = vmatpush1.msra.mxu0 0.0
    %1757 = vmatprep.subr.mxu0 0.0
    %1758 = vmatpush1.msra.mxu0 0.0
    %1759 = vmatprep.subr.mxu0 0.0
    %1760 = vmatpush1.msra.mxu0 0.0
    %1761 = vmatprep.subr.mxu0 0.0
    %1762 = vmatpush1.msra.mxu0 0.0
    %1763 = vmatprep.subr.mxu0 0.0
    %1764 = vmatpush1.msra.mxu0 0.0
    %1765 = vmatprep.subr.mxu0 0.0
    %1766 = vmatpush1.msra.mxu0 0.0
    %1767 = vmatprep.subr.mxu0 0.0
    %1768 = vmatpush1.msra.mxu0 %v1607
    %1769 = vmatprep.subr.mxu0 0.0
    %1770 = vmatpush2.msra.mxu0 0.0
    %1771 = vmatprep.subr.mxu0 0.0
    %1772 = vmatpush2.msra.mxu0 0.0
    %1773 = vmatprep.subr.mxu0 0.0
    %1774 = vmatpush2.msra.mxu0 0.0
    %1775 = vmatprep.subr.mxu0 0.0
    %1776 = vmatpush2.msra.mxu0 0.0
    %1777 = vmatprep.subr.mxu0 0.0
    %1778 = vmatpush2.msra.mxu0 0.0
    %1779 = vmatprep.subr.mxu0 0.0
    %1780 = vmatpush2.msra.mxu0 0.0
    %1781 = vmatprep.subr.mxu0 0.0
    %1782 = vmatpush2.msra.mxu0 0.0
    %1783 = vmatprep.subr.mxu0 0.0
    %1784 = vmatpush2.msra.mxu0 0.0
    %1785 = vmatprep.subr.mxu0 0.0
    %1786 = vmatpush2.msra.mxu0 0.0
    %1787 = vmatprep.subr.mxu0 0.0
    %1788 = vmatpush2.msra.mxu0 0.0
    %1789 = vmatprep.subr.mxu0 0.0
    %1790 = vmatpush2.msra.mxu0 0.0
    %1791 = vmatprep.subr.mxu0 0.0
    %1792 = vmatpush2.msra.mxu0 0.0
    %1793 = vmatprep.subr.mxu0 0.0
    %1794 = vmatpush2.msra.mxu0 0.0
    %1795 = vmatprep.subr.mxu0 0.0
    %1796 = vmatpush2.msra.mxu0 0.0
    %1797 = vmatprep.subr.mxu0 0.0
    %1798 = vmatpush2.msra.mxu0 0.0
    %1799 = vmatprep.subr.mxu0 0.0
    %1800 = vmatpush2.msra.mxu0 0.0
    %1801 = vmatprep.mubr.f32.mxu0 0.0
    %1802 = vmatmul.mubr.f32.gmra.mxu0 %v1735
    %v1803 = vpop.f32.mrf.mxu0
    %v1804 = vadd.f32 %v1601, %v1803
    %v1805 = vpop.f32.mrf.mxu0
    %1806 = vdwg.mxu0
    %v1808 = vrot.slane %v1804, 6
    %1809 = vrot.lane.b32.xlu0 %v1808, 48
    %v1810 = vpop.permute.xlu0 %1809
    %v1812 = vadd.f32 %v248, %v1810
    %v1813 = vadd.f32 %v253, %v1810
    %v1814 = vmul.f32 %v1812, 0.5
    %v1815 = vmul.f32 %v1813, 0.5
    %v1816 = vtanh.pop %v1814
    %v1817 = vtanh.pop %v1815
    %v1818 = vadd.f32 %v1816, 1.0
    %v1819 = vadd.f32 %v1817, 1.0
    %v1820 = vmul.f32 %v1818, 0.5
    %v1821 = vmul.f32 %v1819, 0.5
    %1822 = vrot.lane.b32.xlu0 %v1808, 40
    %v1823 = vpop.permute.xlu0 %1822
    %v1825 = vmul.f32 %v1820, %v1823
    %v1826 = vmul.f32 %v1821, %v1823
    %1829 = vrot.lane.b32.xlu0 %v1825, 8
    %v1830 = vpop.permute.xlu0 %1829
    %1831 = vrot.lane.b32.xlu0 %v1826, 8
    %v1832 = vpop.permute.xlu0 %1831
    %v1835 = vadd.f32 %v248, %v1830
    %v1836 = vadd.f32 %v253, %v1832
    %v1837 = vtanh.pop %v1835
    %v1838 = vtanh.pop %v1836
    %v1839 = vsub.f32 1.0, %v1820
    %v1840 = vsub.f32 1.0, %v1821
    %1843 = vrot.lane.b32.xlu0 %v1837, 124
    %v1844 = vpop.permute.xlu0 %1843
    %1845 = vrot.lane.b32.xlu0 %v1838, 124
    %v1846 = vpop.permute.xlu0 %1845
    %v1849 = vmul.f32 %v1839, %v1844
    %v1850 = vmul.f32 %v1840, %v1846
    %v1851 = vmul.f32 %v1820, %v1725
    %v1852 = vmul.f32 %v1821, %v1726
    %v1853 = vadd.f32 %v1849, %v1851
    %v1854 = vadd.f32 %v1850, %v1852
    %v1857 = vrot.slane %v1853, 2
    %v1858 = vrot.slane %v1854, 2
    %v1859 = vsel %vm1729, %v1857, %v1858
    %1860 = vrot.lane.b32.xlu0 %v1859, 76
    %v1861 = vpop.permute.xlu0 %1860
    %v1862 = vsel %vm1602, %v1861, 0
    %1864 = vmatprep.subr.mxu0 0.0
    %1865 = vmatpush1.msra.mxu0 0.0
    %1866 = vmatprep.subr.mxu0 0.0
    %1867 = vmatpush1.msra.mxu0 0.0
    %1868 = vmatprep.subr.mxu0 0.0
    %1869 = vmatpush1.msra.mxu0 0.0
    %1870 = vmatprep.subr.mxu0 0.0
    %1871 = vmatpush1.msra.mxu0 0.0
    %1872 = vmatprep.subr.mxu0 0.0
    %1873 = vmatpush1.msra.mxu0 0.0
    %1874 = vmatprep.subr.mxu0 0.0
    %1875 = vmatpush1.msra.mxu0 0.0
    %1876 = vmatprep.subr.mxu0 0.0
    %1877 = vmatpush1.msra.mxu0 0.0
    %1878 = vmatprep.subr.mxu0 0.0
    %1879 = vmatpush1.msra.mxu0 0.0
    %1880 = vmatprep.subr.mxu0 0.0
    %1881 = vmatpush1.msra.mxu0 0.0
    %1882 = vmatprep.subr.mxu0 0.0
    %1883 = vmatpush1.msra.mxu0 0.0
    %1884 = vmatprep.subr.mxu0 0.0
    %1885 = vmatpush1.msra.mxu0 0.0
    %1886 = vmatprep.subr.mxu0 0.0
    %1887 = vmatpush1.msra.mxu0 0.0
    %1888 = vmatprep.subr.mxu0 0.0
    %1889 = vmatpush1.msra.mxu0 0.0
    %1890 = vmatprep.subr.mxu0 0.0
    %1891 = vmatpush1.msra.mxu0 0.0
    %1892 = vmatprep.subr.mxu0 0.0
    %1893 = vmatpush1.msra.mxu0 0.0
    %1894 = vmatprep.subr.mxu0 0.0
    %1895 = vmatpush1.msra.mxu0 %v1607
    %1896 = vmatprep.subr.mxu0 0.0
    %1897 = vmatpush2.msra.mxu0 0.0
    %1898 = vmatprep.subr.mxu0 0.0
    %1899 = vmatpush2.msra.mxu0 0.0
    %1900 = vmatprep.subr.mxu0 0.0
    %1901 = vmatpush2.msra.mxu0 0.0
    %1902 = vmatprep.subr.mxu0 0.0
    %1903 = vmatpush2.msra.mxu0 0.0
    %1904 = vmatprep.subr.mxu0 0.0
    %1905 = vmatpush2.msra.mxu0 0.0
    %1906 = vmatprep.subr.mxu0 0.0
    %1907 = vmatpush2.msra.mxu0 0.0
    %1908 = vmatprep.subr.mxu0 0.0
    %1909 = vmatpush2.msra.mxu0 0.0
    %1910 = vmatprep.subr.mxu0 0.0
    %1911 = vmatpush2.msra.mxu0 0.0
    %1912 = vmatprep.subr.mxu0 0.0
    %1913 = vmatpush2.msra.mxu0 0.0
    %1914 = vmatprep.subr.mxu0 0.0
    %1915 = vmatpush2.msra.mxu0 0.0
    %1916 = vmatprep.subr.mxu0 0.0
    %1917 = vmatpush2.msra.mxu0 0.0
    %1918 = vmatprep.subr.mxu0 0.0
    %1919 = vmatpush2.msra.mxu0 0.0
    %1920 = vmatprep.subr.mxu0 0.0
    %1921 = vmatpush2.msra.mxu0 0.0
    %1922 = vmatprep.subr.mxu0 0.0
    %1923 = vmatpush2.msra.mxu0 0.0
    %1924 = vmatprep.subr.mxu0 0.0
    %1925 = vmatpush2.msra.mxu0 0.0
    %1926 = vmatprep.subr.mxu0 0.0
    %1927 = vmatpush2.msra.mxu0 0.0
    %1928 = vmatprep.mubr.f32.mxu0 0.0
    %1929 = vmatmul.mubr.f32.gmra.mxu0 %v1862
    %v1930 = vpop.f32.mrf.mxu0
    %v1931 = vadd.f32 %v1601, %v1930
    %v1932 = vpop.f32.mrf.mxu0
    %1933 = vdwg.mxu0
    %v1935 = vrot.slane %v1931, 6
    %1936 = vrot.lane.b32.xlu0 %v1935, 48
    %v1937 = vpop.permute.xlu0 %1936
    %v1939 = vadd.f32 %v253, %v1937
    %v1940 = vadd.f32 %v258, %v1937
    %v1941 = vmul.f32 %v1939, 0.5
    %v1942 = vmul.f32 %v1940, 0.5
    %v1943 = vtanh.pop %v1941
    %v1944 = vtanh.pop %v1942
    %v1945 = vadd.f32 %v1943, 1.0
    %v1946 = vadd.f32 %v1944, 1.0
    %v1947 = vmul.f32 %v1945, 0.5
    %v1948 = vmul.f32 %v1946, 0.5
    %1949 = vrot.lane.b32.xlu0 %v1935, 40
    %v1950 = vpop.permute.xlu0 %1949
    %v1952 = vmul.f32 %v1947, %v1950
    %v1953 = vmul.f32 %v1948, %v1950
    %1956 = vrot.lane.b32.xlu0 %v1952, 8
    %v1957 = vpop.permute.xlu0 %1956
    %1958 = vrot.lane.b32.xlu0 %v1953, 8
    %v1959 = vpop.permute.xlu0 %1958
    %v1962 = vadd.f32 %v253, %v1957
    %v1963 = vadd.f32 %v258, %v1959
    %v1964 = vtanh.pop %v1962
    %v1965 = vtanh.pop %v1963
    %v1966 = vsub.f32 1.0, %v1947
    %v1967 = vsub.f32 1.0, %v1948
    %1970 = vrot.lane.b32.xlu0 %v1964, 124
    %v1971 = vpop.permute.xlu0 %1970
    %1972 = vrot.lane.b32.xlu0 %v1965, 124
    %v1973 = vpop.permute.xlu0 %1972
    %v1976 = vmul.f32 %v1966, %v1971
    %v1977 = vmul.f32 %v1967, %v1973
    %v1978 = vmul.f32 %v1947, %v1853
    %v1979 = vmul.f32 %v1948, %v1854
    %v1980 = vadd.f32 %v1976, %v1978
    %v1981 = vadd.f32 %v1977, %v1979
    %v1982 = vlaneseq
    %v1983 = vshrl.u32 %v1982, 7
    %v1984 = vsub.s32 0, %v1983
    %v1985 = vrot.slane %v48, %v1984
    %1987 = vrot.lane.b32.xlu0 %v1597, 112
    %v1988 = vpop.permute.xlu0 %1987
    %v1989 = vsel %vm163, %v1988, 0
    %1991 = vmatprep.subr.mxu0 0.0
    %1992 = vmatpush1.msra.mxu0 0.0
    %1993 = vmatprep.subr.mxu0 0.0
    %1994 = vmatpush1.msra.mxu0 0.0
    %1995 = vmatprep.subr.mxu0 0.0
    %1996 = vmatpush1.msra.mxu0 0.0
    %1997 = vmatprep.subr.mxu0 0.0
    %1998 = vmatpush1.msra.mxu0 0.0
    %1999 = vmatprep.subr.mxu0 0.0
    %2000 = vmatpush1.msra.mxu0 0.0
    %2001 = vmatprep.subr.mxu0 0.0
    %2002 = vmatpush1.msra.mxu0 0.0
    %2003 = vmatprep.subr.mxu0 0.0
    %2004 = vmatpush1.msra.mxu0 0.0
    %2005 = vmatprep.subr.mxu0 0.0
    %2006 = vmatpush1.msra.mxu0 0.0
    %2007 = vmatprep.subr.mxu0 0.0
    %2008 = vmatpush1.msra.mxu0 0.0
    %2009 = vmatprep.subr.mxu0 0.0
    %2010 = vmatpush1.msra.mxu0 0.0
    %2011 = vmatprep.subr.mxu0 0.0
    %2012 = vmatpush1.msra.mxu0 0.0
    %2013 = vmatprep.subr.mxu0 0.0
    %2014 = vmatpush1.msra.mxu0 0.0
    %2015 = vmatprep.subr.mxu0 0.0
    %2016 = vmatpush1.msra.mxu0 0.0
    %2017 = vmatprep.subr.mxu0 0.0
    %2018 = vmatpush1.msra.mxu0 0.0
    %2019 = vmatprep.subr.mxu0 0.0
    %2020 = vmatpush1.msra.mxu0 %v41
    %2021 = vmatprep.subr.mxu0 0.0
    %2022 = vmatpush1.msra.mxu0 %v40
    %2023 = vmatprep.subr.mxu0 0.0
    %2024 = vmatpush2.msra.mxu0 0.0
    %2025 = vmatprep.subr.mxu0 0.0
    %2026 = vmatpush2.msra.mxu0 0.0
    %2027 = vmatprep.subr.mxu0 0.0
    %2028 = vmatpush2.msra.mxu0 0.0
    %2029 = vmatprep.subr.mxu0 0.0
    %2030 = vmatpush2.msra.mxu0 0.0
    %2031 = vmatprep.subr.mxu0 0.0
    %2032 = vmatpush2.msra.mxu0 0.0
    %2033 = vmatprep.subr.mxu0 0.0
    %2034 = vmatpush2.msra.mxu0 0.0
    %2035 = vmatprep.subr.mxu0 0.0
    %2036 = vmatpush2.msra.mxu0 0.0
    %2037 = vmatprep.subr.mxu0 0.0
    %2038 = vmatpush2.msra.mxu0 0.0
    %2039 = vmatprep.subr.mxu0 0.0
    %2040 = vmatpush2.msra.mxu0 0.0
    %2041 = vmatprep.subr.mxu0 0.0
    %2042 = vmatpush2.msra.mxu0 0.0
    %2043 = vmatprep.subr.mxu0 0.0
    %2044 = vmatpush2.msra.mxu0 0.0
    %2045 = vmatprep.subr.mxu0 0.0
    %2046 = vmatpush2.msra.mxu0 0.0
    %2047 = vmatprep.subr.mxu0 0.0
    %2048 = vmatpush2.msra.mxu0 0.0
    %2049 = vmatprep.subr.mxu0 0.0
    %2050 = vmatpush2.msra.mxu0 0.0
    %2051 = vmatprep.subr.mxu0 0.0
    %2052 = vmatpush2.msra.mxu0 0.0
    %2053 = vmatprep.subr.mxu0 0.0
    %2054 = vmatpush2.msra.mxu0 0.0
    %2055 = vmatprep.mubr.f32.mxu0 0.0
    %2056 = vmatmul.mubr.f32.gmra.mxu0 %v1989
    %v2057 = vpop.f32.mrf.mxu0
    %v2058 = vadd.f32 %v1985, %v2057
    %v2059 = vpop.f32.mrf.mxu0
    %2060 = vdwg.mxu0
    %v2062 = vrot.slane %v1980, 2
    %2063 = vrot.lane.b32.xlu0 %v2062, 76
    %v2064 = vpop.permute.xlu0 %2063
    %v2065 = vsel %vm1602, %v2064, 0
    %v2068 = vsel %vm1605, %v42, 0
    %2070 = vmatprep.subr.mxu0 0.0
    %2071 = vmatpush1.msra.mxu0 0.0
    %2072 = vmatprep.subr.mxu0 0.0
    %2073 = vmatpush1.msra.mxu0 0.0
    %2074 = vmatprep.subr.mxu0 0.0
    %2075 = vmatpush1.msra.mxu0 0.0
    %2076 = vmatprep.subr.mxu0 0.0
    %2077 = vmatpush1.msra.mxu0 0.0
    %2078 = vmatprep.subr.mxu0 0.0
    %2079 = vmatpush1.msra.mxu0 0.0
    %2080 = vmatprep.subr.mxu0 0.0
    %2081 = vmatpush1.msra.mxu0 0.0
    %2082 = vmatprep.subr.mxu0 0.0
    %2083 = vmatpush1.msra.mxu0 0.0
    %2084 = vmatprep.subr.mxu0 0.0
    %2085 = vmatpush1.msra.mxu0 0.0
    %2086 = vmatprep.subr.mxu0 0.0
    %2087 = vmatpush1.msra.mxu0 0.0
    %2088 = vmatprep.subr.mxu0 0.0
    %2089 = vmatpush1.msra.mxu0 0.0
    %2090 = vmatprep.subr.mxu0 0.0
    %2091 = vmatpush1.msra.mxu0 0.0
    %2092 = vmatprep.subr.mxu0 0.0
    %2093 = vmatpush1.msra.mxu0 0.0
    %2094 = vmatprep.subr.mxu0 0.0
    %2095 = vmatpush1.msra.mxu0 0.0
    %2096 = vmatprep.subr.mxu0 0.0
    %2097 = vmatpush1.msra.mxu0 0.0
    %2098 = vmatprep.subr.mxu0 0.0
    %2099 = vmatpush1.msra.mxu0 0.0
    %2100 = vmatprep.subr.mxu0 0.0
    %2101 = vmatpush1.msra.mxu0 %v2068
    %2102 = vmatprep.subr.mxu0 0.0
    %2103 = vmatpush2.msra.mxu0 0.0
    %2104 = vmatprep.subr.mxu0 0.0
    %2105 = vmatpush2.msra.mxu0 0.0
    %2106 = vmatprep.subr.mxu0 0.0
    %2107 = vmatpush2.msra.mxu0 0.0
    %2108 = vmatprep.subr.mxu0 0.0
    %2109 = vmatpush2.msra.mxu0 0.0
    %2110 = vmatprep.subr.mxu0 0.0
    %2111 = vmatpush2.msra.mxu0 0.0
    %2112 = vmatprep.subr.mxu0 0.0
    %2113 = vmatpush2.msra.mxu0 0.0
    %2114 = vmatprep.subr.mxu0 0.0
    %2115 = vmatpush2.msra.mxu0 0.0
    %2116 = vmatprep.subr.mxu0 0.0
    %2117 = vmatpush2.msra.mxu0 0.0
    %2118 = vmatprep.subr.mxu0 0.0
    %2119 = vmatpush2.msra.mxu0 0.0
    %2120 = vmatprep.subr.mxu0 0.0
    %2121 = vmatpush2.msra.mxu0 0.0
    %2122 = vmatprep.subr.mxu0 0.0
    %2123 = vmatpush2.msra.mxu0 0.0
    %2124 = vmatprep.subr.mxu0 0.0
    %2125 = vmatpush2.msra.mxu0 0.0
    %2126 = vmatprep.subr.mxu0 0.0
    %2127 = vmatpush2.msra.mxu0 0.0
    %2128 = vmatprep.subr.mxu0 0.0
    %2129 = vmatpush2.msra.mxu0 0.0
    %2130 = vmatprep.subr.mxu0 0.0
    %2131 = vmatpush2.msra.mxu0 0.0
    %2132 = vmatprep.subr.mxu0 0.0
    %2133 = vmatpush2.msra.mxu0 0.0
    %2134 = vmatprep.mubr.f32.mxu0 0.0
    %2135 = vmatmul.mubr.f32.gmra.mxu0 %v2065
    %v2136 = vpop.f32.mrf.mxu0
    %v2137 = vadd.f32 0.0, %v2136
    %v2138 = vpop.f32.mrf.mxu0
    %2139 = vdwg.mxu0
    %v2140 = vadd.f32 %v2058, %v2137
    %v2141 = vrot.slane %v1980, 4
    %2142 = vrot.lane.b32.xlu0 %v2141, 76
    %v2143 = vpop.permute.xlu0 %2142
    %v2144 = vrot.slane %v42, 4
    %v2145 = vsel %vm1602, %v2143, 0
    %v2147 = vsel %vm1605, %v2144, 0
    %2149 = vmatprep.subr.mxu0 0.0
    %2150 = vmatpush1.msra.mxu0 0.0
    %2151 = vmatprep.subr.mxu0 0.0
    %2152 = vmatpush1.msra.mxu0 0.0
    %2153 = vmatprep.subr.mxu0 0.0
    %2154 = vmatpush1.msra.mxu0 0.0
    %2155 = vmatprep.subr.mxu0 0.0
    %2156 = vmatpush1.msra.mxu0 0.0
    %2157 = vmatprep.subr.mxu0 0.0
    %2158 = vmatpush1.msra.mxu0 0.0
    %2159 = vmatprep.subr.mxu0 0.0
    %2160 = vmatpush1.msra.mxu0 0.0
    %2161 = vmatprep.subr.mxu0 0.0
    %2162 = vmatpush1.msra.mxu0 0.0
    %2163 = vmatprep.subr.mxu0 0.0
    %2164 = vmatpush1.msra.mxu0 0.0
    %2165 = vmatprep.subr.mxu0 0.0
    %2166 = vmatpush1.msra.mxu0 0.0
    %2167 = vmatprep.subr.mxu0 0.0
    %2168 = vmatpush1.msra.mxu0 0.0
    %2169 = vmatprep.subr.mxu0 0.0
    %2170 = vmatpush1.msra.mxu0 0.0
    %2171 = vmatprep.subr.mxu0 0.0
    %2172 = vmatpush1.msra.mxu0 0.0
    %2173 = vmatprep.subr.mxu0 0.0
    %2174 = vmatpush1.msra.mxu0 0.0
    %2175 = vmatprep.subr.mxu0 0.0
    %2176 = vmatpush1.msra.mxu0 0.0
    %2177 = vmatprep.subr.mxu0 0.0
    %2178 = vmatpush1.msra.mxu0 0.0
    %2179 = vmatprep.subr.mxu0 0.0
    %2180 = vmatpush1.msra.mxu0 %v2147
    %2181 = vmatprep.subr.mxu0 0.0
    %2182 = vmatpush2.msra.mxu0 0.0
    %2183 = vmatprep.subr.mxu0 0.0
    %2184 = vmatpush2.msra.mxu0 0.0
    %2185 = vmatprep.subr.mxu0 0.0
    %2186 = vmatpush2.msra.mxu0 0.0
    %2187 = vmatprep.subr.mxu0 0.0
    %2188 = vmatpush2.msra.mxu0 0.0
    %2189 = vmatprep.subr.mxu0 0.0
    %2190 = vmatpush2.msra.mxu0 0.0
    %2191 = vmatprep.subr.mxu0 0.0
    %2192 = vmatpush2.msra.mxu0 0.0
    %2193 = vmatprep.subr.mxu0 0.0
    %2194 = vmatpush2.msra.mxu0 0.0
    %2195 = vmatprep.subr.mxu0 0.0
    %2196 = vmatpush2.msra.mxu0 0.0
    %2197 = vmatprep.subr.mxu0 0.0
    %2198 = vmatpush2.msra.mxu0 0.0
    %2199 = vmatprep.subr.mxu0 0.0
    %2200 = vmatpush2.msra.mxu0 0.0
    %2201 = vmatprep.subr.mxu0 0.0
    %2202 = vmatpush2.msra.mxu0 0.0
    %2203 = vmatprep.subr.mxu0 0.0
    %2204 = vmatpush2.msra.mxu0 0.0
    %2205 = vmatprep.subr.mxu0 0.0
    %2206 = vmatpush2.msra.mxu0 0.0
    %2207 = vmatprep.subr.mxu0 0.0
    %2208 = vmatpush2.msra.mxu0 0.0
    %2209 = vmatprep.subr.mxu0 0.0
    %2210 = vmatpush2.msra.mxu0 0.0
    %2211 = vmatprep.subr.mxu0 0.0
    %2212 = vmatpush2.msra.mxu0 0.0
    %2213 = vmatprep.mubr.f32.mxu0 0.0
    %2214 = vmatmul.mubr.f32.gmra.mxu0 %v2145
    %v2215 = vpop.f32.mrf.mxu0
    %v2216 = vadd.f32 0.0, %v2215
    %v2217 = vpop.f32.mrf.mxu0
    %2218 = vdwg.mxu0
    %v2219 = vadd.f32 %v2140, %v2216
    %v2220 = vrot.slane %v1980, 6
    %2221 = vrot.lane.b32.xlu0 %v2220, 76
    %v2222 = vpop.permute.xlu0 %2221
    %v2223 = vsel %vm1602, %v2222, 0
    %v2226 = vsel %vm1605, %v43, 0
    %2228 = vmatprep.subr.mxu0 0.0
    %2229 = vmatpush1.msra.mxu0 0.0
    %2230 = vmatprep.subr.mxu0 0.0
    %2231 = vmatpush1.msra.mxu0 0.0
    %2232 = vmatprep.subr.mxu0 0.0
    %2233 = vmatpush1.msra.mxu0 0.0
    %2234 = vmatprep.subr.mxu0 0.0
    %2235 = vmatpush1.msra.mxu0 0.0
    %2236 = vmatprep.subr.mxu0 0.0
    %2237 = vmatpush1.msra.mxu0 0.0
    %2238 = vmatprep.subr.mxu0 0.0
    %2239 = vmatpush1.msra.mxu0 0.0
    %2240 = vmatprep.subr.mxu0 0.0
    %2241 = vmatpush1.msra.mxu0 0.0
    %2242 = vmatprep.subr.mxu0 0.0
    %2243 = vmatpush1.msra.mxu0 0.0
    %2244 = vmatprep.subr.mxu0 0.0
    %2245 = vmatpush1.msra.mxu0 0.0
    %2246 = vmatprep.subr.mxu0 0.0
    %2247 = vmatpush1.msra.mxu0 0.0
    %2248 = vmatprep.subr.mxu0 0.0
    %2249 = vmatpush1.msra.mxu0 0.0
    %2250 = vmatprep.subr.mxu0 0.0
    %2251 = vmatpush1.msra.mxu0 0.0
    %2252 = vmatprep.subr.mxu0 0.0
    %2253 = vmatpush1.msra.mxu0 0.0
    %2254 = vmatprep.subr.mxu0 0.0
    %2255 = vmatpush1.msra.mxu0 0.0
    %2256 = vmatprep.subr.mxu0 0.0
    %2257 = vmatpush1.msra.mxu0 0.0
    %2258 = vmatprep.subr.mxu0 0.0
    %2259 = vmatpush1.msra.mxu0 %v2226
    %2260 = vmatprep.subr.mxu0 0.0
    %2261 = vmatpush2.msra.mxu0 0.0
    %2262 = vmatprep.subr.mxu0 0.0
    %2263 = vmatpush2.msra.mxu0 0.0
    %2264 = vmatprep.subr.mxu0 0.0
    %2265 = vmatpush2.msra.mxu0 0.0
    %2266 = vmatprep.subr.mxu0 0.0
    %2267 = vmatpush2.msra.mxu0 0.0
    %2268 = vmatprep.subr.mxu0 0.0
    %2269 = vmatpush2.msra.mxu0 0.0
    %2270 = vmatprep.subr.mxu0 0.0
    %2271 = vmatpush2.msra.mxu0 0.0
    %2272 = vmatprep.subr.mxu0 0.0
    %2273 = vmatpush2.msra.mxu0 0.0
    %2274 = vmatprep.subr.mxu0 0.0
    %2275 = vmatpush2.msra.mxu0 0.0
    %2276 = vmatprep.subr.mxu0 0.0
    %2277 = vmatpush2.msra.mxu0 0.0
    %2278 = vmatprep.subr.mxu0 0.0
    %2279 = vmatpush2.msra.mxu0 0.0
    %2280 = vmatprep.subr.mxu0 0.0
    %2281 = vmatpush2.msra.mxu0 0.0
    %2282 = vmatprep.subr.mxu0 0.0
    %2283 = vmatpush2.msra.mxu0 0.0
    %2284 = vmatprep.subr.mxu0 0.0
    %2285 = vmatpush2.msra.mxu0 0.0
    %2286 = vmatprep.subr.mxu0 0.0
    %2287 = vmatpush2.msra.mxu0 0.0
    %2288 = vmatprep.subr.mxu0 0.0
    %2289 = vmatpush2.msra.mxu0 0.0
    %2290 = vmatprep.subr.mxu0 0.0
    %2291 = vmatpush2.msra.mxu0 0.0
    %2292 = vmatprep.mubr.f32.mxu0 0.0
    %2293 = vmatmul.mubr.f32.gmra.mxu0 %v2223
    %v2294 = vpop.f32.mrf.mxu0
    %v2295 = vadd.f32 0.0, %v2294
    %v2296 = vpop.f32.mrf.mxu0
    %2297 = vdwg.mxu0
    %v2298 = vadd.f32 %v2219, %v2295
    %2300 = vrot.lane.b32.xlu0 %v1981, 76
    %v2301 = vpop.permute.xlu0 %2300
    %v2302 = vrot.slane %v43, 4
    %v2303 = vsel %vm1602, %v2301, 0
    %v2305 = vsel %vm1605, %v2302, 0
    %2307 = vmatprep.subr.mxu0 0.0
    %2308 = vmatpush1.msra.mxu0 0.0
    %2309 = vmatprep.subr.mxu0 0.0
    %2310 = vmatpush1.msra.mxu0 0.0
    %2311 = vmatprep.subr.mxu0 0.0
    %2312 = vmatpush1.msra.mxu0 0.0
    %2313 = vmatprep.subr.mxu0 0.0
    %2314 = vmatpush1.msra.mxu0 0.0
    %2315 = vmatprep.subr.mxu0 0.0
    %2316 = vmatpush1.msra.mxu0 0.0
    %2317 = vmatprep.subr.mxu0 0.0
    %2318 = vmatpush1.msra.mxu0 0.0
    %2319 = vmatprep.subr.mxu0 0.0
    %2320 = vmatpush1.msra.mxu0 0.0
    %2321 = vmatprep.subr.mxu0 0.0
    %2322 = vmatpush1.msra.mxu0 0.0
    %2323 = vmatprep.subr.mxu0 0.0
    %2324 = vmatpush1.msra.mxu0 0.0
    %2325 = vmatprep.subr.mxu0 0.0
    %2326 = vmatpush1.msra.mxu0 0.0
    %2327 = vmatprep.subr.mxu0 0.0
    %2328 = vmatpush1.msra.mxu0 0.0
    %2329 = vmatprep.subr.mxu0 0.0
    %2330 = vmatpush1.msra.mxu0 0.0
    %2331 = vmatprep.subr.mxu0 0.0
    %2332 = vmatpush1.msra.mxu0 0.0
    %2333 = vmatprep.subr.mxu0 0.0
    %2334 = vmatpush1.msra.mxu0 0.0
    %2335 = vmatprep.subr.mxu0 0.0
    %2336 = vmatpush1.msra.mxu0 0.0
    %2337 = vmatprep.subr.mxu0 0.0
    %2338 = vmatpush1.msra.mxu0 %v2305
    %2339 = vmatprep.subr.mxu0 0.0
    %2340 = vmatpush2.msra.mxu0 0.0
    %2341 = vmatprep.subr.mxu0 0.0
    %2342 = vmatpush2.msra.mxu0 0.0
    %2343 = vmatprep.subr.mxu0 0.0
    %2344 = vmatpush2.msra.mxu0 0.0
    %2345 = vmatprep.subr.mxu0 0.0
    %2346 = vmatpush2.msra.mxu0 0.0
    %2347 = vmatprep.subr.mxu0 0.0
    %2348 = vmatpush2.msra.mxu0 0.0
    %2349 = vmatprep.subr.mxu0 0.0
    %2350 = vmatpush2.msra.mxu0 0.0
    %2351 = vmatprep.subr.mxu0 0.0
    %2352 = vmatpush2.msra.mxu0 0.0
    %2353 = vmatprep.subr.mxu0 0.0
    %2354 = vmatpush2.msra.mxu0 0.0
    %2355 = vmatprep.subr.mxu0 0.0
    %2356 = vmatpush2.msra.mxu0 0.0
    %2357 = vmatprep.subr.mxu0 0.0
    %2358 = vmatpush2.msra.mxu0 0.0
    %2359 = vmatprep.subr.mxu0 0.0
    %2360 = vmatpush2.msra.mxu0 0.0
    %2361 = vmatprep.subr.mxu0 0.0
    %2362 = vmatpush2.msra.mxu0 0.0
    %2363 = vmatprep.subr.mxu0 0.0
    %2364 = vmatpush2.msra.mxu0 0.0
    %2365 = vmatprep.subr.mxu0 0.0
    %2366 = vmatpush2.msra.mxu0 0.0
    %2367 = vmatprep.subr.mxu0 0.0
    %2368 = vmatpush2.msra.mxu0 0.0
    %2369 = vmatprep.subr.mxu0 0.0
    %2370 = vmatpush2.msra.mxu0 0.0
    %2371 = vmatprep.mubr.f32.mxu0 0.0
    %2372 = vmatmul.mubr.f32.gmra.mxu0 %v2303
    %v2373 = vpop.f32.mrf.mxu0
    %v2374 = vadd.f32 0.0, %v2373
    %v2375 = vpop.f32.mrf.mxu0
    %2376 = vdwg.mxu0
    %v2377 = vadd.f32 %v2298, %v2374
    %v2378 = vld [vmem:[%s1] sm:$0x3]
    %s2379 = sld [smem:[#allocation2 + $0x4]]
    %v2380 = vstv %s2379
    %v2381 = vadd.f32 %v2377, %v2380
    %s2382 = sld [smem:[#allocation2]]
    %v2383 = vstv %s2382
    %v2384 = vmul.f32 %v2378, %v2383
    %v2385 = vadd.f32 %v2381, %v2384
    %s2386 = sld [smem:[#allocation2 + $0x1]]
    %v2387 = vstv %s2386
    %v2388 = vmul.f32 %v2378, %v2387
    %2390 = vrot.lane.b32.xlu0 %v2388, 120
    %v2391 = vpop.permute.xlu0 %2390
    %v2393 = vadd.f32 %v2385, %v2391
    %s2394 = sld [smem:[#allocation2 + $0x2]]
    %v2395 = vstv %s2394
    %v2396 = vmul.f32 %v2378, %v2395
    %2398 = vrot.lane.b32.xlu0 %v2396, 112
    %v2399 = vpop.permute.xlu0 %2398
    %v2401 = vadd.f32 %v2393, %v2399
    %s2402 = sld [smem:[#allocation2 + $0x3]]
    %v2403 = vstv %s2402
    %v2404 = vmul.f32 %v2378, %v2403
    %2406 = vrot.lane.b32.xlu0 %v2404, 104
    %v2407 = vpop.permute.xlu0 %2406
    %v2409 = vadd.f32 %v2401, %v2407
    %v2410 = vmul.f32 %v2409, 0.5
    %v2411 = vtanh.pop %v2410
    %v2412 = vadd.f32 %v2411, 1.0
    %v2413 = vmul.f32 %v2412, 0.5
    %vm2414 = vcmask 58368
    %2415 = vst.msk [vmem:[#allocation5] sm:$0x3] %vm2414, %v2413
    // Predicated region
    $region22: #{forward.1} parent=1 // pred_check
      _
    $region23: #{forward.1} parent=1 // pred_check_branch
      %2417 = sbr.rel (0) target = $region25
    $region24: #{forward.1} parent=1 // pred_region
      %s2419 = ssub.s32 32, 32
      %2420 = vsyncadd [#allocation3], %s2419
      %s2422 = sshll.u32 [#allocation5], 4
      %s2423 = int_to_ptr.vmem [resolvable:$true] %s2422
      %2425 = dma.vmem_to_hbm [thread:$0]  %s2423, 32, %s4, [#allocation3]
    $region25: #{forward.1} parent=1 // pred_fallthru
      _
    // Predicated region
    $region26: #{forward.1} parent=1 // pred_check
      _
    $region27: #{forward.1} parent=1 // pred_check_branch
      %2427 = sbr.rel (0) target = $region29
    $region28: #{forward.1} parent=1 // pred_region
      %2428 = dma.done [#allocation3], 32
    $region29: #{forward.1} parent=1 // pred_fallthru
      _
    %2429 = vsyncpa [#allocation3], 1
    %2430 = vsyncpa [#allocation4], 1

</llo_original>
